<compile_context>
chip_gen: v6e
topology: v6e:2x2x1
jax: 0.10.0
libtpu: 0.0.40
codegen_flags: <defaults>
</compile_context>

<pallas_src>
import math

import jax
import jax.numpy as jnp
from jax.experimental import pallas as pl
from jax.experimental.pallas import tpu as pltpu


def _pe_add_kernel(x_ref, pe_ref, o_ref):
    # x_ref: (TILE_S, B, D); pe_ref: (TILE_S, 1, D) -> broadcast add over batch (sublane bcast).
    o_ref[...] = x_ref[...] + pe_ref[...]


def make_positional_encoding_table(d_model, max_len=5000, dtype=jnp.float32):
    """Deterministic buffer, identical to the torch __init__ (shape (max_len, 1, d_model))."""
    # The torch module implicitly requires even d_model (odd d_model errors in torch too).
    assert d_model % 2 == 0, "PositionalEncoding requires an even d_model"
    position = jnp.arange(0, max_len, dtype=jnp.float32)[:, None]            # (max_len, 1)
    div_term = jnp.exp(
        jnp.arange(0, d_model, 2, dtype=jnp.float32) * (-math.log(10000.0) / d_model)
    )                                                                         # (d_model/2,)
    angles = position * div_term                                              # (max_len, d_model/2)
    pe = jnp.zeros((max_len, d_model), dtype=jnp.float32)
    pe = pe.at[:, 0::2].set(jnp.sin(angles))
    pe = pe.at[:, 1::2].set(jnp.cos(angles))
    return pe[:, None, :].astype(dtype)                                       # (max_len, 1, d_model)


def _choose_tile_s(S, B, D, itemsize, target_bytes=2 * 1024 * 1024):
    """Rows along S per block: ~2 MiB of x per block (Pallas double-buffers in + out,
    so live VMEM ~= 2*2*2 MiB + tiny pe slab, well under a 32 MiB budget on all gens)."""
    rows = max(1, target_bytes // max(1, B * D * itemsize))
    if rows >= S:
        return S
    return max(8, (rows // 8) * 8)  # keep the leading-dim DMA sublane-aligned


def positional_encoding_forward(x, pe_full, *, tile_s=None, donate_x=False):
    """x: (S, B, D); pe_full: (max_len, 1, D). Returns x + pe[:S] (eval-mode dropout = id)."""
    S, B, D = x.shape
    pe = pe_full[:S].astype(x.dtype)  # (S, 1, D) -- tiny glue slice in plain JAX

    ts = tile_s if tile_s is not None else _choose_tile_s(S, B, D, x.dtype.itemsize)
    ts = min(ts, S)
    grid = (pl.cdiv(S, ts),)

    return pl.pallas_call(
        _pe_add_kernel,
        out_shape=jax.ShapeDtypeStruct((S, B, D), x.dtype),
        grid_spec=pl.GridSpec(
            grid=grid,
            in_specs=[
                # Full (B, D) trailing dims per block => (8,128) rule always satisfied.
                pl.BlockSpec((ts, B, D), lambda i: (i, 0, 0)),
                pl.BlockSpec((ts, 1, D), lambda i: (i, 0, 0)),
            ],
            out_specs=pl.BlockSpec((ts, B, D), lambda i: (i, 0, 0)),
        ),
        compiler_params=pltpu.CompilerParams(
            dimension_semantics=("parallel",),       # no carried state -> megacore-shardable
            vmem_limit_bytes=32 * 1024 * 1024,       # explicit budget, safe on v5e/v6e/v7x
        ),
        input_output_aliases={0: 0} if donate_x else {},
    )(x, pe)


if __name__ == "__main__":
    key = jax.random.PRNGKey(0)
    k1, k2 = jax.random.split(key)

    # Lane-dense transformer-like shape (D % 128 == 0, B % 8 == 0) that exercises the
    # multi-tile pipelined path: tile_s = 512 -> grid = (2,).
    S, B, D = 1024, 8, 128
    x = jax.random.normal(k1, (S, B, D), dtype=jnp.float32)
    pe_full = make_positional_encoding_table(d_model=D, max_len=5000)
    out = jax.block_until_ready(positional_encoding_forward(x, pe_full))
    ref = x + pe_full[:S]
    assert out.shape == (S, B, D)
    assert jnp.allclose(out, ref, atol=1e-6), "mismatch vs reference (large shape)"

    # Small module-default-like shape (seq=8, batch=2, d_model=32) -- correctness fallback
    # (single full-array block; still valid because trailing block dims equal array dims).
    S2, B2, D2 = 8, 2, 32
    x2 = jax.random.normal(k2, (S2, B2, D2), dtype=jnp.float32)
    pe_full2 = make_positional_encoding_table(d_model=D2, max_len=5000)
    out2 = jax.block_until_ready(positional_encoding_forward(x2, pe_full2))
    ref2 = x2 + pe_full2[:S2]
    assert jnp.allclose(out2, ref2, atol=1e-6), "mismatch vs reference (small shape)"

    print("KERNEL_OK")
</pallas_src>

<mosaic_0001>
module attributes {stable_mosaic.version = 11 : i64} {
  func.func @_pe_add_kernel(%arg0: i32, %arg1: memref<512x8x128xf32, #tpu.memory_space<vmem>>, %arg2: memref<512x1x128xf32, #tpu.memory_space<vmem>>, %arg3: memref<512x8x128xf32, #tpu.memory_space<vmem>>) attributes {dimension_semantics = [#tpu.dimension_semantics<parallel>], iteration_bounds = array<i64: 2>, scalar_prefetch = 0 : i64, scratch_operands = 0 : i64, tpu.core_type = #tpu.core_type<tc>, window_params = [{transform_indices = @transform_0, window_bounds = array<i64: 512, 8, 128>}, {transform_indices = @transform_1, window_bounds = array<i64: 512, 1, 128>}, {transform_indices = @transform_2, window_bounds = array<i64: 512, 8, 128>}]} {
    %c0 = arith.constant 0 : index
    %c0_0 = arith.constant 0 : index
    %c0_1 = arith.constant 0 : index
    %0 = vector.load %arg1[%c0, %c0_0, %c0_1] : memref<512x8x128xf32, #tpu.memory_space<vmem>>, vector<512x8x128xf32>
    %c0_2 = arith.constant 0 : index
    %c0_3 = arith.constant 0 : index
    %c0_4 = arith.constant 0 : index
    %1 = vector.load %arg2[%c0_2, %c0_3, %c0_4] : memref<512x1x128xf32, #tpu.memory_space<vmem>>, vector<512x1x128xf32>
    %2 = vector.broadcast %1 : vector<512x1x128xf32> to vector<512x8x128xf32>
    %3 = arith.addf %0, %2 : vector<512x8x128xf32>
    %c0_5 = arith.constant 0 : index
    %c0_6 = arith.constant 0 : index
    %c0_7 = arith.constant 0 : index
    %4 = vector.load %arg3[%c0_5, %c0_6, %c0_7] : memref<512x8x128xf32, #tpu.memory_space<vmem>>, vector<512x8x128xf32>
    tpu.vector_store %arg3[%c0_5, %c0_6, %c0_7], %3 {strides = array<i32>} : memref<512x8x128xf32, #tpu.memory_space<vmem>>, vector<512x8x128xf32>,
    return
  }
  func.func @transform_0(%arg0: i32) -> (i32, i32, i32) {
    %c0_i32 = arith.constant 0 : i32
    %c0_i32_0 = arith.constant 0 : i32
    %c0_i32_1 = arith.constant 0 : i32
    return %arg0, %c0_i32, %c0_i32_0 : i32, i32, i32
  }
  func.func @transform_1(%arg0: i32) -> (i32, i32, i32) {
    %c0_i32 = arith.constant 0 : i32
    %c0_i32_0 = arith.constant 0 : i32
    %c0_i32_1 = arith.constant 0 : i32
    return %arg0, %c0_i32, %c0_i32_0 : i32, i32, i32
  }
  func.func @transform_2(%arg0: i32) -> (i32, i32, i32) {
    %c0_i32 = arith.constant 0 : i32
    %c0_i32_0 = arith.constant 0 : i32
    %c0_i32_1 = arith.constant 0 : i32
    return %arg0, %c0_i32, %c0_i32_0 : i32, i32, i32
  }
}

</mosaic_0001>

<llo_original>
// kernel: tpu_custom_call.1
$region0: #{tpu_custom_call.1}
  #allocation0 [shape = 'u32[]', space=smem, size = 0x4, offset = 0x4, fixed_abs, tag = 'smem constant byte address 0x4 - core index']
  #allocation1 [shape = 'u32[144,128]{1,0:T(1,128)}', space=vmem, size = 0x12000, scoped, tag = 'internal scratch']
  %s0 = inlined_call_operand.hbm [shape: f32[1024,8,128], index: 0, kind: input, shape index: {}]
  %s1 = inlined_call_operand.hbm [shape: f32[1024,1,128], index: 1, kind: input, shape index: {}]
  %s2 = inlined_call_operand.hbm [shape: f32[1024,8,128], index: 2, kind: output, shape index: {}]
  %s3 = sld [smem:[#allocation0]]
  $region49: #{tpu_custom_call.1} parent=0
    _
  %s5 = ssub.s32 1, %s3
  %s6 = scalar_select 0, %s5, %s3
  $region1: #{tpu_custom_call.1} parent=0
    #allocation2 [shape = 'u8[4194304]{0}', space=vmem, size = 0x400000, scoped, tag = 'input window, operand 0']
    #allocation3 [shape = 's32[2]{0}', space=sflag, size = 0x8, scoped, tag = 'scoped memory for tpu_custom_call.1']
    #allocation4 [shape = 's32[2]{0}', space=sflag, size = 0x8, scoped, tag = 'scoped memory for tpu_custom_call.1']
    #allocation5 [shape = 'u8[524288]{0}', space=vmem, size = 0x80000, scoped, tag = 'input window, operand 1']
    #allocation6 [shape = 's32[2]{0}', space=sflag, size = 0x8, scoped, tag = 'scoped memory for tpu_custom_call.1']
    #allocation7 [shape = 'u8[4194304]{0}', space=vmem, size = 0x400000, scoped, tag = 'output window, operand 0']
    %7 = vsyncpa [#allocation3], 0
    %s8 = scalar_lea.sflag [#allocation3], 1
    %9 = vsyncpa %s8, 0
    %10 = vsyncpa [#allocation6], 0
    %s11 = scalar_lea.sflag [#allocation6], 1
    %12 = vsyncpa %s11, 0
    %13 = vsyncpa [#allocation4], 0
    %s14 = scalar_lea.sflag [#allocation4], 1
    %15 = vsyncpa %s14, 0
    loop: start=0, step=1, limit=4
    $region2: #{tpu_custom_call.1} parent=1 // loop_pre_header
      _
    $region3: #{tpu_custom_call.1} parent=1 // loop_header
      %s17 = sphi 0, %s21
      %p18 = scmp.ge.s32.totalorder %s17, 4
      %s27 = sphi 0, %s29
      %s30 = sphi 0, %s27
      %s31 = sphi 0, %s30
      %s47 = sphi 0, %s31
      %s53 = sphi 0, %s55
      %s56 = sphi 0, %s53
      %s57 = sphi 0, %s56
      %s73 = sphi 0, %s57
      %s79 = sphi 0, %s81
      %s82 = sphi 0, %s79
      %s83 = sphi 0, %s82
      %s99 = sphi 0, %s83
    $region4: #{tpu_custom_call.1} parent=1 // loop_header_branch
      %20 = sbr.rel (%p18) target = $region8
    $region5: #{tpu_custom_call.1} parent=1 // loop_body
      %s22 = ssub.s32 %s17, 1
      %s23 = ssub.s32 %s17, 2
      %s24 = sadd.s32 %s17, 1
      %s25 = ssub.s32 %s17, %s24
      %p26 = scmp.eq.s32.totalorder %s25, 0
      %s28 = sadd.s32 %s27, 1
      %s29 = scalar_select %p26, %s27, %s28
      %p32 = pneg %p26
      %p33 = scmp.eq.s32.totalorder %s17, 1
      %p34 = por %p32, %p33
      %p35 = scmp.ne.s32.totalorder %s27, %s30
      %p36 = scmp.eq.s32.totalorder %s17, 0
      %p37 = por %p35, %p36
      %p38 = scmp.ne.s32.totalorder %s27, %s30
      %p39 = scmp.eq.s32.totalorder %s22, 1
      %p40 = por %p38, %p39
      %p41 = scmp.ne.s32.totalorder %s30, %s31
      %p42 = scmp.eq.s32.totalorder %s22, 0
      %p43 = por %p41, %p42
      %p44 = scmp.ne.s32.totalorder %s30, %s31
      %p45 = scmp.eq.s32.totalorder %s23, 1
      %p46 = por %p44, %p45
      %p48 = scmp.ne.s32.totalorder %s31, %s47
      %p49 = scmp.eq.s32.totalorder %s23, 0
      %p50 = por %p48, %p49
      %s51 = ssub.s32 %s17, %s24
      %p52 = scmp.eq.s32.totalorder %s51, 0
      %s54 = sadd.s32 %s53, 1
      %s55 = scalar_select %p52, %s53, %s54
      %p58 = pneg %p52
      %p59 = scmp.eq.s32.totalorder %s17, 1
      %p60 = por %p58, %p59
      %p61 = scmp.ne.s32.totalorder %s53, %s56
      %p62 = scmp.eq.s32.totalorder %s17, 0
      %p63 = por %p61, %p62
      %p64 = scmp.ne.s32.totalorder %s53, %s56
      %p65 = scmp.eq.s32.totalorder %s22, 1
      %p66 = por %p64, %p65
      %p67 = scmp.ne.s32.totalorder %s56, %s57
      %p68 = scmp.eq.s32.totalorder %s22, 0
      %p69 = por %p67, %p68
      %p70 = scmp.ne.s32.totalorder %s56, %s57
      %p71 = scmp.eq.s32.totalorder %s23, 1
      %p72 = por %p70, %p71
      %p74 = scmp.ne.s32.totalorder %s57, %s73
      %p75 = scmp.eq.s32.totalorder %s23, 0
      %p76 = por %p74, %p75
      %s77 = ssub.s32 %s17, %s24
      %p78 = scmp.eq.s32.totalorder %s77, 0
      %s80 = sadd.s32 %s79, 1
      %s81 = scalar_select %p78, %s79, %s80
      %p84 = pneg %p78
      %p85 = scmp.eq.s32.totalorder %s17, 1
      %p86 = por %p84, %p85
      %p87 = scmp.ne.s32.totalorder %s79, %s82
      %p88 = scmp.eq.s32.totalorder %s17, 0
      %p89 = por %p87, %p88
      %p90 = scmp.ne.s32.totalorder %s79, %s82
      %p91 = scmp.eq.s32.totalorder %s22, 1
      %p92 = por %p90, %p91
      %p93 = scmp.ne.s32.totalorder %s82, %s83
      %p94 = scmp.eq.s32.totalorder %s22, 0
      %p95 = por %p93, %p94
      %p96 = scmp.ne.s32.totalorder %s82, %s83
      %p97 = scmp.eq.s32.totalorder %s23, 1
      %p98 = por %p96, %p97
      %p100 = scmp.ne.s32.totalorder %s83, %s99
      %p101 = scmp.eq.s32.totalorder %s23, 0
      %p102 = por %p100, %p101
      %p103 = scmp.le.s32.totalorder 1, %s17
      %p104 = scmp.lt.s32.totalorder %s17, 3
      %p105 = pnand %p103, %p104
      %p106 = pneg %p105
      // Predicated region
      $region9: #{tpu_custom_call.1} parent=5 // pred_check
        _
      $region10: #{tpu_custom_call.1} parent=5 // pred_check_branch
        %108 = sbr.rel (%p105) target = $region12
      $region11: #{tpu_custom_call.1} parent=5 // pred_region
        %s109 = ssub.s32 %s17, 1
      $region12: #{tpu_custom_call.1} parent=5 // pred_fallthru
        _
      %p110 = scmp.lt.s32.totalorder %s17, 2
      // Predicated region
      $region13: #{tpu_custom_call.1} parent=5 // pred_check
        %p111 = pneg %p110
      $region14: #{tpu_custom_call.1} parent=5 // pred_check_branch
        %113 = sbr.rel (%p111) target = $region16
      $region15: #{tpu_custom_call.1} parent=5 // pred_region
        // Predicated region
        $region17: #{tpu_custom_call.1} parent=15 // pred_check
          %p114 = pneg %p37
        $region18: #{tpu_custom_call.1} parent=15 // pred_check_branch
          %116 = sbr.rel (%p114) target = $region20
        $region19: #{tpu_custom_call.1} parent=15 // pred_region
          %s117 = sand.u32 %s27, 1
          %s118 = scalar_lea.sflag [#allocation3], %s117
          %s119 = sand.u32 %s27, 1
          %s120 = smul.addr %s119, 4096
          %s121 = scalar_lea.vmem [#allocation2], %s120
          %s122 = smul.u32 512, %s17
          %s124 = ssub.s32 65536, 65536
          %125 = vsyncadd %s118, %s124
          %s126 = smul.addr %s122, 128
          %s127 = scalar_lea.hbm %s0, %s126
          %s128 = sshll.u32 %s121, 4
          %s129 = int_to_ptr.vmem [resolvable:$true] %s128
          %134 = dma.hbm_to_vmem [thread:$0]  %s127, 65536, %s129, %s118, 128, 128, 8
        $region20: #{tpu_custom_call.1} parent=15 // pred_fallthru
          _
        // Predicated region
        $region21: #{tpu_custom_call.1} parent=15 // pred_check
          %p135 = pneg %p63
        $region22: #{tpu_custom_call.1} parent=15 // pred_check_branch
          %137 = sbr.rel (%p135) target = $region24
        $region23: #{tpu_custom_call.1} parent=15 // pred_region
          %s138 = sand.u32 %s53, 1
          %s139 = scalar_lea.sflag [#allocation6], %s138
          %s140 = sand.u32 %s53, 1
          %s141 = smul.addr %s140, 512
          %s142 = scalar_lea.vmem [#allocation5], %s141
          %s143 = smul.u32 512, %s17
          %s145 = ssub.s32 8192, 8192
          %146 = vsyncadd %s139, %s145
          %s147 = smul.addr %s143, 16
          %s148 = scalar_lea.hbm %s1, %s147
          %s149 = sshll.u32 %s142, 4
          %s150 = int_to_ptr.vmem [resolvable:$true] %s149
          %155 = dma.hbm_to_vmem [thread:$0]  %s148, 8192, %s150, %s139, 16, 16, 1
        $region24: #{tpu_custom_call.1} parent=15 // pred_fallthru
          _
      $region16: #{tpu_custom_call.1} parent=5 // pred_fallthru
        _
      %p156 = scmp.le.s32.totalorder 1, %s17
      %p157 = scmp.lt.s32.totalorder %s17, 3
      %p158 = pnand %p156, %p157
      %p159 = pneg %p158
      // Predicated region
      $region25: #{tpu_custom_call.1} parent=5 // pred_check
        _
      $region26: #{tpu_custom_call.1} parent=5 // pred_check_branch
        %161 = sbr.rel (%p158) target = $region28
      $region27: #{tpu_custom_call.1} parent=5 // pred_region
        %s162 = ssub.s32 %s17, 1
        %s163 = sand.u32 %s30, 1
        %s164 = scalar_lea.sflag [#allocation3], %s163
        %s165 = sand.u32 %s30, 1
        %s166 = smul.addr %s165, 4096
        %s167 = scalar_lea.vmem [#allocation2], %s166
        // Predicated region
        $region29: #{tpu_custom_call.1} parent=27 // pred_check
          %p168 = pneg %p43
        $region30: #{tpu_custom_call.1} parent=27 // pred_check_branch
          %170 = sbr.rel (%p168) target = $region32
        $region31: #{tpu_custom_call.1} parent=27 // pred_region
          %171 = dma.done %s164, 65536
        $region32: #{tpu_custom_call.1} parent=27 // pred_fallthru
          _
        %s172 = sand.u32 %s56, 1
        %s173 = scalar_lea.sflag [#allocation6], %s172
        %s174 = sand.u32 %s56, 1
        %s175 = smul.addr %s174, 512
        %s176 = scalar_lea.vmem [#allocation5], %s175
        // Predicated region
        $region33: #{tpu_custom_call.1} parent=27 // pred_check
          %p177 = pneg %p69
        $region34: #{tpu_custom_call.1} parent=27 // pred_check_branch
          %179 = sbr.rel (%p177) target = $region36
        $region35: #{tpu_custom_call.1} parent=27 // pred_region
          %180 = dma.done %s173, 8192
        $region36: #{tpu_custom_call.1} parent=27 // pred_fallthru
          _
        %s181 = sand.u32 %s30, 1
        %s182 = scalar_lea.sflag [#allocation3], %s181
        %s183 = sand.u32 %s30, 1
        %s184 = smul.addr %s183, 4096
        %s185 = scalar_lea.vmem [#allocation2], %s184
        %p186 = pneg %p43
        %p187 = pneg %p40
        %s188 = sand.u32 %s56, 1
        %s189 = scalar_lea.sflag [#allocation6], %s188
        %s190 = sand.u32 %s56, 1
        %s191 = smul.addr %s190, 512
        %s192 = scalar_lea.vmem [#allocation5], %s191
        %p193 = pneg %p69
        %p194 = pneg %p66
        %p195 = pneg %p95
        %p196 = pneg %p92
        %s197 = sand.u32 %s82, 1
        %s198 = scalar_lea.sflag [#allocation4], %s197
        %s199 = sand.u32 %s82, 1
        %s200 = smul.addr %s199, 4096
        %s201 = scalar_lea.vmem [#allocation7], %s200
        %s202 = smul.u32 512, %s22
        %s203 = smul.u32 512, %s22
        %s204 = smul.u32 512, %s22
        %v205 = vld [vmem:[%s167] sm:$0xff]
        %v206 = vld [vmem:[%s167 + $0x8] sm:$0xff]
        %v207 = vld [vmem:[%s167 + $0x10] sm:$0xff]
        %v208 = vld [vmem:[%s167 + $0x18] sm:$0xff]
        %v209 = vld [vmem:[%s167 + $0x20] sm:$0xff]
        %v210 = vld [vmem:[%s167 + $0x28] sm:$0xff]
        %v211 = vld [vmem:[%s167 + $0x30] sm:$0xff]
        %v212 = vld [vmem:[%s167 + $0x38] sm:$0xff]
        %v213 = vld [vmem:[%s167 + $0x40] sm:$0xff]
        %v214 = vld [vmem:[%s167 + $0x48] sm:$0xff]
        %v215 = vld [vmem:[%s167 + $0x50] sm:$0xff]
        %v216 = vld [vmem:[%s167 + $0x58] sm:$0xff]
        %v217 = vld [vmem:[%s167 + $0x60] sm:$0xff]
        %v218 = vld [vmem:[%s167 + $0x68] sm:$0xff]
        %v219 = vld [vmem:[%s167 + $0x70] sm:$0xff]
        %v220 = vld [vmem:[%s167 + $0x78] sm:$0xff]
        %v221 = vld [vmem:[%s167 + $0x80] sm:$0xff]
        %v222 = vld [vmem:[%s167 + $0x88] sm:$0xff]
        %v223 = vld [vmem:[%s167 + $0x90] sm:$0xff]
        %v224 = vld [vmem:[%s167 + $0x98] sm:$0xff]
        %v225 = vld [vmem:[%s167 + $0xa0] sm:$0xff]
        %v226 = vld [vmem:[%s167 + $0xa8] sm:$0xff]
        %v227 = vld [vmem:[%s167 + $0xb0] sm:$0xff]
        %v228 = vld [vmem:[%s167 + $0xb8] sm:$0xff]
        %v229 = vld [vmem:[%s167 + $0xc0] sm:$0xff]
        %v230 = vld [vmem:[%s167 + $0xc8] sm:$0xff]
        %v231 = vld [vmem:[%s167 + $0xd0] sm:$0xff]
        %v232 = vld [vmem:[%s167 + $0xd8] sm:$0xff]
        %v233 = vld [vmem:[%s167 + $0xe0] sm:$0xff]
        %v234 = vld [vmem:[%s167 + $0xe8] sm:$0xff]
        %v235 = vld [vmem:[%s167 + $0xf0] sm:$0xff]
        %v236 = vld [vmem:[%s167 + $0xf8] sm:$0xff]
        %v237 = vld [vmem:[%s167 + $0x100] sm:$0xff]
        %v238 = vld [vmem:[%s167 + $0x108] sm:$0xff]
        %v239 = vld [vmem:[%s167 + $0x110] sm:$0xff]
        %v240 = vld [vmem:[%s167 + $0x118] sm:$0xff]
        %v241 = vld [vmem:[%s167 + $0x120] sm:$0xff]
        %v242 = vld [vmem:[%s167 + $0x128] sm:$0xff]
        %v243 = vld [vmem:[%s167 + $0x130] sm:$0xff]
        %v244 = vld [vmem:[%s167 + $0x138] sm:$0xff]
        %v245 = vld [vmem:[%s167 + $0x140] sm:$0xff]
        %v246 = vld [vmem:[%s167 + $0x148] sm:$0xff]
        %v247 = vld [vmem:[%s167 + $0x150] sm:$0xff]
        %v248 = vld [vmem:[%s167 + $0x158] sm:$0xff]
        %v249 = vld [vmem:[%s167 + $0x160] sm:$0xff]
        %v250 = vld [vmem:[%s167 + $0x168] sm:$0xff]
        %v251 = vld [vmem:[%s167 + $0x170] sm:$0xff]
        %v252 = vld [vmem:[%s167 + $0x178] sm:$0xff]
        %v253 = vld [vmem:[%s167 + $0x180] sm:$0xff]
        %v254 = vld [vmem:[%s167 + $0x188] sm:$0xff]
        %v255 = vld [vmem:[%s167 + $0x190] sm:$0xff]
        %v256 = vld [vmem:[%s167 + $0x198] sm:$0xff]
        %v257 = vld [vmem:[%s167 + $0x1a0] sm:$0xff]
        %v258 = vld [vmem:[%s167 + $0x1a8] sm:$0xff]
        %v259 = vld [vmem:[%s167 + $0x1b0] sm:$0xff]
        %v260 = vld [vmem:[%s167 + $0x1b8] sm:$0xff]
        %v261 = vld [vmem:[%s167 + $0x1c0] sm:$0xff]
        %v262 = vld [vmem:[%s167 + $0x1c8] sm:$0xff]
        %v263 = vld [vmem:[%s167 + $0x1d0] sm:$0xff]
        %v264 = vld [vmem:[%s167 + $0x1d8] sm:$0xff]
        %v265 = vld [vmem:[%s167 + $0x1e0] sm:$0xff]
        %v266 = vld [vmem:[%s167 + $0x1e8] sm:$0xff]
        %v267 = vld [vmem:[%s167 + $0x1f0] sm:$0xff]
        %v268 = vld [vmem:[%s167 + $0x1f8] sm:$0xff]
        %v269 = vld [vmem:[%s167 + $0x200] sm:$0xff]
        %v270 = vld [vmem:[%s167 + $0x208] sm:$0xff]
        %v271 = vld [vmem:[%s167 + $0x210] sm:$0xff]
        %v272 = vld [vmem:[%s167 + $0x218] sm:$0xff]
        %v273 = vld [vmem:[%s167 + $0x220] sm:$0xff]
        %v274 = vld [vmem:[%s167 + $0x228] sm:$0xff]
        %v275 = vld [vmem:[%s167 + $0x230] sm:$0xff]
        %v276 = vld [vmem:[%s167 + $0x238] sm:$0xff]
        %v277 = vld [vmem:[%s167 + $0x240] sm:$0xff]
        %v278 = vld [vmem:[%s167 + $0x248] sm:$0xff]
        %v279 = vld [vmem:[%s167 + $0x250] sm:$0xff]
        %v280 = vld [vmem:[%s167 + $0x258] sm:$0xff]
        %v281 = vld [vmem:[%s167 + $0x260] sm:$0xff]
        %v282 = vld [vmem:[%s167 + $0x268] sm:$0xff]
        %v283 = vld [vmem:[%s167 + $0x270] sm:$0xff]
        %v284 = vld [vmem:[%s167 + $0x278] sm:$0xff]
        %v285 = vld [vmem:[%s167 + $0x280] sm:$0xff]
        %v286 = vld [vmem:[%s167 + $0x288] sm:$0xff]
        %v287 = vld [vmem:[%s167 + $0x290] sm:$0xff]
        %v288 = vld [vmem:[%s167 + $0x298] sm:$0xff]
        %v289 = vld [vmem:[%s167 + $0x2a0] sm:$0xff]
        %v290 = vld [vmem:[%s167 + $0x2a8] sm:$0xff]
        %v291 = vld [vmem:[%s167 + $0x2b0] sm:$0xff]
        %v292 = vld [vmem:[%s167 + $0x2b8] sm:$0xff]
        %v293 = vld [vmem:[%s167 + $0x2c0] sm:$0xff]
        %v294 = vld [vmem:[%s167 + $0x2c8] sm:$0xff]
        %v295 = vld [vmem:[%s167 + $0x2d0] sm:$0xff]
        %v296 = vld [vmem:[%s167 + $0x2d8] sm:$0xff]
        %v297 = vld [vmem:[%s167 + $0x2e0] sm:$0xff]
        %v298 = vld [vmem:[%s167 + $0x2e8] sm:$0xff]
        %v299 = vld [vmem:[%s167 + $0x2f0] sm:$0xff]
        %v300 = vld [vmem:[%s167 + $0x2f8] sm:$0xff]
        %v301 = vld [vmem:[%s167 + $0x300] sm:$0xff]
        %v302 = vld [vmem:[%s167 + $0x308] sm:$0xff]
        %v303 = vld [vmem:[%s167 + $0x310] sm:$0xff]
        %v304 = vld [vmem:[%s167 + $0x318] sm:$0xff]
        %v305 = vld [vmem:[%s167 + $0x320] sm:$0xff]
        %v306 = vld [vmem:[%s167 + $0x328] sm:$0xff]
        %v307 = vld [vmem:[%s167 + $0x330] sm:$0xff]
        %v308 = vld [vmem:[%s167 + $0x338] sm:$0xff]
        %v309 = vld [vmem:[%s167 + $0x340] sm:$0xff]
        %v310 = vld [vmem:[%s167 + $0x348] sm:$0xff]
        %v311 = vld [vmem:[%s167 + $0x350] sm:$0xff]
        %v312 = vld [vmem:[%s167 + $0x358] sm:$0xff]
        %v313 = vld [vmem:[%s167 + $0x360] sm:$0xff]
        %v314 = vld [vmem:[%s167 + $0x368] sm:$0xff]
        %v315 = vld [vmem:[%s167 + $0x370] sm:$0xff]
        %v316 = vld [vmem:[%s167 + $0x378] sm:$0xff]
        %v317 = vld [vmem:[%s167 + $0x380] sm:$0xff]
        %v318 = vld [vmem:[%s167 + $0x388] sm:$0xff]
        %v319 = vld [vmem:[%s167 + $0x390] sm:$0xff]
        %v320 = vld [vmem:[%s167 + $0x398] sm:$0xff]
        %v321 = vld [vmem:[%s167 + $0x3a0] sm:$0xff]
        %v322 = vld [vmem:[%s167 + $0x3a8] sm:$0xff]
        %v323 = vld [vmem:[%s167 + $0x3b0] sm:$0xff]
        %v324 = vld [vmem:[%s167 + $0x3b8] sm:$0xff]
        %v325 = vld [vmem:[%s167 + $0x3c0] sm:$0xff]
        %v326 = vld [vmem:[%s167 + $0x3c8] sm:$0xff]
        %v327 = vld [vmem:[%s167 + $0x3d0] sm:$0xff]
        %v328 = vld [vmem:[%s167 + $0x3d8] sm:$0xff]
        %v329 = vld [vmem:[%s167 + $0x3e0] sm:$0xff]
        %v330 = vld [vmem:[%s167 + $0x3e8] sm:$0xff]
        %v331 = vld [vmem:[%s167 + $0x3f0] sm:$0xff]
        %v332 = vld [vmem:[%s167 + $0x3f8] sm:$0xff]
        %v333 = vld [vmem:[%s167 + $0x400] sm:$0xff]
        %v334 = vld [vmem:[%s167 + $0x408] sm:$0xff]
        %v335 = vld [vmem:[%s167 + $0x410] sm:$0xff]
        %v336 = vld [vmem:[%s167 + $0x418] sm:$0xff]
        %v337 = vld [vmem:[%s167 + $0x420] sm:$0xff]
        %v338 = vld [vmem:[%s167 + $0x428] sm:$0xff]
        %v339 = vld [vmem:[%s167 + $0x430] sm:$0xff]
        %v340 = vld [vmem:[%s167 + $0x438] sm:$0xff]
        %v341 = vld [vmem:[%s167 + $0x440] sm:$0xff]
        %v342 = vld [vmem:[%s167 + $0x448] sm:$0xff]
        %v343 = vld [vmem:[%s167 + $0x450] sm:$0xff]
        %v344 = vld [vmem:[%s167 + $0x458] sm:$0xff]
        %v345 = vld [vmem:[%s167 + $0x460] sm:$0xff]
        %v346 = vld [vmem:[%s167 + $0x468] sm:$0xff]
        %v347 = vld [vmem:[%s167 + $0x470] sm:$0xff]
        %v348 = vld [vmem:[%s167 + $0x478] sm:$0xff]
        %v349 = vld [vmem:[%s167 + $0x480] sm:$0xff]
        %v350 = vld [vmem:[%s167 + $0x488] sm:$0xff]
        %v351 = vld [vmem:[%s167 + $0x490] sm:$0xff]
        %v352 = vld [vmem:[%s167 + $0x498] sm:$0xff]
        %v353 = vld [vmem:[%s167 + $0x4a0] sm:$0xff]
        %v354 = vld [vmem:[%s167 + $0x4a8] sm:$0xff]
        %v355 = vld [vmem:[%s167 + $0x4b0] sm:$0xff]
        %v356 = vld [vmem:[%s167 + $0x4b8] sm:$0xff]
        %v357 = vld [vmem:[%s167 + $0x4c0] sm:$0xff]
        %v358 = vld [vmem:[%s167 + $0x4c8] sm:$0xff]
        %v359 = vld [vmem:[%s167 + $0x4d0] sm:$0xff]
        %v360 = vld [vmem:[%s167 + $0x4d8] sm:$0xff]
        %v361 = vld [vmem:[%s167 + $0x4e0] sm:$0xff]
        %v362 = vld [vmem:[%s167 + $0x4e8] sm:$0xff]
        %v363 = vld [vmem:[%s167 + $0x4f0] sm:$0xff]
        %v364 = vld [vmem:[%s167 + $0x4f8] sm:$0xff]
        %v365 = vld [vmem:[%s167 + $0x500] sm:$0xff]
        %v366 = vld [vmem:[%s167 + $0x508] sm:$0xff]
        %v367 = vld [vmem:[%s167 + $0x510] sm:$0xff]
        %v368 = vld [vmem:[%s167 + $0x518] sm:$0xff]
        %v369 = vld [vmem:[%s167 + $0x520] sm:$0xff]
        %v370 = vld [vmem:[%s167 + $0x528] sm:$0xff]
        %v371 = vld [vmem:[%s167 + $0x530] sm:$0xff]
        %v372 = vld [vmem:[%s167 + $0x538] sm:$0xff]
        %v373 = vld [vmem:[%s167 + $0x540] sm:$0xff]
        %v374 = vld [vmem:[%s167 + $0x548] sm:$0xff]
        %v375 = vld [vmem:[%s167 + $0x550] sm:$0xff]
        %v376 = vld [vmem:[%s167 + $0x558] sm:$0xff]
        %v377 = vld [vmem:[%s167 + $0x560] sm:$0xff]
        %v378 = vld [vmem:[%s167 + $0x568] sm:$0xff]
        %v379 = vld [vmem:[%s167 + $0x570] sm:$0xff]
        %v380 = vld [vmem:[%s167 + $0x578] sm:$0xff]
        %v381 = vld [vmem:[%s167 + $0x580] sm:$0xff]
        %v382 = vld [vmem:[%s167 + $0x588] sm:$0xff]
        %v383 = vld [vmem:[%s167 + $0x590] sm:$0xff]
        %v384 = vld [vmem:[%s167 + $0x598] sm:$0xff]
        %v385 = vld [vmem:[%s167 + $0x5a0] sm:$0xff]
        %v386 = vld [vmem:[%s167 + $0x5a8] sm:$0xff]
        %v387 = vld [vmem:[%s167 + $0x5b0] sm:$0xff]
        %v388 = vld [vmem:[%s167 + $0x5b8] sm:$0xff]
        %v389 = vld [vmem:[%s167 + $0x5c0] sm:$0xff]
        %v390 = vld [vmem:[%s167 + $0x5c8] sm:$0xff]
        %v391 = vld [vmem:[%s167 + $0x5d0] sm:$0xff]
        %v392 = vld [vmem:[%s167 + $0x5d8] sm:$0xff]
        %v393 = vld [vmem:[%s167 + $0x5e0] sm:$0xff]
        %v394 = vld [vmem:[%s167 + $0x5e8] sm:$0xff]
        %v395 = vld [vmem:[%s167 + $0x5f0] sm:$0xff]
        %v396 = vld [vmem:[%s167 + $0x5f8] sm:$0xff]
        %v397 = vld [vmem:[%s167 + $0x600] sm:$0xff]
        %v398 = vld [vmem:[%s167 + $0x608] sm:$0xff]
        %v399 = vld [vmem:[%s167 + $0x610] sm:$0xff]
        %v400 = vld [vmem:[%s167 + $0x618] sm:$0xff]
        %v401 = vld [vmem:[%s167 + $0x620] sm:$0xff]
        %v402 = vld [vmem:[%s167 + $0x628] sm:$0xff]
        %v403 = vld [vmem:[%s167 + $0x630] sm:$0xff]
        %v404 = vld [vmem:[%s167 + $0x638] sm:$0xff]
        %v405 = vld [vmem:[%s167 + $0x640] sm:$0xff]
        %v406 = vld [vmem:[%s167 + $0x648] sm:$0xff]
        %v407 = vld [vmem:[%s167 + $0x650] sm:$0xff]
        %v408 = vld [vmem:[%s167 + $0x658] sm:$0xff]
        %v409 = vld [vmem:[%s167 + $0x660] sm:$0xff]
        %v410 = vld [vmem:[%s167 + $0x668] sm:$0xff]
        %v411 = vld [vmem:[%s167 + $0x670] sm:$0xff]
        %v412 = vld [vmem:[%s167 + $0x678] sm:$0xff]
        %v413 = vld [vmem:[%s167 + $0x680] sm:$0xff]
        %v414 = vld [vmem:[%s167 + $0x688] sm:$0xff]
        %v415 = vld [vmem:[%s167 + $0x690] sm:$0xff]
        %v416 = vld [vmem:[%s167 + $0x698] sm:$0xff]
        %v417 = vld [vmem:[%s167 + $0x6a0] sm:$0xff]
        %v418 = vld [vmem:[%s167 + $0x6a8] sm:$0xff]
        %v419 = vld [vmem:[%s167 + $0x6b0] sm:$0xff]
        %v420 = vld [vmem:[%s167 + $0x6b8] sm:$0xff]
        %v421 = vld [vmem:[%s167 + $0x6c0] sm:$0xff]
        %v422 = vld [vmem:[%s167 + $0x6c8] sm:$0xff]
        %v423 = vld [vmem:[%s167 + $0x6d0] sm:$0xff]
        %v424 = vld [vmem:[%s167 + $0x6d8] sm:$0xff]
        %v425 = vld [vmem:[%s167 + $0x6e0] sm:$0xff]
        %v426 = vld [vmem:[%s167 + $0x6e8] sm:$0xff]
        %v427 = vld [vmem:[%s167 + $0x6f0] sm:$0xff]
        %v428 = vld [vmem:[%s167 + $0x6f8] sm:$0xff]
        %v429 = vld [vmem:[%s167 + $0x700] sm:$0xff]
        %v430 = vld [vmem:[%s167 + $0x708] sm:$0xff]
        %v431 = vld [vmem:[%s167 + $0x710] sm:$0xff]
        %v432 = vld [vmem:[%s167 + $0x718] sm:$0xff]
        %v433 = vld [vmem:[%s167 + $0x720] sm:$0xff]
        %v434 = vld [vmem:[%s167 + $0x728] sm:$0xff]
        %v435 = vld [vmem:[%s167 + $0x730] sm:$0xff]
        %v436 = vld [vmem:[%s167 + $0x738] sm:$0xff]
        %v437 = vld [vmem:[%s167 + $0x740] sm:$0xff]
        %v438 = vld [vmem:[%s167 + $0x748] sm:$0xff]
        %v439 = vld [vmem:[%s167 + $0x750] sm:$0xff]
        %v440 = vld [vmem:[%s167 + $0x758] sm:$0xff]
        %v441 = vld [vmem:[%s167 + $0x760] sm:$0xff]
        %v442 = vld [vmem:[%s167 + $0x768] sm:$0xff]
        %v443 = vld [vmem:[%s167 + $0x770] sm:$0xff]
        %v444 = vld [vmem:[%s167 + $0x778] sm:$0xff]
        %v445 = vld [vmem:[%s167 + $0x780] sm:$0xff]
        %v446 = vld [vmem:[%s167 + $0x788] sm:$0xff]
        %v447 = vld [vmem:[%s167 + $0x790] sm:$0xff]
        %v448 = vld [vmem:[%s167 + $0x798] sm:$0xff]
        %v449 = vld [vmem:[%s167 + $0x7a0] sm:$0xff]
        %v450 = vld [vmem:[%s167 + $0x7a8] sm:$0xff]
        %v451 = vld [vmem:[%s167 + $0x7b0] sm:$0xff]
        %v452 = vld [vmem:[%s167 + $0x7b8] sm:$0xff]
        %v453 = vld [vmem:[%s167 + $0x7c0] sm:$0xff]
        %v454 = vld [vmem:[%s167 + $0x7c8] sm:$0xff]
        %v455 = vld [vmem:[%s167 + $0x7d0] sm:$0xff]
        %v456 = vld [vmem:[%s167 + $0x7d8] sm:$0xff]
        %v457 = vld [vmem:[%s167 + $0x7e0] sm:$0xff]
        %v458 = vld [vmem:[%s167 + $0x7e8] sm:$0xff]
        %v459 = vld [vmem:[%s167 + $0x7f0] sm:$0xff]
        %v460 = vld [vmem:[%s167 + $0x7f8] sm:$0xff]
        %v461 = vld [vmem:[%s167 + $0x800] sm:$0xff]
        %v462 = vld [vmem:[%s167 + $0x808] sm:$0xff]
        %v463 = vld [vmem:[%s167 + $0x810] sm:$0xff]
        %v464 = vld [vmem:[%s167 + $0x818] sm:$0xff]
        %v465 = vld [vmem:[%s167 + $0x820] sm:$0xff]
        %v466 = vld [vmem:[%s167 + $0x828] sm:$0xff]
        %v467 = vld [vmem:[%s167 + $0x830] sm:$0xff]
        %v468 = vld [vmem:[%s167 + $0x838] sm:$0xff]
        %v469 = vld [vmem:[%s167 + $0x840] sm:$0xff]
        %v470 = vld [vmem:[%s167 + $0x848] sm:$0xff]
        %v471 = vld [vmem:[%s167 + $0x850] sm:$0xff]
        %v472 = vld [vmem:[%s167 + $0x858] sm:$0xff]
        %v473 = vld [vmem:[%s167 + $0x860] sm:$0xff]
        %v474 = vld [vmem:[%s167 + $0x868] sm:$0xff]
        %v475 = vld [vmem:[%s167 + $0x870] sm:$0xff]
        %v476 = vld [vmem:[%s167 + $0x878] sm:$0xff]
        %v477 = vld [vmem:[%s167 + $0x880] sm:$0xff]
        %v478 = vld [vmem:[%s167 + $0x888] sm:$0xff]
        %v479 = vld [vmem:[%s167 + $0x890] sm:$0xff]
        %v480 = vld [vmem:[%s167 + $0x898] sm:$0xff]
        %v481 = vld [vmem:[%s167 + $0x8a0] sm:$0xff]
        %v482 = vld [vmem:[%s167 + $0x8a8] sm:$0xff]
        %v483 = vld [vmem:[%s167 + $0x8b0] sm:$0xff]
        %v484 = vld [vmem:[%s167 + $0x8b8] sm:$0xff]
        %v485 = vld [vmem:[%s167 + $0x8c0] sm:$0xff]
        %v486 = vld [vmem:[%s167 + $0x8c8] sm:$0xff]
        %v487 = vld [vmem:[%s167 + $0x8d0] sm:$0xff]
        %v488 = vld [vmem:[%s167 + $0x8d8] sm:$0xff]
        %v489 = vld [vmem:[%s167 + $0x8e0] sm:$0xff]
        %v490 = vld [vmem:[%s167 + $0x8e8] sm:$0xff]
        %v491 = vld [vmem:[%s167 + $0x8f0] sm:$0xff]
        %v492 = vld [vmem:[%s167 + $0x8f8] sm:$0xff]
        %v493 = vld [vmem:[%s167 + $0x900] sm:$0xff]
        %v494 = vld [vmem:[%s167 + $0x908] sm:$0xff]
        %v495 = vld [vmem:[%s167 + $0x910] sm:$0xff]
        %v496 = vld [vmem:[%s167 + $0x918] sm:$0xff]
        %v497 = vld [vmem:[%s167 + $0x920] sm:$0xff]
        %v498 = vld [vmem:[%s167 + $0x928] sm:$0xff]
        %v499 = vld [vmem:[%s167 + $0x930] sm:$0xff]
        %v500 = vld [vmem:[%s167 + $0x938] sm:$0xff]
        %v501 = vld [vmem:[%s167 + $0x940] sm:$0xff]
        %v502 = vld [vmem:[%s167 + $0x948] sm:$0xff]
        %v503 = vld [vmem:[%s167 + $0x950] sm:$0xff]
        %v504 = vld [vmem:[%s167 + $0x958] sm:$0xff]
        %v505 = vld [vmem:[%s167 + $0x960] sm:$0xff]
        %v506 = vld [vmem:[%s167 + $0x968] sm:$0xff]
        %v507 = vld [vmem:[%s167 + $0x970] sm:$0xff]
        %v508 = vld [vmem:[%s167 + $0x978] sm:$0xff]
        %v509 = vld [vmem:[%s167 + $0x980] sm:$0xff]
        %v510 = vld [vmem:[%s167 + $0x988] sm:$0xff]
        %v511 = vld [vmem:[%s167 + $0x990] sm:$0xff]
        %v512 = vld [vmem:[%s167 + $0x998] sm:$0xff]
        %v513 = vld [vmem:[%s167 + $0x9a0] sm:$0xff]
        %v514 = vld [vmem:[%s167 + $0x9a8] sm:$0xff]
        %v515 = vld [vmem:[%s167 + $0x9b0] sm:$0xff]
        %v516 = vld [vmem:[%s167 + $0x9b8] sm:$0xff]
        %v517 = vld [vmem:[%s167 + $0x9c0] sm:$0xff]
        %v518 = vld [vmem:[%s167 + $0x9c8] sm:$0xff]
        %v519 = vld [vmem:[%s167 + $0x9d0] sm:$0xff]
        %v520 = vld [vmem:[%s167 + $0x9d8] sm:$0xff]
        %v521 = vld [vmem:[%s167 + $0x9e0] sm:$0xff]
        %v522 = vld [vmem:[%s167 + $0x9e8] sm:$0xff]
        %v523 = vld [vmem:[%s167 + $0x9f0] sm:$0xff]
        %v524 = vld [vmem:[%s167 + $0x9f8] sm:$0xff]
        %v525 = vld [vmem:[%s167 + $0xa00] sm:$0xff]
        %v526 = vld [vmem:[%s167 + $0xa08] sm:$0xff]
        %v527 = vld [vmem:[%s167 + $0xa10] sm:$0xff]
        %v528 = vld [vmem:[%s167 + $0xa18] sm:$0xff]
        %v529 = vld [vmem:[%s167 + $0xa20] sm:$0xff]
        %v530 = vld [vmem:[%s167 + $0xa28] sm:$0xff]
        %v531 = vld [vmem:[%s167 + $0xa30] sm:$0xff]
        %v532 = vld [vmem:[%s167 + $0xa38] sm:$0xff]
        %v533 = vld [vmem:[%s167 + $0xa40] sm:$0xff]
        %v534 = vld [vmem:[%s167 + $0xa48] sm:$0xff]
        %v535 = vld [vmem:[%s167 + $0xa50] sm:$0xff]
        %v536 = vld [vmem:[%s167 + $0xa58] sm:$0xff]
        %v537 = vld [vmem:[%s167 + $0xa60] sm:$0xff]
        %v538 = vld [vmem:[%s167 + $0xa68] sm:$0xff]
        %v539 = vld [vmem:[%s167 + $0xa70] sm:$0xff]
        %v540 = vld [vmem:[%s167 + $0xa78] sm:$0xff]
        %v541 = vld [vmem:[%s167 + $0xa80] sm:$0xff]
        %v542 = vld [vmem:[%s167 + $0xa88] sm:$0xff]
        %v543 = vld [vmem:[%s167 + $0xa90] sm:$0xff]
        %v544 = vld [vmem:[%s167 + $0xa98] sm:$0xff]
        %v545 = vld [vmem:[%s167 + $0xaa0] sm:$0xff]
        %v546 = vld [vmem:[%s167 + $0xaa8] sm:$0xff]
        %v547 = vld [vmem:[%s167 + $0xab0] sm:$0xff]
        %v548 = vld [vmem:[%s167 + $0xab8] sm:$0xff]
        %v549 = vld [vmem:[%s167 + $0xac0] sm:$0xff]
        %v550 = vld [vmem:[%s167 + $0xac8] sm:$0xff]
        %v551 = vld [vmem:[%s167 + $0xad0] sm:$0xff]
        %v552 = vld [vmem:[%s167 + $0xad8] sm:$0xff]
        %v553 = vld [vmem:[%s167 + $0xae0] sm:$0xff]
        %v554 = vld [vmem:[%s167 + $0xae8] sm:$0xff]
        %v555 = vld [vmem:[%s167 + $0xaf0] sm:$0xff]
        %v556 = vld [vmem:[%s167 + $0xaf8] sm:$0xff]
        %v557 = vld [vmem:[%s167 + $0xb00] sm:$0xff]
        %v558 = vld [vmem:[%s167 + $0xb08] sm:$0xff]
        %v559 = vld [vmem:[%s167 + $0xb10] sm:$0xff]
        %v560 = vld [vmem:[%s167 + $0xb18] sm:$0xff]
        %v561 = vld [vmem:[%s167 + $0xb20] sm:$0xff]
        %v562 = vld [vmem:[%s167 + $0xb28] sm:$0xff]
        %v563 = vld [vmem:[%s167 + $0xb30] sm:$0xff]
        %v564 = vld [vmem:[%s167 + $0xb38] sm:$0xff]
        %v565 = vld [vmem:[%s167 + $0xb40] sm:$0xff]
        %v566 = vld [vmem:[%s167 + $0xb48] sm:$0xff]
        %v567 = vld [vmem:[%s167 + $0xb50] sm:$0xff]
        %v568 = vld [vmem:[%s167 + $0xb58] sm:$0xff]
        %v569 = vld [vmem:[%s167 + $0xb60] sm:$0xff]
        %v570 = vld [vmem:[%s167 + $0xb68] sm:$0xff]
        %v571 = vld [vmem:[%s167 + $0xb70] sm:$0xff]
        %v572 = vld [vmem:[%s167 + $0xb78] sm:$0xff]
        %v573 = vld [vmem:[%s167 + $0xb80] sm:$0xff]
        %v574 = vld [vmem:[%s167 + $0xb88] sm:$0xff]
        %v575 = vld [vmem:[%s167 + $0xb90] sm:$0xff]
        %v576 = vld [vmem:[%s167 + $0xb98] sm:$0xff]
        %v577 = vld [vmem:[%s167 + $0xba0] sm:$0xff]
        %v578 = vld [vmem:[%s167 + $0xba8] sm:$0xff]
        %v579 = vld [vmem:[%s167 + $0xbb0] sm:$0xff]
        %v580 = vld [vmem:[%s167 + $0xbb8] sm:$0xff]
        %v581 = vld [vmem:[%s167 + $0xbc0] sm:$0xff]
        %v582 = vld [vmem:[%s167 + $0xbc8] sm:$0xff]
        %v583 = vld [vmem:[%s167 + $0xbd0] sm:$0xff]
        %v584 = vld [vmem:[%s167 + $0xbd8] sm:$0xff]
        %v585 = vld [vmem:[%s167 + $0xbe0] sm:$0xff]
        %v586 = vld [vmem:[%s167 + $0xbe8] sm:$0xff]
        %v587 = vld [vmem:[%s167 + $0xbf0] sm:$0xff]
        %v588 = vld [vmem:[%s167 + $0xbf8] sm:$0xff]
        %v589 = vld [vmem:[%s167 + $0xc00] sm:$0xff]
        %v590 = vld [vmem:[%s167 + $0xc08] sm:$0xff]
        %v591 = vld [vmem:[%s167 + $0xc10] sm:$0xff]
        %v592 = vld [vmem:[%s167 + $0xc18] sm:$0xff]
        %v593 = vld [vmem:[%s167 + $0xc20] sm:$0xff]
        %v594 = vld [vmem:[%s167 + $0xc28] sm:$0xff]
        %v595 = vld [vmem:[%s167 + $0xc30] sm:$0xff]
        %v596 = vld [vmem:[%s167 + $0xc38] sm:$0xff]
        %v597 = vld [vmem:[%s167 + $0xc40] sm:$0xff]
        %v598 = vld [vmem:[%s167 + $0xc48] sm:$0xff]
        %v599 = vld [vmem:[%s167 + $0xc50] sm:$0xff]
        %v600 = vld [vmem:[%s167 + $0xc58] sm:$0xff]
        %v601 = vld [vmem:[%s167 + $0xc60] sm:$0xff]
        %v602 = vld [vmem:[%s167 + $0xc68] sm:$0xff]
        %v603 = vld [vmem:[%s167 + $0xc70] sm:$0xff]
        %v604 = vld [vmem:[%s167 + $0xc78] sm:$0xff]
        %v605 = vld [vmem:[%s167 + $0xc80] sm:$0xff]
        %v606 = vld [vmem:[%s167 + $0xc88] sm:$0xff]
        %v607 = vld [vmem:[%s167 + $0xc90] sm:$0xff]
        %v608 = vld [vmem:[%s167 + $0xc98] sm:$0xff]
        %v609 = vld [vmem:[%s167 + $0xca0] sm:$0xff]
        %v610 = vld [vmem:[%s167 + $0xca8] sm:$0xff]
        %v611 = vld [vmem:[%s167 + $0xcb0] sm:$0xff]
        %v612 = vld [vmem:[%s167 + $0xcb8] sm:$0xff]
        %v613 = vld [vmem:[%s167 + $0xcc0] sm:$0xff]
        %v614 = vld [vmem:[%s167 + $0xcc8] sm:$0xff]
        %v615 = vld [vmem:[%s167 + $0xcd0] sm:$0xff]
        %v616 = vld [vmem:[%s167 + $0xcd8] sm:$0xff]
        %v617 = vld [vmem:[%s167 + $0xce0] sm:$0xff]
        %v618 = vld [vmem:[%s167 + $0xce8] sm:$0xff]
        %v619 = vld [vmem:[%s167 + $0xcf0] sm:$0xff]
        %v620 = vld [vmem:[%s167 + $0xcf8] sm:$0xff]
        %v621 = vld [vmem:[%s167 + $0xd00] sm:$0xff]
        %v622 = vld [vmem:[%s167 + $0xd08] sm:$0xff]
        %v623 = vld [vmem:[%s167 + $0xd10] sm:$0xff]
        %v624 = vld [vmem:[%s167 + $0xd18] sm:$0xff]
        %v625 = vld [vmem:[%s167 + $0xd20] sm:$0xff]
        %v626 = vld [vmem:[%s167 + $0xd28] sm:$0xff]
        %v627 = vld [vmem:[%s167 + $0xd30] sm:$0xff]
        %v628 = vld [vmem:[%s167 + $0xd38] sm:$0xff]
        %v629 = vld [vmem:[%s167 + $0xd40] sm:$0xff]
        %v630 = vld [vmem:[%s167 + $0xd48] sm:$0xff]
        %v631 = vld [vmem:[%s167 + $0xd50] sm:$0xff]
        %v632 = vld [vmem:[%s167 + $0xd58] sm:$0xff]
        %v633 = vld [vmem:[%s167 + $0xd60] sm:$0xff]
        %v634 = vld [vmem:[%s167 + $0xd68] sm:$0xff]
        %v635 = vld [vmem:[%s167 + $0xd70] sm:$0xff]
        %v636 = vld [vmem:[%s167 + $0xd78] sm:$0xff]
        %v637 = vld [vmem:[%s167 + $0xd80] sm:$0xff]
        %v638 = vld [vmem:[%s167 + $0xd88] sm:$0xff]
        %v639 = vld [vmem:[%s167 + $0xd90] sm:$0xff]
        %v640 = vld [vmem:[%s167 + $0xd98] sm:$0xff]
        %v641 = vld [vmem:[%s167 + $0xda0] sm:$0xff]
        %v642 = vld [vmem:[%s167 + $0xda8] sm:$0xff]
        %v643 = vld [vmem:[%s167 + $0xdb0] sm:$0xff]
        %v644 = vld [vmem:[%s167 + $0xdb8] sm:$0xff]
        %v645 = vld [vmem:[%s167 + $0xdc0] sm:$0xff]
        %v646 = vld [vmem:[%s167 + $0xdc8] sm:$0xff]
        %v647 = vld [vmem:[%s167 + $0xdd0] sm:$0xff]
        %v648 = vld [vmem:[%s167 + $0xdd8] sm:$0xff]
        %v649 = vld [vmem:[%s167 + $0xde0] sm:$0xff]
        %v650 = vld [vmem:[%s167 + $0xde8] sm:$0xff]
        %v651 = vld [vmem:[%s167 + $0xdf0] sm:$0xff]
        %v652 = vld [vmem:[%s167 + $0xdf8] sm:$0xff]
        %v653 = vld [vmem:[%s167 + $0xe00] sm:$0xff]
        %v654 = vld [vmem:[%s167 + $0xe08] sm:$0xff]
        %v655 = vld [vmem:[%s167 + $0xe10] sm:$0xff]
        %v656 = vld [vmem:[%s167 + $0xe18] sm:$0xff]
        %v657 = vld [vmem:[%s167 + $0xe20] sm:$0xff]
        %v658 = vld [vmem:[%s167 + $0xe28] sm:$0xff]
        %v659 = vld [vmem:[%s167 + $0xe30] sm:$0xff]
        %v660 = vld [vmem:[%s167 + $0xe38] sm:$0xff]
        %v661 = vld [vmem:[%s167 + $0xe40] sm:$0xff]
        %v662 = vld [vmem:[%s167 + $0xe48] sm:$0xff]
        %v663 = vld [vmem:[%s167 + $0xe50] sm:$0xff]
        %v664 = vld [vmem:[%s167 + $0xe58] sm:$0xff]
        %v665 = vld [vmem:[%s167 + $0xe60] sm:$0xff]
        %v666 = vld [vmem:[%s167 + $0xe68] sm:$0xff]
        %v667 = vld [vmem:[%s167 + $0xe70] sm:$0xff]
        %v668 = vld [vmem:[%s167 + $0xe78] sm:$0xff]
        %v669 = vld [vmem:[%s167 + $0xe80] sm:$0xff]
        %v670 = vld [vmem:[%s167 + $0xe88] sm:$0xff]
        %v671 = vld [vmem:[%s167 + $0xe90] sm:$0xff]
        %v672 = vld [vmem:[%s167 + $0xe98] sm:$0xff]
        %v673 = vld [vmem:[%s167 + $0xea0] sm:$0xff]
        %v674 = vld [vmem:[%s167 + $0xea8] sm:$0xff]
        %v675 = vld [vmem:[%s167 + $0xeb0] sm:$0xff]
        %v676 = vld [vmem:[%s167 + $0xeb8] sm:$0xff]
        %v677 = vld [vmem:[%s167 + $0xec0] sm:$0xff]
        %v678 = vld [vmem:[%s167 + $0xec8] sm:$0xff]
        %v679 = vld [vmem:[%s167 + $0xed0] sm:$0xff]
        %v680 = vld [vmem:[%s167 + $0xed8] sm:$0xff]
        %v681 = vld [vmem:[%s167 + $0xee0] sm:$0xff]
        %v682 = vld [vmem:[%s167 + $0xee8] sm:$0xff]
        %v683 = vld [vmem:[%s167 + $0xef0] sm:$0xff]
        %v684 = vld [vmem:[%s167 + $0xef8] sm:$0xff]
        %v685 = vld [vmem:[%s167 + $0xf00] sm:$0xff]
        %v686 = vld [vmem:[%s167 + $0xf08] sm:$0xff]
        %v687 = vld [vmem:[%s167 + $0xf10] sm:$0xff]
        %v688 = vld [vmem:[%s167 + $0xf18] sm:$0xff]
        %v689 = vld [vmem:[%s167 + $0xf20] sm:$0xff]
        %v690 = vld [vmem:[%s167 + $0xf28] sm:$0xff]
        %v691 = vld [vmem:[%s167 + $0xf30] sm:$0xff]
        %v692 = vld [vmem:[%s167 + $0xf38] sm:$0xff]
        %v693 = vld [vmem:[%s167 + $0xf40] sm:$0xff]
        %v694 = vld [vmem:[%s167 + $0xf48] sm:$0xff]
        %v695 = vld [vmem:[%s167 + $0xf50] sm:$0xff]
        %v696 = vld [vmem:[%s167 + $0xf58] sm:$0xff]
        %v697 = vld [vmem:[%s167 + $0xf60] sm:$0xff]
        %v698 = vld [vmem:[%s167 + $0xf68] sm:$0xff]
        %v699 = vld [vmem:[%s167 + $0xf70] sm:$0xff]
        %v700 = vld [vmem:[%s167 + $0xf78] sm:$0xff]
        %v701 = vld [vmem:[%s167 + $0xf80] sm:$0xff]
        %v702 = vld [vmem:[%s167 + $0xf88] sm:$0xff]
        %v703 = vld [vmem:[%s167 + $0xf90] sm:$0xff]
        %v704 = vld [vmem:[%s167 + $0xf98] sm:$0xff]
        %v705 = vld [vmem:[%s167 + $0xfa0] sm:$0xff]
        %v706 = vld [vmem:[%s167 + $0xfa8] sm:$0xff]
        %v707 = vld [vmem:[%s167 + $0xfb0] sm:$0xff]
        %v708 = vld [vmem:[%s167 + $0xfb8] sm:$0xff]
        %v709 = vld [vmem:[%s167 + $0xfc0] sm:$0xff]
        %v710 = vld [vmem:[%s167 + $0xfc8] sm:$0xff]
        %v711 = vld [vmem:[%s167 + $0xfd0] sm:$0xff]
        %v712 = vld [vmem:[%s167 + $0xfd8] sm:$0xff]
        %v713 = vld [vmem:[%s167 + $0xfe0] sm:$0xff]
        %v714 = vld [vmem:[%s167 + $0xfe8] sm:$0xff]
        %v715 = vld [vmem:[%s167 + $0xff0] sm:$0xff]
        %v716 = vld [vmem:[%s167 + $0xff8] sm:$0xff]
        %v717 = vld [vmem:[%s176] sm:$0x1]
        %v718 = vld [vmem:[%s176 + $0x1] sm:$0x1]
        %v719 = vld [vmem:[%s176 + $0x2] sm:$0x1]
        %v720 = vld [vmem:[%s176 + $0x3] sm:$0x1]
        %v721 = vld [vmem:[%s176 + $0x4] sm:$0x1]
        %v722 = vld [vmem:[%s176 + $0x5] sm:$0x1]
        %v723 = vld [vmem:[%s176 + $0x6] sm:$0x1]
        %v724 = vld [vmem:[%s176 + $0x7] sm:$0x1]
        %v725 = vld [vmem:[%s176 + $0x8] sm:$0x1]
        %v726 = vld [vmem:[%s176 + $0x9] sm:$0x1]
        %v727 = vld [vmem:[%s176 + $0xa] sm:$0x1]
        %v728 = vld [vmem:[%s176 + $0xb] sm:$0x1]
        %v729 = vld [vmem:[%s176 + $0xc] sm:$0x1]
        %v730 = vld [vmem:[%s176 + $0xd] sm:$0x1]
        %v731 = vld [vmem:[%s176 + $0xe] sm:$0x1]
        %v732 = vld [vmem:[%s176 + $0xf] sm:$0x1]
        %v733 = vld [vmem:[%s176 + $0x10] sm:$0x1]
        %v734 = vld [vmem:[%s176 + $0x11] sm:$0x1]
        %v735 = vld [vmem:[%s176 + $0x12] sm:$0x1]
        %v736 = vld [vmem:[%s176 + $0x13] sm:$0x1]
        %v737 = vld [vmem:[%s176 + $0x14] sm:$0x1]
        %v738 = vld [vmem:[%s176 + $0x15] sm:$0x1]
        %v739 = vld [vmem:[%s176 + $0x16] sm:$0x1]
        %v740 = vld [vmem:[%s176 + $0x17] sm:$0x1]
        %v741 = vld [vmem:[%s176 + $0x18] sm:$0x1]
        %v742 = vld [vmem:[%s176 + $0x19] sm:$0x1]
        %v743 = vld [vmem:[%s176 + $0x1a] sm:$0x1]
        %v744 = vld [vmem:[%s176 + $0x1b] sm:$0x1]
        %v745 = vld [vmem:[%s176 + $0x1c] sm:$0x1]
        %v746 = vld [vmem:[%s176 + $0x1d] sm:$0x1]
        %v747 = vld [vmem:[%s176 + $0x1e] sm:$0x1]
        %v748 = vld [vmem:[%s176 + $0x1f] sm:$0x1]
        %v749 = vld [vmem:[%s176 + $0x20] sm:$0x1]
        %v750 = vld [vmem:[%s176 + $0x21] sm:$0x1]
        %v751 = vld [vmem:[%s176 + $0x22] sm:$0x1]
        %v752 = vld [vmem:[%s176 + $0x23] sm:$0x1]
        %v753 = vld [vmem:[%s176 + $0x24] sm:$0x1]
        %v754 = vld [vmem:[%s176 + $0x25] sm:$0x1]
        %v755 = vld [vmem:[%s176 + $0x26] sm:$0x1]
        %v756 = vld [vmem:[%s176 + $0x27] sm:$0x1]
        %v757 = vld [vmem:[%s176 + $0x28] sm:$0x1]
        %v758 = vld [vmem:[%s176 + $0x29] sm:$0x1]
        %v759 = vld [vmem:[%s176 + $0x2a] sm:$0x1]
        %v760 = vld [vmem:[%s176 + $0x2b] sm:$0x1]
        %v761 = vld [vmem:[%s176 + $0x2c] sm:$0x1]
        %v762 = vld [vmem:[%s176 + $0x2d] sm:$0x1]
        %v763 = vld [vmem:[%s176 + $0x2e] sm:$0x1]
        %v764 = vld [vmem:[%s176 + $0x2f] sm:$0x1]
        %v765 = vld [vmem:[%s176 + $0x30] sm:$0x1]
        %v766 = vld [vmem:[%s176 + $0x31] sm:$0x1]
        %v767 = vld [vmem:[%s176 + $0x32] sm:$0x1]
        %v768 = vld [vmem:[%s176 + $0x33] sm:$0x1]
        %v769 = vld [vmem:[%s176 + $0x34] sm:$0x1]
        %v770 = vld [vmem:[%s176 + $0x35] sm:$0x1]
        %v771 = vld [vmem:[%s176 + $0x36] sm:$0x1]
        %v772 = vld [vmem:[%s176 + $0x37] sm:$0x1]
        %v773 = vld [vmem:[%s176 + $0x38] sm:$0x1]
        %v774 = vld [vmem:[%s176 + $0x39] sm:$0x1]
        %v775 = vld [vmem:[%s176 + $0x3a] sm:$0x1]
        %v776 = vld [vmem:[%s176 + $0x3b] sm:$0x1]
        %v777 = vld [vmem:[%s176 + $0x3c] sm:$0x1]
        %v778 = vld [vmem:[%s176 + $0x3d] sm:$0x1]
        %v779 = vld [vmem:[%s176 + $0x3e] sm:$0x1]
        %v780 = vld [vmem:[%s176 + $0x3f] sm:$0x1]
        %v781 = vld [vmem:[%s176 + $0x40] sm:$0x1]
        %v782 = vld [vmem:[%s176 + $0x41] sm:$0x1]
        %v783 = vld [vmem:[%s176 + $0x42] sm:$0x1]
        %v784 = vld [vmem:[%s176 + $0x43] sm:$0x1]
        %v785 = vld [vmem:[%s176 + $0x44] sm:$0x1]
        %v786 = vld [vmem:[%s176 + $0x45] sm:$0x1]
        %v787 = vld [vmem:[%s176 + $0x46] sm:$0x1]
        %v788 = vld [vmem:[%s176 + $0x47] sm:$0x1]
        %v789 = vld [vmem:[%s176 + $0x48] sm:$0x1]
        %v790 = vld [vmem:[%s176 + $0x49] sm:$0x1]
        %v791 = vld [vmem:[%s176 + $0x4a] sm:$0x1]
        %v792 = vld [vmem:[%s176 + $0x4b] sm:$0x1]
        %v793 = vld [vmem:[%s176 + $0x4c] sm:$0x1]
        %v794 = vld [vmem:[%s176 + $0x4d] sm:$0x1]
        %v795 = vld [vmem:[%s176 + $0x4e] sm:$0x1]
        %v796 = vld [vmem:[%s176 + $0x4f] sm:$0x1]
        %v797 = vld [vmem:[%s176 + $0x50] sm:$0x1]
        %v798 = vld [vmem:[%s176 + $0x51] sm:$0x1]
        %v799 = vld [vmem:[%s176 + $0x52] sm:$0x1]
        %v800 = vld [vmem:[%s176 + $0x53] sm:$0x1]
        %v801 = vld [vmem:[%s176 + $0x54] sm:$0x1]
        %v802 = vld [vmem:[%s176 + $0x55] sm:$0x1]
        %v803 = vld [vmem:[%s176 + $0x56] sm:$0x1]
        %v804 = vld [vmem:[%s176 + $0x57] sm:$0x1]
        %v805 = vld [vmem:[%s176 + $0x58] sm:$0x1]
        %v806 = vld [vmem:[%s176 + $0x59] sm:$0x1]
        %v807 = vld [vmem:[%s176 + $0x5a] sm:$0x1]
        %v808 = vld [vmem:[%s176 + $0x5b] sm:$0x1]
        %v809 = vld [vmem:[%s176 + $0x5c] sm:$0x1]
        %v810 = vld [vmem:[%s176 + $0x5d] sm:$0x1]
        %v811 = vld [vmem:[%s176 + $0x5e] sm:$0x1]
        %v812 = vld [vmem:[%s176 + $0x5f] sm:$0x1]
        %v813 = vld [vmem:[%s176 + $0x60] sm:$0x1]
        %v814 = vld [vmem:[%s176 + $0x61] sm:$0x1]
        %v815 = vld [vmem:[%s176 + $0x62] sm:$0x1]
        %v816 = vld [vmem:[%s176 + $0x63] sm:$0x1]
        %v817 = vld [vmem:[%s176 + $0x64] sm:$0x1]
        %v818 = vld [vmem:[%s176 + $0x65] sm:$0x1]
        %v819 = vld [vmem:[%s176 + $0x66] sm:$0x1]
        %v820 = vld [vmem:[%s176 + $0x67] sm:$0x1]
        %v821 = vld [vmem:[%s176 + $0x68] sm:$0x1]
        %v822 = vld [vmem:[%s176 + $0x69] sm:$0x1]
        %v823 = vld [vmem:[%s176 + $0x6a] sm:$0x1]
        %v824 = vld [vmem:[%s176 + $0x6b] sm:$0x1]
        %v825 = vld [vmem:[%s176 + $0x6c] sm:$0x1]
        %v826 = vld [vmem:[%s176 + $0x6d] sm:$0x1]
        %v827 = vld [vmem:[%s176 + $0x6e] sm:$0x1]
        %v828 = vld [vmem:[%s176 + $0x6f] sm:$0x1]
        %v829 = vld [vmem:[%s176 + $0x70] sm:$0x1]
        %v830 = vld [vmem:[%s176 + $0x71] sm:$0x1]
        %v831 = vld [vmem:[%s176 + $0x72] sm:$0x1]
        %v832 = vld [vmem:[%s176 + $0x73] sm:$0x1]
        %v833 = vld [vmem:[%s176 + $0x74] sm:$0x1]
        %v834 = vld [vmem:[%s176 + $0x75] sm:$0x1]
        %v835 = vld [vmem:[%s176 + $0x76] sm:$0x1]
        %v836 = vld [vmem:[%s176 + $0x77] sm:$0x1]
        %v837 = vld [vmem:[%s176 + $0x78] sm:$0x1]
        %v838 = vld [vmem:[%s176 + $0x79] sm:$0x1]
        %v839 = vld [vmem:[%s176 + $0x7a] sm:$0x1]
        %v840 = vld [vmem:[%s176 + $0x7b] sm:$0x1]
        %v841 = vld [vmem:[%s176 + $0x7c] sm:$0x1]
        %v842 = vld [vmem:[%s176 + $0x7d] sm:$0x1]
        %v843 = vld [vmem:[%s176 + $0x7e] sm:$0x1]
        %v844 = vld [vmem:[%s176 + $0x7f] sm:$0x1]
        %v845 = vld [vmem:[%s176 + $0x80] sm:$0x1]
        %v846 = vld [vmem:[%s176 + $0x81] sm:$0x1]
        %v847 = vld [vmem:[%s176 + $0x82] sm:$0x1]
        %v848 = vld [vmem:[%s176 + $0x83] sm:$0x1]
        %v849 = vld [vmem:[%s176 + $0x84] sm:$0x1]
        %v850 = vld [vmem:[%s176 + $0x85] sm:$0x1]
        %v851 = vld [vmem:[%s176 + $0x86] sm:$0x1]
        %v852 = vld [vmem:[%s176 + $0x87] sm:$0x1]
        %v853 = vld [vmem:[%s176 + $0x88] sm:$0x1]
        %v854 = vld [vmem:[%s176 + $0x89] sm:$0x1]
        %v855 = vld [vmem:[%s176 + $0x8a] sm:$0x1]
        %v856 = vld [vmem:[%s176 + $0x8b] sm:$0x1]
        %v857 = vld [vmem:[%s176 + $0x8c] sm:$0x1]
        %v858 = vld [vmem:[%s176 + $0x8d] sm:$0x1]
        %v859 = vld [vmem:[%s176 + $0x8e] sm:$0x1]
        %v860 = vld [vmem:[%s176 + $0x8f] sm:$0x1]
        %v861 = vld [vmem:[%s176 + $0x90] sm:$0x1]
        %v862 = vld [vmem:[%s176 + $0x91] sm:$0x1]
        %v863 = vld [vmem:[%s176 + $0x92] sm:$0x1]
        %v864 = vld [vmem:[%s176 + $0x93] sm:$0x1]
        %v865 = vld [vmem:[%s176 + $0x94] sm:$0x1]
        %v866 = vld [vmem:[%s176 + $0x95] sm:$0x1]
        %v867 = vld [vmem:[%s176 + $0x96] sm:$0x1]
        %v868 = vld [vmem:[%s176 + $0x97] sm:$0x1]
        %v869 = vld [vmem:[%s176 + $0x98] sm:$0x1]
        %v870 = vld [vmem:[%s176 + $0x99] sm:$0x1]
        %v871 = vld [vmem:[%s176 + $0x9a] sm:$0x1]
        %v872 = vld [vmem:[%s176 + $0x9b] sm:$0x1]
        %v873 = vld [vmem:[%s176 + $0x9c] sm:$0x1]
        %v874 = vld [vmem:[%s176 + $0x9d] sm:$0x1]
        %v875 = vld [vmem:[%s176 + $0x9e] sm:$0x1]
        %v876 = vld [vmem:[%s176 + $0x9f] sm:$0x1]
        %v877 = vld [vmem:[%s176 + $0xa0] sm:$0x1]
        %v878 = vld [vmem:[%s176 + $0xa1] sm:$0x1]
        %v879 = vld [vmem:[%s176 + $0xa2] sm:$0x1]
        %v880 = vld [vmem:[%s176 + $0xa3] sm:$0x1]
        %v881 = vld [vmem:[%s176 + $0xa4] sm:$0x1]
        %v882 = vld [vmem:[%s176 + $0xa5] sm:$0x1]
        %v883 = vld [vmem:[%s176 + $0xa6] sm:$0x1]
        %v884 = vld [vmem:[%s176 + $0xa7] sm:$0x1]
        %v885 = vld [vmem:[%s176 + $0xa8] sm:$0x1]
        %v886 = vld [vmem:[%s176 + $0xa9] sm:$0x1]
        %v887 = vld [vmem:[%s176 + $0xaa] sm:$0x1]
        %v888 = vld [vmem:[%s176 + $0xab] sm:$0x1]
        %v889 = vld [vmem:[%s176 + $0xac] sm:$0x1]
        %v890 = vld [vmem:[%s176 + $0xad] sm:$0x1]
        %v891 = vld [vmem:[%s176 + $0xae] sm:$0x1]
        %v892 = vld [vmem:[%s176 + $0xaf] sm:$0x1]
        %v893 = vld [vmem:[%s176 + $0xb0] sm:$0x1]
        %v894 = vld [vmem:[%s176 + $0xb1] sm:$0x1]
        %v895 = vld [vmem:[%s176 + $0xb2] sm:$0x1]
        %v896 = vld [vmem:[%s176 + $0xb3] sm:$0x1]
        %v897 = vld [vmem:[%s176 + $0xb4] sm:$0x1]
        %v898 = vld [vmem:[%s176 + $0xb5] sm:$0x1]
        %v899 = vld [vmem:[%s176 + $0xb6] sm:$0x1]
        %v900 = vld [vmem:[%s176 + $0xb7] sm:$0x1]
        %v901 = vld [vmem:[%s176 + $0xb8] sm:$0x1]
        %v902 = vld [vmem:[%s176 + $0xb9] sm:$0x1]
        %v903 = vld [vmem:[%s176 + $0xba] sm:$0x1]
        %v904 = vld [vmem:[%s176 + $0xbb] sm:$0x1]
        %v905 = vld [vmem:[%s176 + $0xbc] sm:$0x1]
        %v906 = vld [vmem:[%s176 + $0xbd] sm:$0x1]
        %v907 = vld [vmem:[%s176 + $0xbe] sm:$0x1]
        %v908 = vld [vmem:[%s176 + $0xbf] sm:$0x1]
        %v909 = vld [vmem:[%s176 + $0xc0] sm:$0x1]
        %v910 = vld [vmem:[%s176 + $0xc1] sm:$0x1]
        %v911 = vld [vmem:[%s176 + $0xc2] sm:$0x1]
        %v912 = vld [vmem:[%s176 + $0xc3] sm:$0x1]
        %v913 = vld [vmem:[%s176 + $0xc4] sm:$0x1]
        %v914 = vld [vmem:[%s176 + $0xc5] sm:$0x1]
        %v915 = vld [vmem:[%s176 + $0xc6] sm:$0x1]
        %v916 = vld [vmem:[%s176 + $0xc7] sm:$0x1]
        %v917 = vld [vmem:[%s176 + $0xc8] sm:$0x1]
        %v918 = vld [vmem:[%s176 + $0xc9] sm:$0x1]
        %v919 = vld [vmem:[%s176 + $0xca] sm:$0x1]
        %v920 = vld [vmem:[%s176 + $0xcb] sm:$0x1]
        %v921 = vld [vmem:[%s176 + $0xcc] sm:$0x1]
        %v922 = vld [vmem:[%s176 + $0xcd] sm:$0x1]
        %v923 = vld [vmem:[%s176 + $0xce] sm:$0x1]
        %v924 = vld [vmem:[%s176 + $0xcf] sm:$0x1]
        %v925 = vld [vmem:[%s176 + $0xd0] sm:$0x1]
        %v926 = vld [vmem:[%s176 + $0xd1] sm:$0x1]
        %v927 = vld [vmem:[%s176 + $0xd2] sm:$0x1]
        %v928 = vld [vmem:[%s176 + $0xd3] sm:$0x1]
        %v929 = vld [vmem:[%s176 + $0xd4] sm:$0x1]
        %v930 = vld [vmem:[%s176 + $0xd5] sm:$0x1]
        %v931 = vld [vmem:[%s176 + $0xd6] sm:$0x1]
        %v932 = vld [vmem:[%s176 + $0xd7] sm:$0x1]
        %v933 = vld [vmem:[%s176 + $0xd8] sm:$0x1]
        %v934 = vld [vmem:[%s176 + $0xd9] sm:$0x1]
        %v935 = vld [vmem:[%s176 + $0xda] sm:$0x1]
        %v936 = vld [vmem:[%s176 + $0xdb] sm:$0x1]
        %v937 = vld [vmem:[%s176 + $0xdc] sm:$0x1]
        %v938 = vld [vmem:[%s176 + $0xdd] sm:$0x1]
        %v939 = vld [vmem:[%s176 + $0xde] sm:$0x1]
        %v940 = vld [vmem:[%s176 + $0xdf] sm:$0x1]
        %v941 = vld [vmem:[%s176 + $0xe0] sm:$0x1]
        %v942 = vld [vmem:[%s176 + $0xe1] sm:$0x1]
        %v943 = vld [vmem:[%s176 + $0xe2] sm:$0x1]
        %v944 = vld [vmem:[%s176 + $0xe3] sm:$0x1]
        %v945 = vld [vmem:[%s176 + $0xe4] sm:$0x1]
        %v946 = vld [vmem:[%s176 + $0xe5] sm:$0x1]
        %v947 = vld [vmem:[%s176 + $0xe6] sm:$0x1]
        %v948 = vld [vmem:[%s176 + $0xe7] sm:$0x1]
        %v949 = vld [vmem:[%s176 + $0xe8] sm:$0x1]
        %v950 = vld [vmem:[%s176 + $0xe9] sm:$0x1]
        %v951 = vld [vmem:[%s176 + $0xea] sm:$0x1]
        %v952 = vld [vmem:[%s176 + $0xeb] sm:$0x1]
        %v953 = vld [vmem:[%s176 + $0xec] sm:$0x1]
        %v954 = vld [vmem:[%s176 + $0xed] sm:$0x1]
        %v955 = vld [vmem:[%s176 + $0xee] sm:$0x1]
        %v956 = vld [vmem:[%s176 + $0xef] sm:$0x1]
        %v957 = vld [vmem:[%s176 + $0xf0] sm:$0x1]
        %v958 = vld [vmem:[%s176 + $0xf1] sm:$0x1]
        %v959 = vld [vmem:[%s176 + $0xf2] sm:$0x1]
        %v960 = vld [vmem:[%s176 + $0xf3] sm:$0x1]
        %v961 = vld [vmem:[%s176 + $0xf4] sm:$0x1]
        %v962 = vld [vmem:[%s176 + $0xf5] sm:$0x1]
        %v963 = vld [vmem:[%s176 + $0xf6] sm:$0x1]
        %v964 = vld [vmem:[%s176 + $0xf7] sm:$0x1]
        %v965 = vld [vmem:[%s176 + $0xf8] sm:$0x1]
        %v966 = vld [vmem:[%s176 + $0xf9] sm:$0x1]
        %v967 = vld [vmem:[%s176 + $0xfa] sm:$0x1]
        %v968 = vld [vmem:[%s176 + $0xfb] sm:$0x1]
        %v969 = vld [vmem:[%s176 + $0xfc] sm:$0x1]
        %v970 = vld [vmem:[%s176 + $0xfd] sm:$0x1]
        %v971 = vld [vmem:[%s176 + $0xfe] sm:$0x1]
        %v972 = vld [vmem:[%s176 + $0xff] sm:$0x1]
        %v973 = vld [vmem:[%s176 + $0x100] sm:$0x1]
        %v974 = vld [vmem:[%s176 + $0x101] sm:$0x1]
        %v975 = vld [vmem:[%s176 + $0x102] sm:$0x1]
        %v976 = vld [vmem:[%s176 + $0x103] sm:$0x1]
        %v977 = vld [vmem:[%s176 + $0x104] sm:$0x1]
        %v978 = vld [vmem:[%s176 + $0x105] sm:$0x1]
        %v979 = vld [vmem:[%s176 + $0x106] sm:$0x1]
        %v980 = vld [vmem:[%s176 + $0x107] sm:$0x1]
        %v981 = vld [vmem:[%s176 + $0x108] sm:$0x1]
        %v982 = vld [vmem:[%s176 + $0x109] sm:$0x1]
        %v983 = vld [vmem:[%s176 + $0x10a] sm:$0x1]
        %v984 = vld [vmem:[%s176 + $0x10b] sm:$0x1]
        %v985 = vld [vmem:[%s176 + $0x10c] sm:$0x1]
        %v986 = vld [vmem:[%s176 + $0x10d] sm:$0x1]
        %v987 = vld [vmem:[%s176 + $0x10e] sm:$0x1]
        %v988 = vld [vmem:[%s176 + $0x10f] sm:$0x1]
        %v989 = vld [vmem:[%s176 + $0x110] sm:$0x1]
        %v990 = vld [vmem:[%s176 + $0x111] sm:$0x1]
        %v991 = vld [vmem:[%s176 + $0x112] sm:$0x1]
        %v992 = vld [vmem:[%s176 + $0x113] sm:$0x1]
        %v993 = vld [vmem:[%s176 + $0x114] sm:$0x1]
        %v994 = vld [vmem:[%s176 + $0x115] sm:$0x1]
        %v995 = vld [vmem:[%s176 + $0x116] sm:$0x1]
        %v996 = vld [vmem:[%s176 + $0x117] sm:$0x1]
        %v997 = vld [vmem:[%s176 + $0x118] sm:$0x1]
        %v998 = vld [vmem:[%s176 + $0x119] sm:$0x1]
        %v999 = vld [vmem:[%s176 + $0x11a] sm:$0x1]
        %v1000 = vld [vmem:[%s176 + $0x11b] sm:$0x1]
        %v1001 = vld [vmem:[%s176 + $0x11c] sm:$0x1]
        %v1002 = vld [vmem:[%s176 + $0x11d] sm:$0x1]
        %v1003 = vld [vmem:[%s176 + $0x11e] sm:$0x1]
        %v1004 = vld [vmem:[%s176 + $0x11f] sm:$0x1]
        %v1005 = vld [vmem:[%s176 + $0x120] sm:$0x1]
        %v1006 = vld [vmem:[%s176 + $0x121] sm:$0x1]
        %v1007 = vld [vmem:[%s176 + $0x122] sm:$0x1]
        %v1008 = vld [vmem:[%s176 + $0x123] sm:$0x1]
        %v1009 = vld [vmem:[%s176 + $0x124] sm:$0x1]
        %v1010 = vld [vmem:[%s176 + $0x125] sm:$0x1]
        %v1011 = vld [vmem:[%s176 + $0x126] sm:$0x1]
        %v1012 = vld [vmem:[%s176 + $0x127] sm:$0x1]
        %v1013 = vld [vmem:[%s176 + $0x128] sm:$0x1]
        %v1014 = vld [vmem:[%s176 + $0x129] sm:$0x1]
        %v1015 = vld [vmem:[%s176 + $0x12a] sm:$0x1]
        %v1016 = vld [vmem:[%s176 + $0x12b] sm:$0x1]
        %v1017 = vld [vmem:[%s176 + $0x12c] sm:$0x1]
        %v1018 = vld [vmem:[%s176 + $0x12d] sm:$0x1]
        %v1019 = vld [vmem:[%s176 + $0x12e] sm:$0x1]
        %v1020 = vld [vmem:[%s176 + $0x12f] sm:$0x1]
        %v1021 = vld [vmem:[%s176 + $0x130] sm:$0x1]
        %v1022 = vld [vmem:[%s176 + $0x131] sm:$0x1]
        %v1023 = vld [vmem:[%s176 + $0x132] sm:$0x1]
        %v1024 = vld [vmem:[%s176 + $0x133] sm:$0x1]
        %v1025 = vld [vmem:[%s176 + $0x134] sm:$0x1]
        %v1026 = vld [vmem:[%s176 + $0x135] sm:$0x1]
        %v1027 = vld [vmem:[%s176 + $0x136] sm:$0x1]
        %v1028 = vld [vmem:[%s176 + $0x137] sm:$0x1]
        %v1029 = vld [vmem:[%s176 + $0x138] sm:$0x1]
        %v1030 = vld [vmem:[%s176 + $0x139] sm:$0x1]
        %v1031 = vld [vmem:[%s176 + $0x13a] sm:$0x1]
        %v1032 = vld [vmem:[%s176 + $0x13b] sm:$0x1]
        %v1033 = vld [vmem:[%s176 + $0x13c] sm:$0x1]
        %v1034 = vld [vmem:[%s176 + $0x13d] sm:$0x1]
        %v1035 = vld [vmem:[%s176 + $0x13e] sm:$0x1]
        %v1036 = vld [vmem:[%s176 + $0x13f] sm:$0x1]
        %v1037 = vld [vmem:[%s176 + $0x140] sm:$0x1]
        %v1038 = vld [vmem:[%s176 + $0x141] sm:$0x1]
        %v1039 = vld [vmem:[%s176 + $0x142] sm:$0x1]
        %v1040 = vld [vmem:[%s176 + $0x143] sm:$0x1]
        %v1041 = vld [vmem:[%s176 + $0x144] sm:$0x1]
        %v1042 = vld [vmem:[%s176 + $0x145] sm:$0x1]
        %v1043 = vld [vmem:[%s176 + $0x146] sm:$0x1]
        %v1044 = vld [vmem:[%s176 + $0x147] sm:$0x1]
        %v1045 = vld [vmem:[%s176 + $0x148] sm:$0x1]
        %v1046 = vld [vmem:[%s176 + $0x149] sm:$0x1]
        %v1047 = vld [vmem:[%s176 + $0x14a] sm:$0x1]
        %v1048 = vld [vmem:[%s176 + $0x14b] sm:$0x1]
        %v1049 = vld [vmem:[%s176 + $0x14c] sm:$0x1]
        %v1050 = vld [vmem:[%s176 + $0x14d] sm:$0x1]
        %v1051 = vld [vmem:[%s176 + $0x14e] sm:$0x1]
        %v1052 = vld [vmem:[%s176 + $0x14f] sm:$0x1]
        %v1053 = vld [vmem:[%s176 + $0x150] sm:$0x1]
        %v1054 = vld [vmem:[%s176 + $0x151] sm:$0x1]
        %v1055 = vld [vmem:[%s176 + $0x152] sm:$0x1]
        %v1056 = vld [vmem:[%s176 + $0x153] sm:$0x1]
        %v1057 = vld [vmem:[%s176 + $0x154] sm:$0x1]
        %v1058 = vld [vmem:[%s176 + $0x155] sm:$0x1]
        %v1059 = vld [vmem:[%s176 + $0x156] sm:$0x1]
        %v1060 = vld [vmem:[%s176 + $0x157] sm:$0x1]
        %v1061 = vld [vmem:[%s176 + $0x158] sm:$0x1]
        %v1062 = vld [vmem:[%s176 + $0x159] sm:$0x1]
        %v1063 = vld [vmem:[%s176 + $0x15a] sm:$0x1]
        %v1064 = vld [vmem:[%s176 + $0x15b] sm:$0x1]
        %v1065 = vld [vmem:[%s176 + $0x15c] sm:$0x1]
        %v1066 = vld [vmem:[%s176 + $0x15d] sm:$0x1]
        %v1067 = vld [vmem:[%s176 + $0x15e] sm:$0x1]
        %v1068 = vld [vmem:[%s176 + $0x15f] sm:$0x1]
        %v1069 = vld [vmem:[%s176 + $0x160] sm:$0x1]
        %v1070 = vld [vmem:[%s176 + $0x161] sm:$0x1]
        %v1071 = vld [vmem:[%s176 + $0x162] sm:$0x1]
        %v1072 = vld [vmem:[%s176 + $0x163] sm:$0x1]
        %v1073 = vld [vmem:[%s176 + $0x164] sm:$0x1]
        %v1074 = vld [vmem:[%s176 + $0x165] sm:$0x1]
        %v1075 = vld [vmem:[%s176 + $0x166] sm:$0x1]
        %v1076 = vld [vmem:[%s176 + $0x167] sm:$0x1]
        %v1077 = vld [vmem:[%s176 + $0x168] sm:$0x1]
        %v1078 = vld [vmem:[%s176 + $0x169] sm:$0x1]
        %v1079 = vld [vmem:[%s176 + $0x16a] sm:$0x1]
        %v1080 = vld [vmem:[%s176 + $0x16b] sm:$0x1]
        %v1081 = vld [vmem:[%s176 + $0x16c] sm:$0x1]
        %v1082 = vld [vmem:[%s176 + $0x16d] sm:$0x1]
        %v1083 = vld [vmem:[%s176 + $0x16e] sm:$0x1]
        %v1084 = vld [vmem:[%s176 + $0x16f] sm:$0x1]
        %v1085 = vld [vmem:[%s176 + $0x170] sm:$0x1]
        %v1086 = vld [vmem:[%s176 + $0x171] sm:$0x1]
        %v1087 = vld [vmem:[%s176 + $0x172] sm:$0x1]
        %v1088 = vld [vmem:[%s176 + $0x173] sm:$0x1]
        %v1089 = vld [vmem:[%s176 + $0x174] sm:$0x1]
        %v1090 = vld [vmem:[%s176 + $0x175] sm:$0x1]
        %v1091 = vld [vmem:[%s176 + $0x176] sm:$0x1]
        %v1092 = vld [vmem:[%s176 + $0x177] sm:$0x1]
        %v1093 = vld [vmem:[%s176 + $0x178] sm:$0x1]
        %v1094 = vld [vmem:[%s176 + $0x179] sm:$0x1]
        %v1095 = vld [vmem:[%s176 + $0x17a] sm:$0x1]
        %v1096 = vld [vmem:[%s176 + $0x17b] sm:$0x1]
        %v1097 = vld [vmem:[%s176 + $0x17c] sm:$0x1]
        %v1098 = vld [vmem:[%s176 + $0x17d] sm:$0x1]
        %v1099 = vld [vmem:[%s176 + $0x17e] sm:$0x1]
        %v1100 = vld [vmem:[%s176 + $0x17f] sm:$0x1]
        %v1101 = vld [vmem:[%s176 + $0x180] sm:$0x1]
        %v1102 = vld [vmem:[%s176 + $0x181] sm:$0x1]
        %v1103 = vld [vmem:[%s176 + $0x182] sm:$0x1]
        %v1104 = vld [vmem:[%s176 + $0x183] sm:$0x1]
        %v1105 = vld [vmem:[%s176 + $0x184] sm:$0x1]
        %v1106 = vld [vmem:[%s176 + $0x185] sm:$0x1]
        %v1107 = vld [vmem:[%s176 + $0x186] sm:$0x1]
        %v1108 = vld [vmem:[%s176 + $0x187] sm:$0x1]
        %v1109 = vld [vmem:[%s176 + $0x188] sm:$0x1]
        %v1110 = vld [vmem:[%s176 + $0x189] sm:$0x1]
        %v1111 = vld [vmem:[%s176 + $0x18a] sm:$0x1]
        %v1112 = vld [vmem:[%s176 + $0x18b] sm:$0x1]
        %v1113 = vld [vmem:[%s176 + $0x18c] sm:$0x1]
        %v1114 = vld [vmem:[%s176 + $0x18d] sm:$0x1]
        %v1115 = vld [vmem:[%s176 + $0x18e] sm:$0x1]
        %v1116 = vld [vmem:[%s176 + $0x18f] sm:$0x1]
        %v1117 = vld [vmem:[%s176 + $0x190] sm:$0x1]
        %v1118 = vld [vmem:[%s176 + $0x191] sm:$0x1]
        %v1119 = vld [vmem:[%s176 + $0x192] sm:$0x1]
        %v1120 = vld [vmem:[%s176 + $0x193] sm:$0x1]
        %v1121 = vld [vmem:[%s176 + $0x194] sm:$0x1]
        %v1122 = vld [vmem:[%s176 + $0x195] sm:$0x1]
        %v1123 = vld [vmem:[%s176 + $0x196] sm:$0x1]
        %v1124 = vld [vmem:[%s176 + $0x197] sm:$0x1]
        %v1125 = vld [vmem:[%s176 + $0x198] sm:$0x1]
        %v1126 = vld [vmem:[%s176 + $0x199] sm:$0x1]
        %v1127 = vld [vmem:[%s176 + $0x19a] sm:$0x1]
        %v1128 = vld [vmem:[%s176 + $0x19b] sm:$0x1]
        %v1129 = vld [vmem:[%s176 + $0x19c] sm:$0x1]
        %v1130 = vld [vmem:[%s176 + $0x19d] sm:$0x1]
        %v1131 = vld [vmem:[%s176 + $0x19e] sm:$0x1]
        %v1132 = vld [vmem:[%s176 + $0x19f] sm:$0x1]
        %v1133 = vld [vmem:[%s176 + $0x1a0] sm:$0x1]
        %v1134 = vld [vmem:[%s176 + $0x1a1] sm:$0x1]
        %v1135 = vld [vmem:[%s176 + $0x1a2] sm:$0x1]
        %v1136 = vld [vmem:[%s176 + $0x1a3] sm:$0x1]
        %v1137 = vld [vmem:[%s176 + $0x1a4] sm:$0x1]
        %v1138 = vld [vmem:[%s176 + $0x1a5] sm:$0x1]
        %v1139 = vld [vmem:[%s176 + $0x1a6] sm:$0x1]
        %v1140 = vld [vmem:[%s176 + $0x1a7] sm:$0x1]
        %v1141 = vld [vmem:[%s176 + $0x1a8] sm:$0x1]
        %v1142 = vld [vmem:[%s176 + $0x1a9] sm:$0x1]
        %v1143 = vld [vmem:[%s176 + $0x1aa] sm:$0x1]
        %v1144 = vld [vmem:[%s176 + $0x1ab] sm:$0x1]
        %v1145 = vld [vmem:[%s176 + $0x1ac] sm:$0x1]
        %v1146 = vld [vmem:[%s176 + $0x1ad] sm:$0x1]
        %v1147 = vld [vmem:[%s176 + $0x1ae] sm:$0x1]
        %v1148 = vld [vmem:[%s176 + $0x1af] sm:$0x1]
        %v1149 = vld [vmem:[%s176 + $0x1b0] sm:$0x1]
        %v1150 = vld [vmem:[%s176 + $0x1b1] sm:$0x1]
        %v1151 = vld [vmem:[%s176 + $0x1b2] sm:$0x1]
        %v1152 = vld [vmem:[%s176 + $0x1b3] sm:$0x1]
        %v1153 = vld [vmem:[%s176 + $0x1b4] sm:$0x1]
        %v1154 = vld [vmem:[%s176 + $0x1b5] sm:$0x1]
        %v1155 = vld [vmem:[%s176 + $0x1b6] sm:$0x1]
        %v1156 = vld [vmem:[%s176 + $0x1b7] sm:$0x1]
        %v1157 = vld [vmem:[%s176 + $0x1b8] sm:$0x1]
        %v1158 = vld [vmem:[%s176 + $0x1b9] sm:$0x1]
        %v1159 = vld [vmem:[%s176 + $0x1ba] sm:$0x1]
        %v1160 = vld [vmem:[%s176 + $0x1bb] sm:$0x1]
        %v1161 = vld [vmem:[%s176 + $0x1bc] sm:$0x1]
        %v1162 = vld [vmem:[%s176 + $0x1bd] sm:$0x1]
        %v1163 = vld [vmem:[%s176 + $0x1be] sm:$0x1]
        %v1164 = vld [vmem:[%s176 + $0x1bf] sm:$0x1]
        %v1165 = vld [vmem:[%s176 + $0x1c0] sm:$0x1]
        %v1166 = vld [vmem:[%s176 + $0x1c1] sm:$0x1]
        %v1167 = vld [vmem:[%s176 + $0x1c2] sm:$0x1]
        %v1168 = vld [vmem:[%s176 + $0x1c3] sm:$0x1]
        %v1169 = vld [vmem:[%s176 + $0x1c4] sm:$0x1]
        %v1170 = vld [vmem:[%s176 + $0x1c5] sm:$0x1]
        %v1171 = vld [vmem:[%s176 + $0x1c6] sm:$0x1]
        %v1172 = vld [vmem:[%s176 + $0x1c7] sm:$0x1]
        %v1173 = vld [vmem:[%s176 + $0x1c8] sm:$0x1]
        %v1174 = vld [vmem:[%s176 + $0x1c9] sm:$0x1]
        %v1175 = vld [vmem:[%s176 + $0x1ca] sm:$0x1]
        %v1176 = vld [vmem:[%s176 + $0x1cb] sm:$0x1]
        %v1177 = vld [vmem:[%s176 + $0x1cc] sm:$0x1]
        %v1178 = vld [vmem:[%s176 + $0x1cd] sm:$0x1]
        %v1179 = vld [vmem:[%s176 + $0x1ce] sm:$0x1]
        %v1180 = vld [vmem:[%s176 + $0x1cf] sm:$0x1]
        %v1181 = vld [vmem:[%s176 + $0x1d0] sm:$0x1]
        %v1182 = vld [vmem:[%s176 + $0x1d1] sm:$0x1]
        %v1183 = vld [vmem:[%s176 + $0x1d2] sm:$0x1]
        %v1184 = vld [vmem:[%s176 + $0x1d3] sm:$0x1]
        %v1185 = vld [vmem:[%s176 + $0x1d4] sm:$0x1]
        %v1186 = vld [vmem:[%s176 + $0x1d5] sm:$0x1]
        %v1187 = vld [vmem:[%s176 + $0x1d6] sm:$0x1]
        %v1188 = vld [vmem:[%s176 + $0x1d7] sm:$0x1]
        %v1189 = vld [vmem:[%s176 + $0x1d8] sm:$0x1]
        %v1190 = vld [vmem:[%s176 + $0x1d9] sm:$0x1]
        %v1191 = vld [vmem:[%s176 + $0x1da] sm:$0x1]
        %v1192 = vld [vmem:[%s176 + $0x1db] sm:$0x1]
        %v1193 = vld [vmem:[%s176 + $0x1dc] sm:$0x1]
        %v1194 = vld [vmem:[%s176 + $0x1dd] sm:$0x1]
        %v1195 = vld [vmem:[%s176 + $0x1de] sm:$0x1]
        %v1196 = vld [vmem:[%s176 + $0x1df] sm:$0x1]
        %v1197 = vld [vmem:[%s176 + $0x1e0] sm:$0x1]
        %v1198 = vld [vmem:[%s176 + $0x1e1] sm:$0x1]
        %v1199 = vld [vmem:[%s176 + $0x1e2] sm:$0x1]
        %v1200 = vld [vmem:[%s176 + $0x1e3] sm:$0x1]
        %v1201 = vld [vmem:[%s176 + $0x1e4] sm:$0x1]
        %v1202 = vld [vmem:[%s176 + $0x1e5] sm:$0x1]
        %v1203 = vld [vmem:[%s176 + $0x1e6] sm:$0x1]
        %v1204 = vld [vmem:[%s176 + $0x1e7] sm:$0x1]
        %v1205 = vld [vmem:[%s176 + $0x1e8] sm:$0x1]
        %v1206 = vld [vmem:[%s176 + $0x1e9] sm:$0x1]
        %v1207 = vld [vmem:[%s176 + $0x1ea] sm:$0x1]
        %v1208 = vld [vmem:[%s176 + $0x1eb] sm:$0x1]
        %v1209 = vld [vmem:[%s176 + $0x1ec] sm:$0x1]
        %v1210 = vld [vmem:[%s176 + $0x1ed] sm:$0x1]
        %v1211 = vld [vmem:[%s176 + $0x1ee] sm:$0x1]
        %v1212 = vld [vmem:[%s176 + $0x1ef] sm:$0x1]
        %v1213 = vld [vmem:[%s176 + $0x1f0] sm:$0x1]
        %v1214 = vld [vmem:[%s176 + $0x1f1] sm:$0x1]
        %v1215 = vld [vmem:[%s176 + $0x1f2] sm:$0x1]
        %v1216 = vld [vmem:[%s176 + $0x1f3] sm:$0x1]
        %v1217 = vld [vmem:[%s176 + $0x1f4] sm:$0x1]
        %v1218 = vld [vmem:[%s176 + $0x1f5] sm:$0x1]
        %v1219 = vld [vmem:[%s176 + $0x1f6] sm:$0x1]
        %v1220 = vld [vmem:[%s176 + $0x1f7] sm:$0x1]
        %v1221 = vld [vmem:[%s176 + $0x1f8] sm:$0x1]
        %v1222 = vld [vmem:[%s176 + $0x1f9] sm:$0x1]
        %v1223 = vld [vmem:[%s176 + $0x1fa] sm:$0x1]
        %v1224 = vld [vmem:[%s176 + $0x1fb] sm:$0x1]
        %v1225 = vld [vmem:[%s176 + $0x1fc] sm:$0x1]
        %v1226 = vld [vmem:[%s176 + $0x1fd] sm:$0x1]
        %v1227 = vld [vmem:[%s176 + $0x1fe] sm:$0x1]
        %v1228 = vld [vmem:[%s176 + $0x1ff] sm:$0x1]
        %v1741 = vlaneseq
        %v1742 = vshrl.u32 %v1741, 7
        %v1743 = vsub.s32 0, %v1742
        %v1744 = vrot.slane %v717, %v1743
        %v1745 = vlaneseq
        %v1746 = vshrl.u32 %v1745, 7
        %v1747 = vsub.s32 0, %v1746
        %v1748 = vrot.slane %v718, %v1747
        %v1749 = vlaneseq
        %v1750 = vshrl.u32 %v1749, 7
        %v1751 = vsub.s32 0, %v1750
        %v1752 = vrot.slane %v719, %v1751
        %v1753 = vlaneseq
        %v1754 = vshrl.u32 %v1753, 7
        %v1755 = vsub.s32 0, %v1754
        %v1756 = vrot.slane %v720, %v1755
        %v1757 = vlaneseq
        %v1758 = vshrl.u32 %v1757, 7
        %v1759 = vsub.s32 0, %v1758
        %v1760 = vrot.slane %v721, %v1759
        %v1761 = vlaneseq
        %v1762 = vshrl.u32 %v1761, 7
        %v1763 = vsub.s32 0, %v1762
        %v1764 = vrot.slane %v722, %v1763
        %v1765 = vlaneseq
        %v1766 = vshrl.u32 %v1765, 7
        %v1767 = vsub.s32 0, %v1766
        %v1768 = vrot.slane %v723, %v1767
        %v1769 = vlaneseq
        %v1770 = vshrl.u32 %v1769, 7
        %v1771 = vsub.s32 0, %v1770
        %v1772 = vrot.slane %v724, %v1771
        %v1773 = vlaneseq
        %v1774 = vshrl.u32 %v1773, 7
        %v1775 = vsub.s32 0, %v1774
        %v1776 = vrot.slane %v725, %v1775
        %v1777 = vlaneseq
        %v1778 = vshrl.u32 %v1777, 7
        %v1779 = vsub.s32 0, %v1778
        %v1780 = vrot.slane %v726, %v1779
        %v1781 = vlaneseq
        %v1782 = vshrl.u32 %v1781, 7
        %v1783 = vsub.s32 0, %v1782
        %v1784 = vrot.slane %v727, %v1783
        %v1785 = vlaneseq
        %v1786 = vshrl.u32 %v1785, 7
        %v1787 = vsub.s32 0, %v1786
        %v1788 = vrot.slane %v728, %v1787
        %v1789 = vlaneseq
        %v1790 = vshrl.u32 %v1789, 7
        %v1791 = vsub.s32 0, %v1790
        %v1792 = vrot.slane %v729, %v1791
        %v1793 = vlaneseq
        %v1794 = vshrl.u32 %v1793, 7
        %v1795 = vsub.s32 0, %v1794
        %v1796 = vrot.slane %v730, %v1795
        %v1797 = vlaneseq
        %v1798 = vshrl.u32 %v1797, 7
        %v1799 = vsub.s32 0, %v1798
        %v1800 = vrot.slane %v731, %v1799
        %v1801 = vlaneseq
        %v1802 = vshrl.u32 %v1801, 7
        %v1803 = vsub.s32 0, %v1802
        %v1804 = vrot.slane %v732, %v1803
        %v1805 = vlaneseq
        %v1806 = vshrl.u32 %v1805, 7
        %v1807 = vsub.s32 0, %v1806
        %v1808 = vrot.slane %v733, %v1807
        %v1809 = vlaneseq
        %v1810 = vshrl.u32 %v1809, 7
        %v1811 = vsub.s32 0, %v1810
        %v1812 = vrot.slane %v734, %v1811
        %v1813 = vlaneseq
        %v1814 = vshrl.u32 %v1813, 7
        %v1815 = vsub.s32 0, %v1814
        %v1816 = vrot.slane %v735, %v1815
        %v1817 = vlaneseq
        %v1818 = vshrl.u32 %v1817, 7
        %v1819 = vsub.s32 0, %v1818
        %v1820 = vrot.slane %v736, %v1819
        %v1821 = vlaneseq
        %v1822 = vshrl.u32 %v1821, 7
        %v1823 = vsub.s32 0, %v1822
        %v1824 = vrot.slane %v737, %v1823
        %v1825 = vlaneseq
        %v1826 = vshrl.u32 %v1825, 7
        %v1827 = vsub.s32 0, %v1826
        %v1828 = vrot.slane %v738, %v1827
        %v1829 = vlaneseq
        %v1830 = vshrl.u32 %v1829, 7
        %v1831 = vsub.s32 0, %v1830
        %v1832 = vrot.slane %v739, %v1831
        %v1833 = vlaneseq
        %v1834 = vshrl.u32 %v1833, 7
        %v1835 = vsub.s32 0, %v1834
        %v1836 = vrot.slane %v740, %v1835
        %v1837 = vlaneseq
        %v1838 = vshrl.u32 %v1837, 7
        %v1839 = vsub.s32 0, %v1838
        %v1840 = vrot.slane %v741, %v1839
        %v1841 = vlaneseq
        %v1842 = vshrl.u32 %v1841, 7
        %v1843 = vsub.s32 0, %v1842
        %v1844 = vrot.slane %v742, %v1843
        %v1845 = vlaneseq
        %v1846 = vshrl.u32 %v1845, 7
        %v1847 = vsub.s32 0, %v1846
        %v1848 = vrot.slane %v743, %v1847
        %v1849 = vlaneseq
        %v1850 = vshrl.u32 %v1849, 7
        %v1851 = vsub.s32 0, %v1850
        %v1852 = vrot.slane %v744, %v1851
        %v1853 = vlaneseq
        %v1854 = vshrl.u32 %v1853, 7
        %v1855 = vsub.s32 0, %v1854
        %v1856 = vrot.slane %v745, %v1855
        %v1857 = vlaneseq
        %v1858 = vshrl.u32 %v1857, 7
        %v1859 = vsub.s32 0, %v1858
        %v1860 = vrot.slane %v746, %v1859
        %v1861 = vlaneseq
        %v1862 = vshrl.u32 %v1861, 7
        %v1863 = vsub.s32 0, %v1862
        %v1864 = vrot.slane %v747, %v1863
        %v1865 = vlaneseq
        %v1866 = vshrl.u32 %v1865, 7
        %v1867 = vsub.s32 0, %v1866
        %v1868 = vrot.slane %v748, %v1867
        %v1869 = vlaneseq
        %v1870 = vshrl.u32 %v1869, 7
        %v1871 = vsub.s32 0, %v1870
        %v1872 = vrot.slane %v749, %v1871
        %v1873 = vlaneseq
        %v1874 = vshrl.u32 %v1873, 7
        %v1875 = vsub.s32 0, %v1874
        %v1876 = vrot.slane %v750, %v1875
        %v1877 = vlaneseq
        %v1878 = vshrl.u32 %v1877, 7
        %v1879 = vsub.s32 0, %v1878
        %v1880 = vrot.slane %v751, %v1879
        %v1881 = vlaneseq
        %v1882 = vshrl.u32 %v1881, 7
        %v1883 = vsub.s32 0, %v1882
        %v1884 = vrot.slane %v752, %v1883
        %v1885 = vlaneseq
        %v1886 = vshrl.u32 %v1885, 7
        %v1887 = vsub.s32 0, %v1886
        %v1888 = vrot.slane %v753, %v1887
        %v1889 = vlaneseq
        %v1890 = vshrl.u32 %v1889, 7
        %v1891 = vsub.s32 0, %v1890
        %v1892 = vrot.slane %v754, %v1891
        %v1893 = vlaneseq
        %v1894 = vshrl.u32 %v1893, 7
        %v1895 = vsub.s32 0, %v1894
        %v1896 = vrot.slane %v755, %v1895
        %v1897 = vlaneseq
        %v1898 = vshrl.u32 %v1897, 7
        %v1899 = vsub.s32 0, %v1898
        %v1900 = vrot.slane %v756, %v1899
        %v1901 = vlaneseq
        %v1902 = vshrl.u32 %v1901, 7
        %v1903 = vsub.s32 0, %v1902
        %v1904 = vrot.slane %v757, %v1903
        %v1905 = vlaneseq
        %v1906 = vshrl.u32 %v1905, 7
        %v1907 = vsub.s32 0, %v1906
        %v1908 = vrot.slane %v758, %v1907
        %v1909 = vlaneseq
        %v1910 = vshrl.u32 %v1909, 7
        %v1911 = vsub.s32 0, %v1910
        %v1912 = vrot.slane %v759, %v1911
        %v1913 = vlaneseq
        %v1914 = vshrl.u32 %v1913, 7
        %v1915 = vsub.s32 0, %v1914
        %v1916 = vrot.slane %v760, %v1915
        %v1917 = vlaneseq
        %v1918 = vshrl.u32 %v1917, 7
        %v1919 = vsub.s32 0, %v1918
        %v1920 = vrot.slane %v761, %v1919
        %v1921 = vlaneseq
        %v1922 = vshrl.u32 %v1921, 7
        %v1923 = vsub.s32 0, %v1922
        %v1924 = vrot.slane %v762, %v1923
        %v1925 = vlaneseq
        %v1926 = vshrl.u32 %v1925, 7
        %v1927 = vsub.s32 0, %v1926
        %v1928 = vrot.slane %v763, %v1927
        %v1929 = vlaneseq
        %v1930 = vshrl.u32 %v1929, 7
        %v1931 = vsub.s32 0, %v1930
        %v1932 = vrot.slane %v764, %v1931
        %v1933 = vlaneseq
        %v1934 = vshrl.u32 %v1933, 7
        %v1935 = vsub.s32 0, %v1934
        %v1936 = vrot.slane %v765, %v1935
        %v1937 = vlaneseq
        %v1938 = vshrl.u32 %v1937, 7
        %v1939 = vsub.s32 0, %v1938
        %v1940 = vrot.slane %v766, %v1939
        %v1941 = vlaneseq
        %v1942 = vshrl.u32 %v1941, 7
        %v1943 = vsub.s32 0, %v1942
        %v1944 = vrot.slane %v767, %v1943
        %v1945 = vlaneseq
        %v1946 = vshrl.u32 %v1945, 7
        %v1947 = vsub.s32 0, %v1946
        %v1948 = vrot.slane %v768, %v1947
        %v1949 = vlaneseq
        %v1950 = vshrl.u32 %v1949, 7
        %v1951 = vsub.s32 0, %v1950
        %v1952 = vrot.slane %v769, %v1951
        %v1953 = vlaneseq
        %v1954 = vshrl.u32 %v1953, 7
        %v1955 = vsub.s32 0, %v1954
        %v1956 = vrot.slane %v770, %v1955
        %v1957 = vlaneseq
        %v1958 = vshrl.u32 %v1957, 7
        %v1959 = vsub.s32 0, %v1958
        %v1960 = vrot.slane %v771, %v1959
        %v1961 = vlaneseq
        %v1962 = vshrl.u32 %v1961, 7
        %v1963 = vsub.s32 0, %v1962
        %v1964 = vrot.slane %v772, %v1963
        %v1965 = vlaneseq
        %v1966 = vshrl.u32 %v1965, 7
        %v1967 = vsub.s32 0, %v1966
        %v1968 = vrot.slane %v773, %v1967
        %v1969 = vlaneseq
        %v1970 = vshrl.u32 %v1969, 7
        %v1971 = vsub.s32 0, %v1970
        %v1972 = vrot.slane %v774, %v1971
        %v1973 = vlaneseq
        %v1974 = vshrl.u32 %v1973, 7
        %v1975 = vsub.s32 0, %v1974
        %v1976 = vrot.slane %v775, %v1975
        %v1977 = vlaneseq
        %v1978 = vshrl.u32 %v1977, 7
        %v1979 = vsub.s32 0, %v1978
        %v1980 = vrot.slane %v776, %v1979
        %v1981 = vlaneseq
        %v1982 = vshrl.u32 %v1981, 7
        %v1983 = vsub.s32 0, %v1982
        %v1984 = vrot.slane %v777, %v1983
        %v1985 = vlaneseq
        %v1986 = vshrl.u32 %v1985, 7
        %v1987 = vsub.s32 0, %v1986
        %v1988 = vrot.slane %v778, %v1987
        %v1989 = vlaneseq
        %v1990 = vshrl.u32 %v1989, 7
        %v1991 = vsub.s32 0, %v1990
        %v1992 = vrot.slane %v779, %v1991
        %v1993 = vlaneseq
        %v1994 = vshrl.u32 %v1993, 7
        %v1995 = vsub.s32 0, %v1994
        %v1996 = vrot.slane %v780, %v1995
        %v1997 = vlaneseq
        %v1998 = vshrl.u32 %v1997, 7
        %v1999 = vsub.s32 0, %v1998
        %v2000 = vrot.slane %v781, %v1999
        %v2001 = vlaneseq
        %v2002 = vshrl.u32 %v2001, 7
        %v2003 = vsub.s32 0, %v2002
        %v2004 = vrot.slane %v782, %v2003
        %v2005 = vlaneseq
        %v2006 = vshrl.u32 %v2005, 7
        %v2007 = vsub.s32 0, %v2006
        %v2008 = vrot.slane %v783, %v2007
        %v2009 = vlaneseq
        %v2010 = vshrl.u32 %v2009, 7
        %v2011 = vsub.s32 0, %v2010
        %v2012 = vrot.slane %v784, %v2011
        %v2013 = vlaneseq
        %v2014 = vshrl.u32 %v2013, 7
        %v2015 = vsub.s32 0, %v2014
        %v2016 = vrot.slane %v785, %v2015
        %v2017 = vlaneseq
        %v2018 = vshrl.u32 %v2017, 7
        %v2019 = vsub.s32 0, %v2018
        %v2020 = vrot.slane %v786, %v2019
        %v2021 = vlaneseq
        %v2022 = vshrl.u32 %v2021, 7
        %v2023 = vsub.s32 0, %v2022
        %v2024 = vrot.slane %v787, %v2023
        %v2025 = vlaneseq
        %v2026 = vshrl.u32 %v2025, 7
        %v2027 = vsub.s32 0, %v2026
        %v2028 = vrot.slane %v788, %v2027
        %v2029 = vlaneseq
        %v2030 = vshrl.u32 %v2029, 7
        %v2031 = vsub.s32 0, %v2030
        %v2032 = vrot.slane %v789, %v2031
        %v2033 = vlaneseq
        %v2034 = vshrl.u32 %v2033, 7
        %v2035 = vsub.s32 0, %v2034
        %v2036 = vrot.slane %v790, %v2035
        %v2037 = vlaneseq
        %v2038 = vshrl.u32 %v2037, 7
        %v2039 = vsub.s32 0, %v2038
        %v2040 = vrot.slane %v791, %v2039
        %v2041 = vlaneseq
        %v2042 = vshrl.u32 %v2041, 7
        %v2043 = vsub.s32 0, %v2042
        %v2044 = vrot.slane %v792, %v2043
        %v2045 = vlaneseq
        %v2046 = vshrl.u32 %v2045, 7
        %v2047 = vsub.s32 0, %v2046
        %v2048 = vrot.slane %v793, %v2047
        %v2049 = vlaneseq
        %v2050 = vshrl.u32 %v2049, 7
        %v2051 = vsub.s32 0, %v2050
        %v2052 = vrot.slane %v794, %v2051
        %v2053 = vlaneseq
        %v2054 = vshrl.u32 %v2053, 7
        %v2055 = vsub.s32 0, %v2054
        %v2056 = vrot.slane %v795, %v2055
        %v2057 = vlaneseq
        %v2058 = vshrl.u32 %v2057, 7
        %v2059 = vsub.s32 0, %v2058
        %v2060 = vrot.slane %v796, %v2059
        %v2061 = vlaneseq
        %v2062 = vshrl.u32 %v2061, 7
        %v2063 = vsub.s32 0, %v2062
        %v2064 = vrot.slane %v797, %v2063
        %v2065 = vlaneseq
        %v2066 = vshrl.u32 %v2065, 7
        %v2067 = vsub.s32 0, %v2066
        %v2068 = vrot.slane %v798, %v2067
        %v2069 = vlaneseq
        %v2070 = vshrl.u32 %v2069, 7
        %v2071 = vsub.s32 0, %v2070
        %v2072 = vrot.slane %v799, %v2071
        %v2073 = vlaneseq
        %v2074 = vshrl.u32 %v2073, 7
        %v2075 = vsub.s32 0, %v2074
        %v2076 = vrot.slane %v800, %v2075
        %v2077 = vlaneseq
        %v2078 = vshrl.u32 %v2077, 7
        %v2079 = vsub.s32 0, %v2078
        %v2080 = vrot.slane %v801, %v2079
        %v2081 = vlaneseq
        %v2082 = vshrl.u32 %v2081, 7
        %v2083 = vsub.s32 0, %v2082
        %v2084 = vrot.slane %v802, %v2083
        %v2085 = vlaneseq
        %v2086 = vshrl.u32 %v2085, 7
        %v2087 = vsub.s32 0, %v2086
        %v2088 = vrot.slane %v803, %v2087
        %v2089 = vlaneseq
        %v2090 = vshrl.u32 %v2089, 7
        %v2091 = vsub.s32 0, %v2090
        %v2092 = vrot.slane %v804, %v2091
        %v2093 = vlaneseq
        %v2094 = vshrl.u32 %v2093, 7
        %v2095 = vsub.s32 0, %v2094
        %v2096 = vrot.slane %v805, %v2095
        %v2097 = vlaneseq
        %v2098 = vshrl.u32 %v2097, 7
        %v2099 = vsub.s32 0, %v2098
        %v2100 = vrot.slane %v806, %v2099
        %v2101 = vlaneseq
        %v2102 = vshrl.u32 %v2101, 7
        %v2103 = vsub.s32 0, %v2102
        %v2104 = vrot.slane %v807, %v2103
        %v2105 = vlaneseq
        %v2106 = vshrl.u32 %v2105, 7
        %v2107 = vsub.s32 0, %v2106
        %v2108 = vrot.slane %v808, %v2107
        %v2109 = vlaneseq
        %v2110 = vshrl.u32 %v2109, 7
        %v2111 = vsub.s32 0, %v2110
        %v2112 = vrot.slane %v809, %v2111
        %v2113 = vlaneseq
        %v2114 = vshrl.u32 %v2113, 7
        %v2115 = vsub.s32 0, %v2114
        %v2116 = vrot.slane %v810, %v2115
        %v2117 = vlaneseq
        %v2118 = vshrl.u32 %v2117, 7
        %v2119 = vsub.s32 0, %v2118
        %v2120 = vrot.slane %v811, %v2119
        %v2121 = vlaneseq
        %v2122 = vshrl.u32 %v2121, 7
        %v2123 = vsub.s32 0, %v2122
        %v2124 = vrot.slane %v812, %v2123
        %v2125 = vlaneseq
        %v2126 = vshrl.u32 %v2125, 7
        %v2127 = vsub.s32 0, %v2126
        %v2128 = vrot.slane %v813, %v2127
        %v2129 = vlaneseq
        %v2130 = vshrl.u32 %v2129, 7
        %v2131 = vsub.s32 0, %v2130
        %v2132 = vrot.slane %v814, %v2131
        %v2133 = vlaneseq
        %v2134 = vshrl.u32 %v2133, 7
        %v2135 = vsub.s32 0, %v2134
        %v2136 = vrot.slane %v815, %v2135
        %v2137 = vlaneseq
        %v2138 = vshrl.u32 %v2137, 7
        %v2139 = vsub.s32 0, %v2138
        %v2140 = vrot.slane %v816, %v2139
        %v2141 = vlaneseq
        %v2142 = vshrl.u32 %v2141, 7
        %v2143 = vsub.s32 0, %v2142
        %v2144 = vrot.slane %v817, %v2143
        %v2145 = vlaneseq
        %v2146 = vshrl.u32 %v2145, 7
        %v2147 = vsub.s32 0, %v2146
        %v2148 = vrot.slane %v818, %v2147
        %v2149 = vlaneseq
        %v2150 = vshrl.u32 %v2149, 7
        %v2151 = vsub.s32 0, %v2150
        %v2152 = vrot.slane %v819, %v2151
        %v2153 = vlaneseq
        %v2154 = vshrl.u32 %v2153, 7
        %v2155 = vsub.s32 0, %v2154
        %v2156 = vrot.slane %v820, %v2155
        %v2157 = vlaneseq
        %v2158 = vshrl.u32 %v2157, 7
        %v2159 = vsub.s32 0, %v2158
        %v2160 = vrot.slane %v821, %v2159
        %v2161 = vlaneseq
        %v2162 = vshrl.u32 %v2161, 7
        %v2163 = vsub.s32 0, %v2162
        %v2164 = vrot.slane %v822, %v2163
        %v2165 = vlaneseq
        %v2166 = vshrl.u32 %v2165, 7
        %v2167 = vsub.s32 0, %v2166
        %v2168 = vrot.slane %v823, %v2167
        %v2169 = vlaneseq
        %v2170 = vshrl.u32 %v2169, 7
        %v2171 = vsub.s32 0, %v2170
        %v2172 = vrot.slane %v824, %v2171
        %v2173 = vlaneseq
        %v2174 = vshrl.u32 %v2173, 7
        %v2175 = vsub.s32 0, %v2174
        %v2176 = vrot.slane %v825, %v2175
        %v2177 = vlaneseq
        %v2178 = vshrl.u32 %v2177, 7
        %v2179 = vsub.s32 0, %v2178
        %v2180 = vrot.slane %v826, %v2179
        %v2181 = vlaneseq
        %v2182 = vshrl.u32 %v2181, 7
        %v2183 = vsub.s32 0, %v2182
        %v2184 = vrot.slane %v827, %v2183
        %v2185 = vlaneseq
        %v2186 = vshrl.u32 %v2185, 7
        %v2187 = vsub.s32 0, %v2186
        %v2188 = vrot.slane %v828, %v2187
        %v2189 = vlaneseq
        %v2190 = vshrl.u32 %v2189, 7
        %v2191 = vsub.s32 0, %v2190
        %v2192 = vrot.slane %v829, %v2191
        %v2193 = vlaneseq
        %v2194 = vshrl.u32 %v2193, 7
        %v2195 = vsub.s32 0, %v2194
        %v2196 = vrot.slane %v830, %v2195
        %v2197 = vlaneseq
        %v2198 = vshrl.u32 %v2197, 7
        %v2199 = vsub.s32 0, %v2198
        %v2200 = vrot.slane %v831, %v2199
        %v2201 = vlaneseq
        %v2202 = vshrl.u32 %v2201, 7
        %v2203 = vsub.s32 0, %v2202
        %v2204 = vrot.slane %v832, %v2203
        %v2205 = vlaneseq
        %v2206 = vshrl.u32 %v2205, 7
        %v2207 = vsub.s32 0, %v2206
        %v2208 = vrot.slane %v833, %v2207
        %v2209 = vlaneseq
        %v2210 = vshrl.u32 %v2209, 7
        %v2211 = vsub.s32 0, %v2210
        %v2212 = vrot.slane %v834, %v2211
        %v2213 = vlaneseq
        %v2214 = vshrl.u32 %v2213, 7
        %v2215 = vsub.s32 0, %v2214
        %v2216 = vrot.slane %v835, %v2215
        %v2217 = vlaneseq
        %v2218 = vshrl.u32 %v2217, 7
        %v2219 = vsub.s32 0, %v2218
        %v2220 = vrot.slane %v836, %v2219
        %v2221 = vlaneseq
        %v2222 = vshrl.u32 %v2221, 7
        %v2223 = vsub.s32 0, %v2222
        %v2224 = vrot.slane %v837, %v2223
        %v2225 = vlaneseq
        %v2226 = vshrl.u32 %v2225, 7
        %v2227 = vsub.s32 0, %v2226
        %v2228 = vrot.slane %v838, %v2227
        %v2229 = vlaneseq
        %v2230 = vshrl.u32 %v2229, 7
        %v2231 = vsub.s32 0, %v2230
        %v2232 = vrot.slane %v839, %v2231
        %v2233 = vlaneseq
        %v2234 = vshrl.u32 %v2233, 7
        %v2235 = vsub.s32 0, %v2234
        %v2236 = vrot.slane %v840, %v2235
        %v2237 = vlaneseq
        %v2238 = vshrl.u32 %v2237, 7
        %v2239 = vsub.s32 0, %v2238
        %v2240 = vrot.slane %v841, %v2239
        %v2241 = vlaneseq
        %v2242 = vshrl.u32 %v2241, 7
        %v2243 = vsub.s32 0, %v2242
        %v2244 = vrot.slane %v842, %v2243
        %v2245 = vlaneseq
        %v2246 = vshrl.u32 %v2245, 7
        %v2247 = vsub.s32 0, %v2246
        %v2248 = vrot.slane %v843, %v2247
        %v2249 = vlaneseq
        %v2250 = vshrl.u32 %v2249, 7
        %v2251 = vsub.s32 0, %v2250
        %v2252 = vrot.slane %v844, %v2251
        %v2253 = vlaneseq
        %v2254 = vshrl.u32 %v2253, 7
        %v2255 = vsub.s32 0, %v2254
        %v2256 = vrot.slane %v845, %v2255
        %v2257 = vlaneseq
        %v2258 = vshrl.u32 %v2257, 7
        %v2259 = vsub.s32 0, %v2258
        %v2260 = vrot.slane %v846, %v2259
        %v2261 = vlaneseq
        %v2262 = vshrl.u32 %v2261, 7
        %v2263 = vsub.s32 0, %v2262
        %v2264 = vrot.slane %v847, %v2263
        %v2265 = vlaneseq
        %v2266 = vshrl.u32 %v2265, 7
        %v2267 = vsub.s32 0, %v2266
        %v2268 = vrot.slane %v848, %v2267
        %v2269 = vlaneseq
        %v2270 = vshrl.u32 %v2269, 7
        %v2271 = vsub.s32 0, %v2270
        %v2272 = vrot.slane %v849, %v2271
        %v2273 = vlaneseq
        %v2274 = vshrl.u32 %v2273, 7
        %v2275 = vsub.s32 0, %v2274
        %v2276 = vrot.slane %v850, %v2275
        %v2277 = vlaneseq
        %v2278 = vshrl.u32 %v2277, 7
        %v2279 = vsub.s32 0, %v2278
        %v2280 = vrot.slane %v851, %v2279
        %v2281 = vlaneseq
        %v2282 = vshrl.u32 %v2281, 7
        %v2283 = vsub.s32 0, %v2282
        %v2284 = vrot.slane %v852, %v2283
        %v2285 = vlaneseq
        %v2286 = vshrl.u32 %v2285, 7
        %v2287 = vsub.s32 0, %v2286
        %v2288 = vrot.slane %v853, %v2287
        %v2289 = vlaneseq
        %v2290 = vshrl.u32 %v2289, 7
        %v2291 = vsub.s32 0, %v2290
        %v2292 = vrot.slane %v854, %v2291
        %v2293 = vlaneseq
        %v2294 = vshrl.u32 %v2293, 7
        %v2295 = vsub.s32 0, %v2294
        %v2296 = vrot.slane %v855, %v2295
        %v2297 = vlaneseq
        %v2298 = vshrl.u32 %v2297, 7
        %v2299 = vsub.s32 0, %v2298
        %v2300 = vrot.slane %v856, %v2299
        %v2301 = vlaneseq
        %v2302 = vshrl.u32 %v2301, 7
        %v2303 = vsub.s32 0, %v2302
        %v2304 = vrot.slane %v857, %v2303
        %v2305 = vlaneseq
        %v2306 = vshrl.u32 %v2305, 7
        %v2307 = vsub.s32 0, %v2306
        %v2308 = vrot.slane %v858, %v2307
        %v2309 = vlaneseq
        %v2310 = vshrl.u32 %v2309, 7
        %v2311 = vsub.s32 0, %v2310
        %v2312 = vrot.slane %v859, %v2311
        %v2313 = vlaneseq
        %v2314 = vshrl.u32 %v2313, 7
        %v2315 = vsub.s32 0, %v2314
        %v2316 = vrot.slane %v860, %v2315
        %v2317 = vlaneseq
        %v2318 = vshrl.u32 %v2317, 7
        %v2319 = vsub.s32 0, %v2318
        %v2320 = vrot.slane %v861, %v2319
        %v2321 = vlaneseq
        %v2322 = vshrl.u32 %v2321, 7
        %v2323 = vsub.s32 0, %v2322
        %v2324 = vrot.slane %v862, %v2323
        %v2325 = vlaneseq
        %v2326 = vshrl.u32 %v2325, 7
        %v2327 = vsub.s32 0, %v2326
        %v2328 = vrot.slane %v863, %v2327
        %v2329 = vlaneseq
        %v2330 = vshrl.u32 %v2329, 7
        %v2331 = vsub.s32 0, %v2330
        %v2332 = vrot.slane %v864, %v2331
        %v2333 = vlaneseq
        %v2334 = vshrl.u32 %v2333, 7
        %v2335 = vsub.s32 0, %v2334
        %v2336 = vrot.slane %v865, %v2335
        %v2337 = vlaneseq
        %v2338 = vshrl.u32 %v2337, 7
        %v2339 = vsub.s32 0, %v2338
        %v2340 = vrot.slane %v866, %v2339
        %v2341 = vlaneseq
        %v2342 = vshrl.u32 %v2341, 7
        %v2343 = vsub.s32 0, %v2342
        %v2344 = vrot.slane %v867, %v2343
        %v2345 = vlaneseq
        %v2346 = vshrl.u32 %v2345, 7
        %v2347 = vsub.s32 0, %v2346
        %v2348 = vrot.slane %v868, %v2347
        %v2349 = vlaneseq
        %v2350 = vshrl.u32 %v2349, 7
        %v2351 = vsub.s32 0, %v2350
        %v2352 = vrot.slane %v869, %v2351
        %v2353 = vlaneseq
        %v2354 = vshrl.u32 %v2353, 7
        %v2355 = vsub.s32 0, %v2354
        %v2356 = vrot.slane %v870, %v2355
        %v2357 = vlaneseq
        %v2358 = vshrl.u32 %v2357, 7
        %v2359 = vsub.s32 0, %v2358
        %v2360 = vrot.slane %v871, %v2359
        %v2361 = vlaneseq
        %v2362 = vshrl.u32 %v2361, 7
        %v2363 = vsub.s32 0, %v2362
        %v2364 = vrot.slane %v872, %v2363
        %v2365 = vlaneseq
        %v2366 = vshrl.u32 %v2365, 7
        %v2367 = vsub.s32 0, %v2366
        %v2368 = vrot.slane %v873, %v2367
        %v2369 = vlaneseq
        %v2370 = vshrl.u32 %v2369, 7
        %v2371 = vsub.s32 0, %v2370
        %v2372 = vrot.slane %v874, %v2371
        %v2373 = vlaneseq
        %v2374 = vshrl.u32 %v2373, 7
        %v2375 = vsub.s32 0, %v2374
        %v2376 = vrot.slane %v875, %v2375
        %v2377 = vlaneseq
        %v2378 = vshrl.u32 %v2377, 7
        %v2379 = vsub.s32 0, %v2378
        %v2380 = vrot.slane %v876, %v2379
        %v2381 = vlaneseq
        %v2382 = vshrl.u32 %v2381, 7
        %v2383 = vsub.s32 0, %v2382
        %v2384 = vrot.slane %v877, %v2383
        %v2385 = vlaneseq
        %v2386 = vshrl.u32 %v2385, 7
        %v2387 = vsub.s32 0, %v2386
        %v2388 = vrot.slane %v878, %v2387
        %v2389 = vlaneseq
        %v2390 = vshrl.u32 %v2389, 7
        %v2391 = vsub.s32 0, %v2390
        %v2392 = vrot.slane %v879, %v2391
        %v2393 = vlaneseq
        %v2394 = vshrl.u32 %v2393, 7
        %v2395 = vsub.s32 0, %v2394
        %v2396 = vrot.slane %v880, %v2395
        %v2397 = vlaneseq
        %v2398 = vshrl.u32 %v2397, 7
        %v2399 = vsub.s32 0, %v2398
        %v2400 = vrot.slane %v881, %v2399
        %v2401 = vlaneseq
        %v2402 = vshrl.u32 %v2401, 7
        %v2403 = vsub.s32 0, %v2402
        %v2404 = vrot.slane %v882, %v2403
        %v2405 = vlaneseq
        %v2406 = vshrl.u32 %v2405, 7
        %v2407 = vsub.s32 0, %v2406
        %v2408 = vrot.slane %v883, %v2407
        %v2409 = vlaneseq
        %v2410 = vshrl.u32 %v2409, 7
        %v2411 = vsub.s32 0, %v2410
        %v2412 = vrot.slane %v884, %v2411
        %v2413 = vlaneseq
        %v2414 = vshrl.u32 %v2413, 7
        %v2415 = vsub.s32 0, %v2414
        %v2416 = vrot.slane %v885, %v2415
        %v2417 = vlaneseq
        %v2418 = vshrl.u32 %v2417, 7
        %v2419 = vsub.s32 0, %v2418
        %v2420 = vrot.slane %v886, %v2419
        %v2421 = vlaneseq
        %v2422 = vshrl.u32 %v2421, 7
        %v2423 = vsub.s32 0, %v2422
        %v2424 = vrot.slane %v887, %v2423
        %v2425 = vlaneseq
        %v2426 = vshrl.u32 %v2425, 7
        %v2427 = vsub.s32 0, %v2426
        %v2428 = vrot.slane %v888, %v2427
        %v2429 = vlaneseq
        %v2430 = vshrl.u32 %v2429, 7
        %v2431 = vsub.s32 0, %v2430
        %v2432 = vrot.slane %v889, %v2431
        %v2433 = vlaneseq
        %v2434 = vshrl.u32 %v2433, 7
        %v2435 = vsub.s32 0, %v2434
        %v2436 = vrot.slane %v890, %v2435
        %v2437 = vlaneseq
        %v2438 = vshrl.u32 %v2437, 7
        %v2439 = vsub.s32 0, %v2438
        %v2440 = vrot.slane %v891, %v2439
        %v2441 = vlaneseq
        %v2442 = vshrl.u32 %v2441, 7
        %v2443 = vsub.s32 0, %v2442
        %v2444 = vrot.slane %v892, %v2443
        %v2445 = vlaneseq
        %v2446 = vshrl.u32 %v2445, 7
        %v2447 = vsub.s32 0, %v2446
        %v2448 = vrot.slane %v893, %v2447
        %v2449 = vlaneseq
        %v2450 = vshrl.u32 %v2449, 7
        %v2451 = vsub.s32 0, %v2450
        %v2452 = vrot.slane %v894, %v2451
        %v2453 = vlaneseq
        %v2454 = vshrl.u32 %v2453, 7
        %v2455 = vsub.s32 0, %v2454
        %v2456 = vrot.slane %v895, %v2455
        %v2457 = vlaneseq
        %v2458 = vshrl.u32 %v2457, 7
        %v2459 = vsub.s32 0, %v2458
        %v2460 = vrot.slane %v896, %v2459
        %v2461 = vlaneseq
        %v2462 = vshrl.u32 %v2461, 7
        %v2463 = vsub.s32 0, %v2462
        %v2464 = vrot.slane %v897, %v2463
        %v2465 = vlaneseq
        %v2466 = vshrl.u32 %v2465, 7
        %v2467 = vsub.s32 0, %v2466
        %v2468 = vrot.slane %v898, %v2467
        %v2469 = vlaneseq
        %v2470 = vshrl.u32 %v2469, 7
        %v2471 = vsub.s32 0, %v2470
        %v2472 = vrot.slane %v899, %v2471
        %v2473 = vlaneseq
        %v2474 = vshrl.u32 %v2473, 7
        %v2475 = vsub.s32 0, %v2474
        %v2476 = vrot.slane %v900, %v2475
        %v2477 = vlaneseq
        %v2478 = vshrl.u32 %v2477, 7
        %v2479 = vsub.s32 0, %v2478
        %v2480 = vrot.slane %v901, %v2479
        %v2481 = vlaneseq
        %v2482 = vshrl.u32 %v2481, 7
        %v2483 = vsub.s32 0, %v2482
        %v2484 = vrot.slane %v902, %v2483
        %v2485 = vlaneseq
        %v2486 = vshrl.u32 %v2485, 7
        %v2487 = vsub.s32 0, %v2486
        %v2488 = vrot.slane %v903, %v2487
        %v2489 = vlaneseq
        %v2490 = vshrl.u32 %v2489, 7
        %v2491 = vsub.s32 0, %v2490
        %v2492 = vrot.slane %v904, %v2491
        %v2493 = vlaneseq
        %v2494 = vshrl.u32 %v2493, 7
        %v2495 = vsub.s32 0, %v2494
        %v2496 = vrot.slane %v905, %v2495
        %v2497 = vlaneseq
        %v2498 = vshrl.u32 %v2497, 7
        %v2499 = vsub.s32 0, %v2498
        %v2500 = vrot.slane %v906, %v2499
        %v2501 = vlaneseq
        %v2502 = vshrl.u32 %v2501, 7
        %v2503 = vsub.s32 0, %v2502
        %v2504 = vrot.slane %v907, %v2503
        %v2505 = vlaneseq
        %v2506 = vshrl.u32 %v2505, 7
        %v2507 = vsub.s32 0, %v2506
        %v2508 = vrot.slane %v908, %v2507
        %v2509 = vlaneseq
        %v2510 = vshrl.u32 %v2509, 7
        %v2511 = vsub.s32 0, %v2510
        %v2512 = vrot.slane %v909, %v2511
        %v2513 = vlaneseq
        %v2514 = vshrl.u32 %v2513, 7
        %v2515 = vsub.s32 0, %v2514
        %v2516 = vrot.slane %v910, %v2515
        %v2517 = vlaneseq
        %v2518 = vshrl.u32 %v2517, 7
        %v2519 = vsub.s32 0, %v2518
        %v2520 = vrot.slane %v911, %v2519
        %v2521 = vlaneseq
        %v2522 = vshrl.u32 %v2521, 7
        %v2523 = vsub.s32 0, %v2522
        %v2524 = vrot.slane %v912, %v2523
        %v2525 = vlaneseq
        %v2526 = vshrl.u32 %v2525, 7
        %v2527 = vsub.s32 0, %v2526
        %v2528 = vrot.slane %v913, %v2527
        %v2529 = vlaneseq
        %v2530 = vshrl.u32 %v2529, 7
        %v2531 = vsub.s32 0, %v2530
        %v2532 = vrot.slane %v914, %v2531
        %v2533 = vlaneseq
        %v2534 = vshrl.u32 %v2533, 7
        %v2535 = vsub.s32 0, %v2534
        %v2536 = vrot.slane %v915, %v2535
        %v2537 = vlaneseq
        %v2538 = vshrl.u32 %v2537, 7
        %v2539 = vsub.s32 0, %v2538
        %v2540 = vrot.slane %v916, %v2539
        %v2541 = vlaneseq
        %v2542 = vshrl.u32 %v2541, 7
        %v2543 = vsub.s32 0, %v2542
        %v2544 = vrot.slane %v917, %v2543
        %v2545 = vlaneseq
        %v2546 = vshrl.u32 %v2545, 7
        %v2547 = vsub.s32 0, %v2546
        %v2548 = vrot.slane %v918, %v2547
        %v2549 = vlaneseq
        %v2550 = vshrl.u32 %v2549, 7
        %v2551 = vsub.s32 0, %v2550
        %v2552 = vrot.slane %v919, %v2551
        %v2553 = vlaneseq
        %v2554 = vshrl.u32 %v2553, 7
        %v2555 = vsub.s32 0, %v2554
        %v2556 = vrot.slane %v920, %v2555
        %v2557 = vlaneseq
        %v2558 = vshrl.u32 %v2557, 7
        %v2559 = vsub.s32 0, %v2558
        %v2560 = vrot.slane %v921, %v2559
        %v2561 = vlaneseq
        %v2562 = vshrl.u32 %v2561, 7
        %v2563 = vsub.s32 0, %v2562
        %v2564 = vrot.slane %v922, %v2563
        %v2565 = vlaneseq
        %v2566 = vshrl.u32 %v2565, 7
        %v2567 = vsub.s32 0, %v2566
        %v2568 = vrot.slane %v923, %v2567
        %v2569 = vlaneseq
        %v2570 = vshrl.u32 %v2569, 7
        %v2571 = vsub.s32 0, %v2570
        %v2572 = vrot.slane %v924, %v2571
        %v2573 = vlaneseq
        %v2574 = vshrl.u32 %v2573, 7
        %v2575 = vsub.s32 0, %v2574
        %v2576 = vrot.slane %v925, %v2575
        %v2577 = vlaneseq
        %v2578 = vshrl.u32 %v2577, 7
        %v2579 = vsub.s32 0, %v2578
        %v2580 = vrot.slane %v926, %v2579
        %v2581 = vlaneseq
        %v2582 = vshrl.u32 %v2581, 7
        %v2583 = vsub.s32 0, %v2582
        %v2584 = vrot.slane %v927, %v2583
        %v2585 = vlaneseq
        %v2586 = vshrl.u32 %v2585, 7
        %v2587 = vsub.s32 0, %v2586
        %v2588 = vrot.slane %v928, %v2587
        %v2589 = vlaneseq
        %v2590 = vshrl.u32 %v2589, 7
        %v2591 = vsub.s32 0, %v2590
        %v2592 = vrot.slane %v929, %v2591
        %v2593 = vlaneseq
        %v2594 = vshrl.u32 %v2593, 7
        %v2595 = vsub.s32 0, %v2594
        %v2596 = vrot.slane %v930, %v2595
        %v2597 = vlaneseq
        %v2598 = vshrl.u32 %v2597, 7
        %v2599 = vsub.s32 0, %v2598
        %v2600 = vrot.slane %v931, %v2599
        %v2601 = vlaneseq
        %v2602 = vshrl.u32 %v2601, 7
        %v2603 = vsub.s32 0, %v2602
        %v2604 = vrot.slane %v932, %v2603
        %v2605 = vlaneseq
        %v2606 = vshrl.u32 %v2605, 7
        %v2607 = vsub.s32 0, %v2606
        %v2608 = vrot.slane %v933, %v2607
        %v2609 = vlaneseq
        %v2610 = vshrl.u32 %v2609, 7
        %v2611 = vsub.s32 0, %v2610
        %v2612 = vrot.slane %v934, %v2611
        %v2613 = vlaneseq
        %v2614 = vshrl.u32 %v2613, 7
        %v2615 = vsub.s32 0, %v2614
        %v2616 = vrot.slane %v935, %v2615
        %v2617 = vlaneseq
        %v2618 = vshrl.u32 %v2617, 7
        %v2619 = vsub.s32 0, %v2618
        %v2620 = vrot.slane %v936, %v2619
        %v2621 = vlaneseq
        %v2622 = vshrl.u32 %v2621, 7
        %v2623 = vsub.s32 0, %v2622
        %v2624 = vrot.slane %v937, %v2623
        %v2625 = vlaneseq
        %v2626 = vshrl.u32 %v2625, 7
        %v2627 = vsub.s32 0, %v2626
        %v2628 = vrot.slane %v938, %v2627
        %v2629 = vlaneseq
        %v2630 = vshrl.u32 %v2629, 7
        %v2631 = vsub.s32 0, %v2630
        %v2632 = vrot.slane %v939, %v2631
        %v2633 = vlaneseq
        %v2634 = vshrl.u32 %v2633, 7
        %v2635 = vsub.s32 0, %v2634
        %v2636 = vrot.slane %v940, %v2635
        %v2637 = vlaneseq
        %v2638 = vshrl.u32 %v2637, 7
        %v2639 = vsub.s32 0, %v2638
        %v2640 = vrot.slane %v941, %v2639
        %v2641 = vlaneseq
        %v2642 = vshrl.u32 %v2641, 7
        %v2643 = vsub.s32 0, %v2642
        %v2644 = vrot.slane %v942, %v2643
        %v2645 = vlaneseq
        %v2646 = vshrl.u32 %v2645, 7
        %v2647 = vsub.s32 0, %v2646
        %v2648 = vrot.slane %v943, %v2647
        %v2649 = vlaneseq
        %v2650 = vshrl.u32 %v2649, 7
        %v2651 = vsub.s32 0, %v2650
        %v2652 = vrot.slane %v944, %v2651
        %v2653 = vlaneseq
        %v2654 = vshrl.u32 %v2653, 7
        %v2655 = vsub.s32 0, %v2654
        %v2656 = vrot.slane %v945, %v2655
        %v2657 = vlaneseq
        %v2658 = vshrl.u32 %v2657, 7
        %v2659 = vsub.s32 0, %v2658
        %v2660 = vrot.slane %v946, %v2659
        %v2661 = vlaneseq
        %v2662 = vshrl.u32 %v2661, 7
        %v2663 = vsub.s32 0, %v2662
        %v2664 = vrot.slane %v947, %v2663
        %v2665 = vlaneseq
        %v2666 = vshrl.u32 %v2665, 7
        %v2667 = vsub.s32 0, %v2666
        %v2668 = vrot.slane %v948, %v2667
        %v2669 = vlaneseq
        %v2670 = vshrl.u32 %v2669, 7
        %v2671 = vsub.s32 0, %v2670
        %v2672 = vrot.slane %v949, %v2671
        %v2673 = vlaneseq
        %v2674 = vshrl.u32 %v2673, 7
        %v2675 = vsub.s32 0, %v2674
        %v2676 = vrot.slane %v950, %v2675
        %v2677 = vlaneseq
        %v2678 = vshrl.u32 %v2677, 7
        %v2679 = vsub.s32 0, %v2678
        %v2680 = vrot.slane %v951, %v2679
        %v2681 = vlaneseq
        %v2682 = vshrl.u32 %v2681, 7
        %v2683 = vsub.s32 0, %v2682
        %v2684 = vrot.slane %v952, %v2683
        %v2685 = vlaneseq
        %v2686 = vshrl.u32 %v2685, 7
        %v2687 = vsub.s32 0, %v2686
        %v2688 = vrot.slane %v953, %v2687
        %v2689 = vlaneseq
        %v2690 = vshrl.u32 %v2689, 7
        %v2691 = vsub.s32 0, %v2690
        %v2692 = vrot.slane %v954, %v2691
        %v2693 = vlaneseq
        %v2694 = vshrl.u32 %v2693, 7
        %v2695 = vsub.s32 0, %v2694
        %v2696 = vrot.slane %v955, %v2695
        %v2697 = vlaneseq
        %v2698 = vshrl.u32 %v2697, 7
        %v2699 = vsub.s32 0, %v2698
        %v2700 = vrot.slane %v956, %v2699
        %v2701 = vlaneseq
        %v2702 = vshrl.u32 %v2701, 7
        %v2703 = vsub.s32 0, %v2702
        %v2704 = vrot.slane %v957, %v2703
        %v2705 = vlaneseq
        %v2706 = vshrl.u32 %v2705, 7
        %v2707 = vsub.s32 0, %v2706
        %v2708 = vrot.slane %v958, %v2707
        %v2709 = vlaneseq
        %v2710 = vshrl.u32 %v2709, 7
        %v2711 = vsub.s32 0, %v2710
        %v2712 = vrot.slane %v959, %v2711
        %v2713 = vlaneseq
        %v2714 = vshrl.u32 %v2713, 7
        %v2715 = vsub.s32 0, %v2714
        %v2716 = vrot.slane %v960, %v2715
        %v2717 = vlaneseq
        %v2718 = vshrl.u32 %v2717, 7
        %v2719 = vsub.s32 0, %v2718
        %v2720 = vrot.slane %v961, %v2719
        %v2721 = vlaneseq
        %v2722 = vshrl.u32 %v2721, 7
        %v2723 = vsub.s32 0, %v2722
        %v2724 = vrot.slane %v962, %v2723
        %v2725 = vlaneseq
        %v2726 = vshrl.u32 %v2725, 7
        %v2727 = vsub.s32 0, %v2726
        %v2728 = vrot.slane %v963, %v2727
        %v2729 = vlaneseq
        %v2730 = vshrl.u32 %v2729, 7
        %v2731 = vsub.s32 0, %v2730
        %v2732 = vrot.slane %v964, %v2731
        %v2733 = vlaneseq
        %v2734 = vshrl.u32 %v2733, 7
        %v2735 = vsub.s32 0, %v2734
        %v2736 = vrot.slane %v965, %v2735
        %v2737 = vlaneseq
        %v2738 = vshrl.u32 %v2737, 7
        %v2739 = vsub.s32 0, %v2738
        %v2740 = vrot.slane %v966, %v2739
        %v2741 = vlaneseq
        %v2742 = vshrl.u32 %v2741, 7
        %v2743 = vsub.s32 0, %v2742
        %v2744 = vrot.slane %v967, %v2743
        %v2745 = vlaneseq
        %v2746 = vshrl.u32 %v2745, 7
        %v2747 = vsub.s32 0, %v2746
        %v2748 = vrot.slane %v968, %v2747
        %v2749 = vlaneseq
        %v2750 = vshrl.u32 %v2749, 7
        %v2751 = vsub.s32 0, %v2750
        %v2752 = vrot.slane %v969, %v2751
        %v2753 = vlaneseq
        %v2754 = vshrl.u32 %v2753, 7
        %v2755 = vsub.s32 0, %v2754
        %v2756 = vrot.slane %v970, %v2755
        %v2757 = vlaneseq
        %v2758 = vshrl.u32 %v2757, 7
        %v2759 = vsub.s32 0, %v2758
        %v2760 = vrot.slane %v971, %v2759
        %v2761 = vlaneseq
        %v2762 = vshrl.u32 %v2761, 7
        %v2763 = vsub.s32 0, %v2762
        %v2764 = vrot.slane %v972, %v2763
        %v2765 = vlaneseq
        %v2766 = vshrl.u32 %v2765, 7
        %v2767 = vsub.s32 0, %v2766
        %v2768 = vrot.slane %v973, %v2767
        %v2769 = vlaneseq
        %v2770 = vshrl.u32 %v2769, 7
        %v2771 = vsub.s32 0, %v2770
        %v2772 = vrot.slane %v974, %v2771
        %v2773 = vlaneseq
        %v2774 = vshrl.u32 %v2773, 7
        %v2775 = vsub.s32 0, %v2774
        %v2776 = vrot.slane %v975, %v2775
        %v2777 = vlaneseq
        %v2778 = vshrl.u32 %v2777, 7
        %v2779 = vsub.s32 0, %v2778
        %v2780 = vrot.slane %v976, %v2779
        %v2781 = vlaneseq
        %v2782 = vshrl.u32 %v2781, 7
        %v2783 = vsub.s32 0, %v2782
        %v2784 = vrot.slane %v977, %v2783
        %v2785 = vlaneseq
        %v2786 = vshrl.u32 %v2785, 7
        %v2787 = vsub.s32 0, %v2786
        %v2788 = vrot.slane %v978, %v2787
        %v2789 = vlaneseq
        %v2790 = vshrl.u32 %v2789, 7
        %v2791 = vsub.s32 0, %v2790
        %v2792 = vrot.slane %v979, %v2791
        %v2793 = vlaneseq
        %v2794 = vshrl.u32 %v2793, 7
        %v2795 = vsub.s32 0, %v2794
        %v2796 = vrot.slane %v980, %v2795
        %v2797 = vlaneseq
        %v2798 = vshrl.u32 %v2797, 7
        %v2799 = vsub.s32 0, %v2798
        %v2800 = vrot.slane %v981, %v2799
        %v2801 = vlaneseq
        %v2802 = vshrl.u32 %v2801, 7
        %v2803 = vsub.s32 0, %v2802
        %v2804 = vrot.slane %v982, %v2803
        %v2805 = vlaneseq
        %v2806 = vshrl.u32 %v2805, 7
        %v2807 = vsub.s32 0, %v2806
        %v2808 = vrot.slane %v983, %v2807
        %v2809 = vlaneseq
        %v2810 = vshrl.u32 %v2809, 7
        %v2811 = vsub.s32 0, %v2810
        %v2812 = vrot.slane %v984, %v2811
        %v2813 = vlaneseq
        %v2814 = vshrl.u32 %v2813, 7
        %v2815 = vsub.s32 0, %v2814
        %v2816 = vrot.slane %v985, %v2815
        %v2817 = vlaneseq
        %v2818 = vshrl.u32 %v2817, 7
        %v2819 = vsub.s32 0, %v2818
        %v2820 = vrot.slane %v986, %v2819
        %v2821 = vlaneseq
        %v2822 = vshrl.u32 %v2821, 7
        %v2823 = vsub.s32 0, %v2822
        %v2824 = vrot.slane %v987, %v2823
        %v2825 = vlaneseq
        %v2826 = vshrl.u32 %v2825, 7
        %v2827 = vsub.s32 0, %v2826
        %v2828 = vrot.slane %v988, %v2827
        %v2829 = vlaneseq
        %v2830 = vshrl.u32 %v2829, 7
        %v2831 = vsub.s32 0, %v2830
        %v2832 = vrot.slane %v989, %v2831
        %v2833 = vlaneseq
        %v2834 = vshrl.u32 %v2833, 7
        %v2835 = vsub.s32 0, %v2834
        %v2836 = vrot.slane %v990, %v2835
        %v2837 = vlaneseq
        %v2838 = vshrl.u32 %v2837, 7
        %v2839 = vsub.s32 0, %v2838
        %v2840 = vrot.slane %v991, %v2839
        %v2841 = vlaneseq
        %v2842 = vshrl.u32 %v2841, 7
        %v2843 = vsub.s32 0, %v2842
        %v2844 = vrot.slane %v992, %v2843
        %v2845 = vlaneseq
        %v2846 = vshrl.u32 %v2845, 7
        %v2847 = vsub.s32 0, %v2846
        %v2848 = vrot.slane %v993, %v2847
        %v2849 = vlaneseq
        %v2850 = vshrl.u32 %v2849, 7
        %v2851 = vsub.s32 0, %v2850
        %v2852 = vrot.slane %v994, %v2851
        %v2853 = vlaneseq
        %v2854 = vshrl.u32 %v2853, 7
        %v2855 = vsub.s32 0, %v2854
        %v2856 = vrot.slane %v995, %v2855
        %v2857 = vlaneseq
        %v2858 = vshrl.u32 %v2857, 7
        %v2859 = vsub.s32 0, %v2858
        %v2860 = vrot.slane %v996, %v2859
        %v2861 = vlaneseq
        %v2862 = vshrl.u32 %v2861, 7
        %v2863 = vsub.s32 0, %v2862
        %v2864 = vrot.slane %v997, %v2863
        %v2865 = vlaneseq
        %v2866 = vshrl.u32 %v2865, 7
        %v2867 = vsub.s32 0, %v2866
        %v2868 = vrot.slane %v998, %v2867
        %v2869 = vlaneseq
        %v2870 = vshrl.u32 %v2869, 7
        %v2871 = vsub.s32 0, %v2870
        %v2872 = vrot.slane %v999, %v2871
        %v2873 = vlaneseq
        %v2874 = vshrl.u32 %v2873, 7
        %v2875 = vsub.s32 0, %v2874
        %v2876 = vrot.slane %v1000, %v2875
        %v2877 = vlaneseq
        %v2878 = vshrl.u32 %v2877, 7
        %v2879 = vsub.s32 0, %v2878
        %v2880 = vrot.slane %v1001, %v2879
        %v2881 = vlaneseq
        %v2882 = vshrl.u32 %v2881, 7
        %v2883 = vsub.s32 0, %v2882
        %v2884 = vrot.slane %v1002, %v2883
        %v2885 = vlaneseq
        %v2886 = vshrl.u32 %v2885, 7
        %v2887 = vsub.s32 0, %v2886
        %v2888 = vrot.slane %v1003, %v2887
        %v2889 = vlaneseq
        %v2890 = vshrl.u32 %v2889, 7
        %v2891 = vsub.s32 0, %v2890
        %v2892 = vrot.slane %v1004, %v2891
        %v2893 = vlaneseq
        %v2894 = vshrl.u32 %v2893, 7
        %v2895 = vsub.s32 0, %v2894
        %v2896 = vrot.slane %v1005, %v2895
        %v2897 = vlaneseq
        %v2898 = vshrl.u32 %v2897, 7
        %v2899 = vsub.s32 0, %v2898
        %v2900 = vrot.slane %v1006, %v2899
        %v2901 = vlaneseq
        %v2902 = vshrl.u32 %v2901, 7
        %v2903 = vsub.s32 0, %v2902
        %v2904 = vrot.slane %v1007, %v2903
        %v2905 = vlaneseq
        %v2906 = vshrl.u32 %v2905, 7
        %v2907 = vsub.s32 0, %v2906
        %v2908 = vrot.slane %v1008, %v2907
        %v2909 = vlaneseq
        %v2910 = vshrl.u32 %v2909, 7
        %v2911 = vsub.s32 0, %v2910
        %v2912 = vrot.slane %v1009, %v2911
        %v2913 = vlaneseq
        %v2914 = vshrl.u32 %v2913, 7
        %v2915 = vsub.s32 0, %v2914
        %v2916 = vrot.slane %v1010, %v2915
        %v2917 = vlaneseq
        %v2918 = vshrl.u32 %v2917, 7
        %v2919 = vsub.s32 0, %v2918
        %v2920 = vrot.slane %v1011, %v2919
        %v2921 = vlaneseq
        %v2922 = vshrl.u32 %v2921, 7
        %v2923 = vsub.s32 0, %v2922
        %v2924 = vrot.slane %v1012, %v2923
        %v2925 = vlaneseq
        %v2926 = vshrl.u32 %v2925, 7
        %v2927 = vsub.s32 0, %v2926
        %v2928 = vrot.slane %v1013, %v2927
        %v2929 = vlaneseq
        %v2930 = vshrl.u32 %v2929, 7
        %v2931 = vsub.s32 0, %v2930
        %v2932 = vrot.slane %v1014, %v2931
        %v2933 = vlaneseq
        %v2934 = vshrl.u32 %v2933, 7
        %v2935 = vsub.s32 0, %v2934
        %v2936 = vrot.slane %v1015, %v2935
        %v2937 = vlaneseq
        %v2938 = vshrl.u32 %v2937, 7
        %v2939 = vsub.s32 0, %v2938
        %v2940 = vrot.slane %v1016, %v2939
        %v2941 = vlaneseq
        %v2942 = vshrl.u32 %v2941, 7
        %v2943 = vsub.s32 0, %v2942
        %v2944 = vrot.slane %v1017, %v2943
        %v2945 = vlaneseq
        %v2946 = vshrl.u32 %v2945, 7
        %v2947 = vsub.s32 0, %v2946
        %v2948 = vrot.slane %v1018, %v2947
        %v2949 = vlaneseq
        %v2950 = vshrl.u32 %v2949, 7
        %v2951 = vsub.s32 0, %v2950
        %v2952 = vrot.slane %v1019, %v2951
        %v2953 = vlaneseq
        %v2954 = vshrl.u32 %v2953, 7
        %v2955 = vsub.s32 0, %v2954
        %v2956 = vrot.slane %v1020, %v2955
        %v2957 = vlaneseq
        %v2958 = vshrl.u32 %v2957, 7
        %v2959 = vsub.s32 0, %v2958
        %v2960 = vrot.slane %v1021, %v2959
        %v2961 = vlaneseq
        %v2962 = vshrl.u32 %v2961, 7
        %v2963 = vsub.s32 0, %v2962
        %v2964 = vrot.slane %v1022, %v2963
        %v2965 = vlaneseq
        %v2966 = vshrl.u32 %v2965, 7
        %v2967 = vsub.s32 0, %v2966
        %v2968 = vrot.slane %v1023, %v2967
        %v2969 = vlaneseq
        %v2970 = vshrl.u32 %v2969, 7
        %v2971 = vsub.s32 0, %v2970
        %v2972 = vrot.slane %v1024, %v2971
        %v2973 = vlaneseq
        %v2974 = vshrl.u32 %v2973, 7
        %v2975 = vsub.s32 0, %v2974
        %v2976 = vrot.slane %v1025, %v2975
        %v2977 = vlaneseq
        %v2978 = vshrl.u32 %v2977, 7
        %v2979 = vsub.s32 0, %v2978
        %v2980 = vrot.slane %v1026, %v2979
        %v2981 = vlaneseq
        %v2982 = vshrl.u32 %v2981, 7
        %v2983 = vsub.s32 0, %v2982
        %v2984 = vrot.slane %v1027, %v2983
        %v2985 = vlaneseq
        %v2986 = vshrl.u32 %v2985, 7
        %v2987 = vsub.s32 0, %v2986
        %v2988 = vrot.slane %v1028, %v2987
        %v2989 = vlaneseq
        %v2990 = vshrl.u32 %v2989, 7
        %v2991 = vsub.s32 0, %v2990
        %v2992 = vrot.slane %v1029, %v2991
        %v2993 = vlaneseq
        %v2994 = vshrl.u32 %v2993, 7
        %v2995 = vsub.s32 0, %v2994
        %v2996 = vrot.slane %v1030, %v2995
        %v2997 = vlaneseq
        %v2998 = vshrl.u32 %v2997, 7
        %v2999 = vsub.s32 0, %v2998
        %v3000 = vrot.slane %v1031, %v2999
        %v3001 = vlaneseq
        %v3002 = vshrl.u32 %v3001, 7
        %v3003 = vsub.s32 0, %v3002
        %v3004 = vrot.slane %v1032, %v3003
        %v3005 = vlaneseq
        %v3006 = vshrl.u32 %v3005, 7
        %v3007 = vsub.s32 0, %v3006
        %v3008 = vrot.slane %v1033, %v3007
        %v3009 = vlaneseq
        %v3010 = vshrl.u32 %v3009, 7
        %v3011 = vsub.s32 0, %v3010
        %v3012 = vrot.slane %v1034, %v3011
        %v3013 = vlaneseq
        %v3014 = vshrl.u32 %v3013, 7
        %v3015 = vsub.s32 0, %v3014
        %v3016 = vrot.slane %v1035, %v3015
        %v3017 = vlaneseq
        %v3018 = vshrl.u32 %v3017, 7
        %v3019 = vsub.s32 0, %v3018
        %v3020 = vrot.slane %v1036, %v3019
        %v3021 = vlaneseq
        %v3022 = vshrl.u32 %v3021, 7
        %v3023 = vsub.s32 0, %v3022
        %v3024 = vrot.slane %v1037, %v3023
        %v3025 = vlaneseq
        %v3026 = vshrl.u32 %v3025, 7
        %v3027 = vsub.s32 0, %v3026
        %v3028 = vrot.slane %v1038, %v3027
        %v3029 = vlaneseq
        %v3030 = vshrl.u32 %v3029, 7
        %v3031 = vsub.s32 0, %v3030
        %v3032 = vrot.slane %v1039, %v3031
        %v3033 = vlaneseq
        %v3034 = vshrl.u32 %v3033, 7
        %v3035 = vsub.s32 0, %v3034
        %v3036 = vrot.slane %v1040, %v3035
        %v3037 = vlaneseq
        %v3038 = vshrl.u32 %v3037, 7
        %v3039 = vsub.s32 0, %v3038
        %v3040 = vrot.slane %v1041, %v3039
        %v3041 = vlaneseq
        %v3042 = vshrl.u32 %v3041, 7
        %v3043 = vsub.s32 0, %v3042
        %v3044 = vrot.slane %v1042, %v3043
        %v3045 = vlaneseq
        %v3046 = vshrl.u32 %v3045, 7
        %v3047 = vsub.s32 0, %v3046
        %v3048 = vrot.slane %v1043, %v3047
        %v3049 = vlaneseq
        %v3050 = vshrl.u32 %v3049, 7
        %v3051 = vsub.s32 0, %v3050
        %v3052 = vrot.slane %v1044, %v3051
        %v3053 = vlaneseq
        %v3054 = vshrl.u32 %v3053, 7
        %v3055 = vsub.s32 0, %v3054
        %v3056 = vrot.slane %v1045, %v3055
        %v3057 = vlaneseq
        %v3058 = vshrl.u32 %v3057, 7
        %v3059 = vsub.s32 0, %v3058
        %v3060 = vrot.slane %v1046, %v3059
        %v3061 = vlaneseq
        %v3062 = vshrl.u32 %v3061, 7
        %v3063 = vsub.s32 0, %v3062
        %v3064 = vrot.slane %v1047, %v3063
        %v3065 = vlaneseq
        %v3066 = vshrl.u32 %v3065, 7
        %v3067 = vsub.s32 0, %v3066
        %v3068 = vrot.slane %v1048, %v3067
        %v3069 = vlaneseq
        %v3070 = vshrl.u32 %v3069, 7
        %v3071 = vsub.s32 0, %v3070
        %v3072 = vrot.slane %v1049, %v3071
        %v3073 = vlaneseq
        %v3074 = vshrl.u32 %v3073, 7
        %v3075 = vsub.s32 0, %v3074
        %v3076 = vrot.slane %v1050, %v3075
        %v3077 = vlaneseq
        %v3078 = vshrl.u32 %v3077, 7
        %v3079 = vsub.s32 0, %v3078
        %v3080 = vrot.slane %v1051, %v3079
        %v3081 = vlaneseq
        %v3082 = vshrl.u32 %v3081, 7
        %v3083 = vsub.s32 0, %v3082
        %v3084 = vrot.slane %v1052, %v3083
        %v3085 = vlaneseq
        %v3086 = vshrl.u32 %v3085, 7
        %v3087 = vsub.s32 0, %v3086
        %v3088 = vrot.slane %v1053, %v3087
        %v3089 = vlaneseq
        %v3090 = vshrl.u32 %v3089, 7
        %v3091 = vsub.s32 0, %v3090
        %v3092 = vrot.slane %v1054, %v3091
        %v3093 = vlaneseq
        %v3094 = vshrl.u32 %v3093, 7
        %v3095 = vsub.s32 0, %v3094
        %v3096 = vrot.slane %v1055, %v3095
        %v3097 = vlaneseq
        %v3098 = vshrl.u32 %v3097, 7
        %v3099 = vsub.s32 0, %v3098
        %v3100 = vrot.slane %v1056, %v3099
        %v3101 = vlaneseq
        %v3102 = vshrl.u32 %v3101, 7
        %v3103 = vsub.s32 0, %v3102
        %v3104 = vrot.slane %v1057, %v3103
        %v3105 = vlaneseq
        %v3106 = vshrl.u32 %v3105, 7
        %v3107 = vsub.s32 0, %v3106
        %v3108 = vrot.slane %v1058, %v3107
        %v3109 = vlaneseq
        %v3110 = vshrl.u32 %v3109, 7
        %v3111 = vsub.s32 0, %v3110
        %v3112 = vrot.slane %v1059, %v3111
        %v3113 = vlaneseq
        %v3114 = vshrl.u32 %v3113, 7
        %v3115 = vsub.s32 0, %v3114
        %v3116 = vrot.slane %v1060, %v3115
        %v3117 = vlaneseq
        %v3118 = vshrl.u32 %v3117, 7
        %v3119 = vsub.s32 0, %v3118
        %v3120 = vrot.slane %v1061, %v3119
        %v3121 = vlaneseq
        %v3122 = vshrl.u32 %v3121, 7
        %v3123 = vsub.s32 0, %v3122
        %v3124 = vrot.slane %v1062, %v3123
        %v3125 = vlaneseq
        %v3126 = vshrl.u32 %v3125, 7
        %v3127 = vsub.s32 0, %v3126
        %v3128 = vrot.slane %v1063, %v3127
        %v3129 = vlaneseq
        %v3130 = vshrl.u32 %v3129, 7
        %v3131 = vsub.s32 0, %v3130
        %v3132 = vrot.slane %v1064, %v3131
        %v3133 = vlaneseq
        %v3134 = vshrl.u32 %v3133, 7
        %v3135 = vsub.s32 0, %v3134
        %v3136 = vrot.slane %v1065, %v3135
        %v3137 = vlaneseq
        %v3138 = vshrl.u32 %v3137, 7
        %v3139 = vsub.s32 0, %v3138
        %v3140 = vrot.slane %v1066, %v3139
        %v3141 = vlaneseq
        %v3142 = vshrl.u32 %v3141, 7
        %v3143 = vsub.s32 0, %v3142
        %v3144 = vrot.slane %v1067, %v3143
        %v3145 = vlaneseq
        %v3146 = vshrl.u32 %v3145, 7
        %v3147 = vsub.s32 0, %v3146
        %v3148 = vrot.slane %v1068, %v3147
        %v3149 = vlaneseq
        %v3150 = vshrl.u32 %v3149, 7
        %v3151 = vsub.s32 0, %v3150
        %v3152 = vrot.slane %v1069, %v3151
        %v3153 = vlaneseq
        %v3154 = vshrl.u32 %v3153, 7
        %v3155 = vsub.s32 0, %v3154
        %v3156 = vrot.slane %v1070, %v3155
        %v3157 = vlaneseq
        %v3158 = vshrl.u32 %v3157, 7
        %v3159 = vsub.s32 0, %v3158
        %v3160 = vrot.slane %v1071, %v3159
        %v3161 = vlaneseq
        %v3162 = vshrl.u32 %v3161, 7
        %v3163 = vsub.s32 0, %v3162
        %v3164 = vrot.slane %v1072, %v3163
        %v3165 = vlaneseq
        %v3166 = vshrl.u32 %v3165, 7
        %v3167 = vsub.s32 0, %v3166
        %v3168 = vrot.slane %v1073, %v3167
        %v3169 = vlaneseq
        %v3170 = vshrl.u32 %v3169, 7
        %v3171 = vsub.s32 0, %v3170
        %v3172 = vrot.slane %v1074, %v3171
        %v3173 = vlaneseq
        %v3174 = vshrl.u32 %v3173, 7
        %v3175 = vsub.s32 0, %v3174
        %v3176 = vrot.slane %v1075, %v3175
        %v3177 = vlaneseq
        %v3178 = vshrl.u32 %v3177, 7
        %v3179 = vsub.s32 0, %v3178
        %v3180 = vrot.slane %v1076, %v3179
        %v3181 = vlaneseq
        %v3182 = vshrl.u32 %v3181, 7
        %v3183 = vsub.s32 0, %v3182
        %v3184 = vrot.slane %v1077, %v3183
        %v3185 = vlaneseq
        %v3186 = vshrl.u32 %v3185, 7
        %v3187 = vsub.s32 0, %v3186
        %v3188 = vrot.slane %v1078, %v3187
        %v3189 = vlaneseq
        %v3190 = vshrl.u32 %v3189, 7
        %v3191 = vsub.s32 0, %v3190
        %v3192 = vrot.slane %v1079, %v3191
        %v3193 = vlaneseq
        %v3194 = vshrl.u32 %v3193, 7
        %v3195 = vsub.s32 0, %v3194
        %v3196 = vrot.slane %v1080, %v3195
        %v3197 = vlaneseq
        %v3198 = vshrl.u32 %v3197, 7
        %v3199 = vsub.s32 0, %v3198
        %v3200 = vrot.slane %v1081, %v3199
        %v3201 = vlaneseq
        %v3202 = vshrl.u32 %v3201, 7
        %v3203 = vsub.s32 0, %v3202
        %v3204 = vrot.slane %v1082, %v3203
        %v3205 = vlaneseq
        %v3206 = vshrl.u32 %v3205, 7
        %v3207 = vsub.s32 0, %v3206
        %v3208 = vrot.slane %v1083, %v3207
        %v3209 = vlaneseq
        %v3210 = vshrl.u32 %v3209, 7
        %v3211 = vsub.s32 0, %v3210
        %v3212 = vrot.slane %v1084, %v3211
        %v3213 = vlaneseq
        %v3214 = vshrl.u32 %v3213, 7
        %v3215 = vsub.s32 0, %v3214
        %v3216 = vrot.slane %v1085, %v3215
        %v3217 = vlaneseq
        %v3218 = vshrl.u32 %v3217, 7
        %v3219 = vsub.s32 0, %v3218
        %v3220 = vrot.slane %v1086, %v3219
        %v3221 = vlaneseq
        %v3222 = vshrl.u32 %v3221, 7
        %v3223 = vsub.s32 0, %v3222
        %v3224 = vrot.slane %v1087, %v3223
        %v3225 = vlaneseq
        %v3226 = vshrl.u32 %v3225, 7
        %v3227 = vsub.s32 0, %v3226
        %v3228 = vrot.slane %v1088, %v3227
        %v3229 = vlaneseq
        %v3230 = vshrl.u32 %v3229, 7
        %v3231 = vsub.s32 0, %v3230
        %v3232 = vrot.slane %v1089, %v3231
        %v3233 = vlaneseq
        %v3234 = vshrl.u32 %v3233, 7
        %v3235 = vsub.s32 0, %v3234
        %v3236 = vrot.slane %v1090, %v3235
        %v3237 = vlaneseq
        %v3238 = vshrl.u32 %v3237, 7
        %v3239 = vsub.s32 0, %v3238
        %v3240 = vrot.slane %v1091, %v3239
        %v3241 = vlaneseq
        %v3242 = vshrl.u32 %v3241, 7
        %v3243 = vsub.s32 0, %v3242
        %v3244 = vrot.slane %v1092, %v3243
        %v3245 = vlaneseq
        %v3246 = vshrl.u32 %v3245, 7
        %v3247 = vsub.s32 0, %v3246
        %v3248 = vrot.slane %v1093, %v3247
        %v3249 = vlaneseq
        %v3250 = vshrl.u32 %v3249, 7
        %v3251 = vsub.s32 0, %v3250
        %v3252 = vrot.slane %v1094, %v3251
        %v3253 = vlaneseq
        %v3254 = vshrl.u32 %v3253, 7
        %v3255 = vsub.s32 0, %v3254
        %v3256 = vrot.slane %v1095, %v3255
        %v3257 = vlaneseq
        %v3258 = vshrl.u32 %v3257, 7
        %v3259 = vsub.s32 0, %v3258
        %v3260 = vrot.slane %v1096, %v3259
        %v3261 = vlaneseq
        %v3262 = vshrl.u32 %v3261, 7
        %v3263 = vsub.s32 0, %v3262
        %v3264 = vrot.slane %v1097, %v3263
        %v3265 = vlaneseq
        %v3266 = vshrl.u32 %v3265, 7
        %v3267 = vsub.s32 0, %v3266
        %v3268 = vrot.slane %v1098, %v3267
        %v3269 = vlaneseq
        %v3270 = vshrl.u32 %v3269, 7
        %v3271 = vsub.s32 0, %v3270
        %v3272 = vrot.slane %v1099, %v3271
        %v3273 = vlaneseq
        %v3274 = vshrl.u32 %v3273, 7
        %v3275 = vsub.s32 0, %v3274
        %v3276 = vrot.slane %v1100, %v3275
        %v3277 = vlaneseq
        %v3278 = vshrl.u32 %v3277, 7
        %v3279 = vsub.s32 0, %v3278
        %v3280 = vrot.slane %v1101, %v3279
        %v3281 = vlaneseq
        %v3282 = vshrl.u32 %v3281, 7
        %v3283 = vsub.s32 0, %v3282
        %v3284 = vrot.slane %v1102, %v3283
        %v3285 = vlaneseq
        %v3286 = vshrl.u32 %v3285, 7
        %v3287 = vsub.s32 0, %v3286
        %v3288 = vrot.slane %v1103, %v3287
        %v3289 = vlaneseq
        %v3290 = vshrl.u32 %v3289, 7
        %v3291 = vsub.s32 0, %v3290
        %v3292 = vrot.slane %v1104, %v3291
        %v3293 = vlaneseq
        %v3294 = vshrl.u32 %v3293, 7
        %v3295 = vsub.s32 0, %v3294
        %v3296 = vrot.slane %v1105, %v3295
        %v3297 = vlaneseq
        %v3298 = vshrl.u32 %v3297, 7
        %v3299 = vsub.s32 0, %v3298
        %v3300 = vrot.slane %v1106, %v3299
        %v3301 = vlaneseq
        %v3302 = vshrl.u32 %v3301, 7
        %v3303 = vsub.s32 0, %v3302
        %v3304 = vrot.slane %v1107, %v3303
        %v3305 = vlaneseq
        %v3306 = vshrl.u32 %v3305, 7
        %v3307 = vsub.s32 0, %v3306
        %v3308 = vrot.slane %v1108, %v3307
        %v3309 = vlaneseq
        %v3310 = vshrl.u32 %v3309, 7
        %v3311 = vsub.s32 0, %v3310
        %v3312 = vrot.slane %v1109, %v3311
        %v3313 = vlaneseq
        %v3314 = vshrl.u32 %v3313, 7
        %v3315 = vsub.s32 0, %v3314
        %v3316 = vrot.slane %v1110, %v3315
        %v3317 = vlaneseq
        %v3318 = vshrl.u32 %v3317, 7
        %v3319 = vsub.s32 0, %v3318
        %v3320 = vrot.slane %v1111, %v3319
        %v3321 = vlaneseq
        %v3322 = vshrl.u32 %v3321, 7
        %v3323 = vsub.s32 0, %v3322
        %v3324 = vrot.slane %v1112, %v3323
        %v3325 = vlaneseq
        %v3326 = vshrl.u32 %v3325, 7
        %v3327 = vsub.s32 0, %v3326
        %v3328 = vrot.slane %v1113, %v3327
        %v3329 = vlaneseq
        %v3330 = vshrl.u32 %v3329, 7
        %v3331 = vsub.s32 0, %v3330
        %v3332 = vrot.slane %v1114, %v3331
        %v3333 = vlaneseq
        %v3334 = vshrl.u32 %v3333, 7
        %v3335 = vsub.s32 0, %v3334
        %v3336 = vrot.slane %v1115, %v3335
        %v3337 = vlaneseq
        %v3338 = vshrl.u32 %v3337, 7
        %v3339 = vsub.s32 0, %v3338
        %v3340 = vrot.slane %v1116, %v3339
        %v3341 = vlaneseq
        %v3342 = vshrl.u32 %v3341, 7
        %v3343 = vsub.s32 0, %v3342
        %v3344 = vrot.slane %v1117, %v3343
        %v3345 = vlaneseq
        %v3346 = vshrl.u32 %v3345, 7
        %v3347 = vsub.s32 0, %v3346
        %v3348 = vrot.slane %v1118, %v3347
        %v3349 = vlaneseq
        %v3350 = vshrl.u32 %v3349, 7
        %v3351 = vsub.s32 0, %v3350
        %v3352 = vrot.slane %v1119, %v3351
        %v3353 = vlaneseq
        %v3354 = vshrl.u32 %v3353, 7
        %v3355 = vsub.s32 0, %v3354
        %v3356 = vrot.slane %v1120, %v3355
        %v3357 = vlaneseq
        %v3358 = vshrl.u32 %v3357, 7
        %v3359 = vsub.s32 0, %v3358
        %v3360 = vrot.slane %v1121, %v3359
        %v3361 = vlaneseq
        %v3362 = vshrl.u32 %v3361, 7
        %v3363 = vsub.s32 0, %v3362
        %v3364 = vrot.slane %v1122, %v3363
        %v3365 = vlaneseq
        %v3366 = vshrl.u32 %v3365, 7
        %v3367 = vsub.s32 0, %v3366
        %v3368 = vrot.slane %v1123, %v3367
        %v3369 = vlaneseq
        %v3370 = vshrl.u32 %v3369, 7
        %v3371 = vsub.s32 0, %v3370
        %v3372 = vrot.slane %v1124, %v3371
        %v3373 = vlaneseq
        %v3374 = vshrl.u32 %v3373, 7
        %v3375 = vsub.s32 0, %v3374
        %v3376 = vrot.slane %v1125, %v3375
        %v3377 = vlaneseq
        %v3378 = vshrl.u32 %v3377, 7
        %v3379 = vsub.s32 0, %v3378
        %v3380 = vrot.slane %v1126, %v3379
        %v3381 = vlaneseq
        %v3382 = vshrl.u32 %v3381, 7
        %v3383 = vsub.s32 0, %v3382
        %v3384 = vrot.slane %v1127, %v3383
        %v3385 = vlaneseq
        %v3386 = vshrl.u32 %v3385, 7
        %v3387 = vsub.s32 0, %v3386
        %v3388 = vrot.slane %v1128, %v3387
        %v3389 = vlaneseq
        %v3390 = vshrl.u32 %v3389, 7
        %v3391 = vsub.s32 0, %v3390
        %v3392 = vrot.slane %v1129, %v3391
        %v3393 = vlaneseq
        %v3394 = vshrl.u32 %v3393, 7
        %v3395 = vsub.s32 0, %v3394
        %v3396 = vrot.slane %v1130, %v3395
        %v3397 = vlaneseq
        %v3398 = vshrl.u32 %v3397, 7
        %v3399 = vsub.s32 0, %v3398
        %v3400 = vrot.slane %v1131, %v3399
        %v3401 = vlaneseq
        %v3402 = vshrl.u32 %v3401, 7
        %v3403 = vsub.s32 0, %v3402
        %v3404 = vrot.slane %v1132, %v3403
        %v3405 = vlaneseq
        %v3406 = vshrl.u32 %v3405, 7
        %v3407 = vsub.s32 0, %v3406
        %v3408 = vrot.slane %v1133, %v3407
        %v3409 = vlaneseq
        %v3410 = vshrl.u32 %v3409, 7
        %v3411 = vsub.s32 0, %v3410
        %v3412 = vrot.slane %v1134, %v3411
        %v3413 = vlaneseq
        %v3414 = vshrl.u32 %v3413, 7
        %v3415 = vsub.s32 0, %v3414
        %v3416 = vrot.slane %v1135, %v3415
        %v3417 = vlaneseq
        %v3418 = vshrl.u32 %v3417, 7
        %v3419 = vsub.s32 0, %v3418
        %v3420 = vrot.slane %v1136, %v3419
        %v3421 = vlaneseq
        %v3422 = vshrl.u32 %v3421, 7
        %v3423 = vsub.s32 0, %v3422
        %v3424 = vrot.slane %v1137, %v3423
        %v3425 = vlaneseq
        %v3426 = vshrl.u32 %v3425, 7
        %v3427 = vsub.s32 0, %v3426
        %v3428 = vrot.slane %v1138, %v3427
        %v3429 = vlaneseq
        %v3430 = vshrl.u32 %v3429, 7
        %v3431 = vsub.s32 0, %v3430
        %v3432 = vrot.slane %v1139, %v3431
        %v3433 = vlaneseq
        %v3434 = vshrl.u32 %v3433, 7
        %v3435 = vsub.s32 0, %v3434
        %v3436 = vrot.slane %v1140, %v3435
        %v3437 = vlaneseq
        %v3438 = vshrl.u32 %v3437, 7
        %v3439 = vsub.s32 0, %v3438
        %v3440 = vrot.slane %v1141, %v3439
        %v3441 = vlaneseq
        %v3442 = vshrl.u32 %v3441, 7
        %v3443 = vsub.s32 0, %v3442
        %v3444 = vrot.slane %v1142, %v3443
        %v3445 = vlaneseq
        %v3446 = vshrl.u32 %v3445, 7
        %v3447 = vsub.s32 0, %v3446
        %v3448 = vrot.slane %v1143, %v3447
        %v3449 = vlaneseq
        %v3450 = vshrl.u32 %v3449, 7
        %v3451 = vsub.s32 0, %v3450
        %v3452 = vrot.slane %v1144, %v3451
        %v3453 = vlaneseq
        %v3454 = vshrl.u32 %v3453, 7
        %v3455 = vsub.s32 0, %v3454
        %v3456 = vrot.slane %v1145, %v3455
        %v3457 = vlaneseq
        %v3458 = vshrl.u32 %v3457, 7
        %v3459 = vsub.s32 0, %v3458
        %v3460 = vrot.slane %v1146, %v3459
        %v3461 = vlaneseq
        %v3462 = vshrl.u32 %v3461, 7
        %v3463 = vsub.s32 0, %v3462
        %v3464 = vrot.slane %v1147, %v3463
        %v3465 = vlaneseq
        %v3466 = vshrl.u32 %v3465, 7
        %v3467 = vsub.s32 0, %v3466
        %v3468 = vrot.slane %v1148, %v3467
        %v3469 = vlaneseq
        %v3470 = vshrl.u32 %v3469, 7
        %v3471 = vsub.s32 0, %v3470
        %v3472 = vrot.slane %v1149, %v3471
        %v3473 = vlaneseq
        %v3474 = vshrl.u32 %v3473, 7
        %v3475 = vsub.s32 0, %v3474
        %v3476 = vrot.slane %v1150, %v3475
        %v3477 = vlaneseq
        %v3478 = vshrl.u32 %v3477, 7
        %v3479 = vsub.s32 0, %v3478
        %v3480 = vrot.slane %v1151, %v3479
        %v3481 = vlaneseq
        %v3482 = vshrl.u32 %v3481, 7
        %v3483 = vsub.s32 0, %v3482
        %v3484 = vrot.slane %v1152, %v3483
        %v3485 = vlaneseq
        %v3486 = vshrl.u32 %v3485, 7
        %v3487 = vsub.s32 0, %v3486
        %v3488 = vrot.slane %v1153, %v3487
        %v3489 = vlaneseq
        %v3490 = vshrl.u32 %v3489, 7
        %v3491 = vsub.s32 0, %v3490
        %v3492 = vrot.slane %v1154, %v3491
        %v3493 = vlaneseq
        %v3494 = vshrl.u32 %v3493, 7
        %v3495 = vsub.s32 0, %v3494
        %v3496 = vrot.slane %v1155, %v3495
        %v3497 = vlaneseq
        %v3498 = vshrl.u32 %v3497, 7
        %v3499 = vsub.s32 0, %v3498
        %v3500 = vrot.slane %v1156, %v3499
        %v3501 = vlaneseq
        %v3502 = vshrl.u32 %v3501, 7
        %v3503 = vsub.s32 0, %v3502
        %v3504 = vrot.slane %v1157, %v3503
        %v3505 = vlaneseq
        %v3506 = vshrl.u32 %v3505, 7
        %v3507 = vsub.s32 0, %v3506
        %v3508 = vrot.slane %v1158, %v3507
        %v3509 = vlaneseq
        %v3510 = vshrl.u32 %v3509, 7
        %v3511 = vsub.s32 0, %v3510
        %v3512 = vrot.slane %v1159, %v3511
        %v3513 = vlaneseq
        %v3514 = vshrl.u32 %v3513, 7
        %v3515 = vsub.s32 0, %v3514
        %v3516 = vrot.slane %v1160, %v3515
        %v3517 = vlaneseq
        %v3518 = vshrl.u32 %v3517, 7
        %v3519 = vsub.s32 0, %v3518
        %v3520 = vrot.slane %v1161, %v3519
        %v3521 = vlaneseq
        %v3522 = vshrl.u32 %v3521, 7
        %v3523 = vsub.s32 0, %v3522
        %v3524 = vrot.slane %v1162, %v3523
        %v3525 = vlaneseq
        %v3526 = vshrl.u32 %v3525, 7
        %v3527 = vsub.s32 0, %v3526
        %v3528 = vrot.slane %v1163, %v3527
        %v3529 = vlaneseq
        %v3530 = vshrl.u32 %v3529, 7
        %v3531 = vsub.s32 0, %v3530
        %v3532 = vrot.slane %v1164, %v3531
        %v3533 = vlaneseq
        %v3534 = vshrl.u32 %v3533, 7
        %v3535 = vsub.s32 0, %v3534
        %v3536 = vrot.slane %v1165, %v3535
        %v3537 = vlaneseq
        %v3538 = vshrl.u32 %v3537, 7
        %v3539 = vsub.s32 0, %v3538
        %v3540 = vrot.slane %v1166, %v3539
        %v3541 = vlaneseq
        %v3542 = vshrl.u32 %v3541, 7
        %v3543 = vsub.s32 0, %v3542
        %v3544 = vrot.slane %v1167, %v3543
        %v3545 = vlaneseq
        %v3546 = vshrl.u32 %v3545, 7
        %v3547 = vsub.s32 0, %v3546
        %v3548 = vrot.slane %v1168, %v3547
        %v3549 = vlaneseq
        %v3550 = vshrl.u32 %v3549, 7
        %v3551 = vsub.s32 0, %v3550
        %v3552 = vrot.slane %v1169, %v3551
        %v3553 = vlaneseq
        %v3554 = vshrl.u32 %v3553, 7
        %v3555 = vsub.s32 0, %v3554
        %v3556 = vrot.slane %v1170, %v3555
        %v3557 = vlaneseq
        %v3558 = vshrl.u32 %v3557, 7
        %v3559 = vsub.s32 0, %v3558
        %v3560 = vrot.slane %v1171, %v3559
        %v3561 = vlaneseq
        %v3562 = vshrl.u32 %v3561, 7
        %v3563 = vsub.s32 0, %v3562
        %v3564 = vrot.slane %v1172, %v3563
        %v3565 = vlaneseq
        %v3566 = vshrl.u32 %v3565, 7
        %v3567 = vsub.s32 0, %v3566
        %v3568 = vrot.slane %v1173, %v3567
        %v3569 = vlaneseq
        %v3570 = vshrl.u32 %v3569, 7
        %v3571 = vsub.s32 0, %v3570
        %v3572 = vrot.slane %v1174, %v3571
        %v3573 = vlaneseq
        %v3574 = vshrl.u32 %v3573, 7
        %v3575 = vsub.s32 0, %v3574
        %v3576 = vrot.slane %v1175, %v3575
        %v3577 = vlaneseq
        %v3578 = vshrl.u32 %v3577, 7
        %v3579 = vsub.s32 0, %v3578
        %v3580 = vrot.slane %v1176, %v3579
        %v3581 = vlaneseq
        %v3582 = vshrl.u32 %v3581, 7
        %v3583 = vsub.s32 0, %v3582
        %v3584 = vrot.slane %v1177, %v3583
        %v3585 = vlaneseq
        %v3586 = vshrl.u32 %v3585, 7
        %v3587 = vsub.s32 0, %v3586
        %v3588 = vrot.slane %v1178, %v3587
        %v3589 = vlaneseq
        %v3590 = vshrl.u32 %v3589, 7
        %v3591 = vsub.s32 0, %v3590
        %v3592 = vrot.slane %v1179, %v3591
        %v3593 = vlaneseq
        %v3594 = vshrl.u32 %v3593, 7
        %v3595 = vsub.s32 0, %v3594
        %v3596 = vrot.slane %v1180, %v3595
        %v3597 = vlaneseq
        %v3598 = vshrl.u32 %v3597, 7
        %v3599 = vsub.s32 0, %v3598
        %v3600 = vrot.slane %v1181, %v3599
        %v3601 = vlaneseq
        %v3602 = vshrl.u32 %v3601, 7
        %v3603 = vsub.s32 0, %v3602
        %v3604 = vrot.slane %v1182, %v3603
        %v3605 = vlaneseq
        %v3606 = vshrl.u32 %v3605, 7
        %v3607 = vsub.s32 0, %v3606
        %v3608 = vrot.slane %v1183, %v3607
        %v3609 = vlaneseq
        %v3610 = vshrl.u32 %v3609, 7
        %v3611 = vsub.s32 0, %v3610
        %v3612 = vrot.slane %v1184, %v3611
        %v3613 = vlaneseq
        %v3614 = vshrl.u32 %v3613, 7
        %v3615 = vsub.s32 0, %v3614
        %v3616 = vrot.slane %v1185, %v3615
        %v3617 = vlaneseq
        %v3618 = vshrl.u32 %v3617, 7
        %v3619 = vsub.s32 0, %v3618
        %v3620 = vrot.slane %v1186, %v3619
        %v3621 = vlaneseq
        %v3622 = vshrl.u32 %v3621, 7
        %v3623 = vsub.s32 0, %v3622
        %v3624 = vrot.slane %v1187, %v3623
        %v3625 = vlaneseq
        %v3626 = vshrl.u32 %v3625, 7
        %v3627 = vsub.s32 0, %v3626
        %v3628 = vrot.slane %v1188, %v3627
        %v3629 = vlaneseq
        %v3630 = vshrl.u32 %v3629, 7
        %v3631 = vsub.s32 0, %v3630
        %v3632 = vrot.slane %v1189, %v3631
        %v3633 = vlaneseq
        %v3634 = vshrl.u32 %v3633, 7
        %v3635 = vsub.s32 0, %v3634
        %v3636 = vrot.slane %v1190, %v3635
        %v3637 = vlaneseq
        %v3638 = vshrl.u32 %v3637, 7
        %v3639 = vsub.s32 0, %v3638
        %v3640 = vrot.slane %v1191, %v3639
        %v3641 = vlaneseq
        %v3642 = vshrl.u32 %v3641, 7
        %v3643 = vsub.s32 0, %v3642
        %v3644 = vrot.slane %v1192, %v3643
        %v3645 = vlaneseq
        %v3646 = vshrl.u32 %v3645, 7
        %v3647 = vsub.s32 0, %v3646
        %v3648 = vrot.slane %v1193, %v3647
        %v3649 = vlaneseq
        %v3650 = vshrl.u32 %v3649, 7
        %v3651 = vsub.s32 0, %v3650
        %v3652 = vrot.slane %v1194, %v3651
        %v3653 = vlaneseq
        %v3654 = vshrl.u32 %v3653, 7
        %v3655 = vsub.s32 0, %v3654
        %v3656 = vrot.slane %v1195, %v3655
        %v3657 = vlaneseq
        %v3658 = vshrl.u32 %v3657, 7
        %v3659 = vsub.s32 0, %v3658
        %v3660 = vrot.slane %v1196, %v3659
        %v3661 = vlaneseq
        %v3662 = vshrl.u32 %v3661, 7
        %v3663 = vsub.s32 0, %v3662
        %v3664 = vrot.slane %v1197, %v3663
        %v3665 = vlaneseq
        %v3666 = vshrl.u32 %v3665, 7
        %v3667 = vsub.s32 0, %v3666
        %v3668 = vrot.slane %v1198, %v3667
        %v3669 = vlaneseq
        %v3670 = vshrl.u32 %v3669, 7
        %v3671 = vsub.s32 0, %v3670
        %v3672 = vrot.slane %v1199, %v3671
        %v3673 = vlaneseq
        %v3674 = vshrl.u32 %v3673, 7
        %v3675 = vsub.s32 0, %v3674
        %v3676 = vrot.slane %v1200, %v3675
        %v3677 = vlaneseq
        %v3678 = vshrl.u32 %v3677, 7
        %v3679 = vsub.s32 0, %v3678
        %v3680 = vrot.slane %v1201, %v3679
        %v3681 = vlaneseq
        %v3682 = vshrl.u32 %v3681, 7
        %v3683 = vsub.s32 0, %v3682
        %v3684 = vrot.slane %v1202, %v3683
        %v3685 = vlaneseq
        %v3686 = vshrl.u32 %v3685, 7
        %v3687 = vsub.s32 0, %v3686
        %v3688 = vrot.slane %v1203, %v3687
        %v3689 = vlaneseq
        %v3690 = vshrl.u32 %v3689, 7
        %v3691 = vsub.s32 0, %v3690
        %v3692 = vrot.slane %v1204, %v3691
        %v3693 = vlaneseq
        %v3694 = vshrl.u32 %v3693, 7
        %v3695 = vsub.s32 0, %v3694
        %v3696 = vrot.slane %v1205, %v3695
        %v3697 = vlaneseq
        %v3698 = vshrl.u32 %v3697, 7
        %v3699 = vsub.s32 0, %v3698
        %v3700 = vrot.slane %v1206, %v3699
        %v3701 = vlaneseq
        %v3702 = vshrl.u32 %v3701, 7
        %v3703 = vsub.s32 0, %v3702
        %v3704 = vrot.slane %v1207, %v3703
        %v3705 = vlaneseq
        %v3706 = vshrl.u32 %v3705, 7
        %v3707 = vsub.s32 0, %v3706
        %v3708 = vrot.slane %v1208, %v3707
        %v3709 = vlaneseq
        %v3710 = vshrl.u32 %v3709, 7
        %v3711 = vsub.s32 0, %v3710
        %v3712 = vrot.slane %v1209, %v3711
        %v3713 = vlaneseq
        %v3714 = vshrl.u32 %v3713, 7
        %v3715 = vsub.s32 0, %v3714
        %v3716 = vrot.slane %v1210, %v3715
        %v3717 = vlaneseq
        %v3718 = vshrl.u32 %v3717, 7
        %v3719 = vsub.s32 0, %v3718
        %v3720 = vrot.slane %v1211, %v3719
        %v3721 = vlaneseq
        %v3722 = vshrl.u32 %v3721, 7
        %v3723 = vsub.s32 0, %v3722
        %v3724 = vrot.slane %v1212, %v3723
        %v3725 = vlaneseq
        %v3726 = vshrl.u32 %v3725, 7
        %v3727 = vsub.s32 0, %v3726
        %v3728 = vrot.slane %v1213, %v3727
        %v3729 = vlaneseq
        %v3730 = vshrl.u32 %v3729, 7
        %v3731 = vsub.s32 0, %v3730
        %v3732 = vrot.slane %v1214, %v3731
        %v3733 = vlaneseq
        %v3734 = vshrl.u32 %v3733, 7
        %v3735 = vsub.s32 0, %v3734
        %v3736 = vrot.slane %v1215, %v3735
        %v3737 = vlaneseq
        %v3738 = vshrl.u32 %v3737, 7
        %v3739 = vsub.s32 0, %v3738
        %v3740 = vrot.slane %v1216, %v3739
        %v3741 = vlaneseq
        %v3742 = vshrl.u32 %v3741, 7
        %v3743 = vsub.s32 0, %v3742
        %v3744 = vrot.slane %v1217, %v3743
        %v3745 = vlaneseq
        %v3746 = vshrl.u32 %v3745, 7
        %v3747 = vsub.s32 0, %v3746
        %v3748 = vrot.slane %v1218, %v3747
        %v3749 = vlaneseq
        %v3750 = vshrl.u32 %v3749, 7
        %v3751 = vsub.s32 0, %v3750
        %v3752 = vrot.slane %v1219, %v3751
        %v3753 = vlaneseq
        %v3754 = vshrl.u32 %v3753, 7
        %v3755 = vsub.s32 0, %v3754
        %v3756 = vrot.slane %v1220, %v3755
        %v3757 = vlaneseq
        %v3758 = vshrl.u32 %v3757, 7
        %v3759 = vsub.s32 0, %v3758
        %v3760 = vrot.slane %v1221, %v3759
        %v3761 = vlaneseq
        %v3762 = vshrl.u32 %v3761, 7
        %v3763 = vsub.s32 0, %v3762
        %v3764 = vrot.slane %v1222, %v3763
        %v3765 = vlaneseq
        %v3766 = vshrl.u32 %v3765, 7
        %v3767 = vsub.s32 0, %v3766
        %v3768 = vrot.slane %v1223, %v3767
        %v3769 = vlaneseq
        %v3770 = vshrl.u32 %v3769, 7
        %v3771 = vsub.s32 0, %v3770
        %v3772 = vrot.slane %v1224, %v3771
        %v3773 = vlaneseq
        %v3774 = vshrl.u32 %v3773, 7
        %v3775 = vsub.s32 0, %v3774
        %v3776 = vrot.slane %v1225, %v3775
        %v3777 = vlaneseq
        %v3778 = vshrl.u32 %v3777, 7
        %v3779 = vsub.s32 0, %v3778
        %v3780 = vrot.slane %v1226, %v3779
        %v3781 = vlaneseq
        %v3782 = vshrl.u32 %v3781, 7
        %v3783 = vsub.s32 0, %v3782
        %v3784 = vrot.slane %v1227, %v3783
        %v3785 = vlaneseq
        %v3786 = vshrl.u32 %v3785, 7
        %v3787 = vsub.s32 0, %v3786
        %v3788 = vrot.slane %v1228, %v3787
        %v4301 = vadd.f32 %v205, %v1744
        %v4302 = vadd.f32 %v206, %v1748
        %v4303 = vadd.f32 %v207, %v1752
        %v4304 = vadd.f32 %v208, %v1756
        %v4305 = vadd.f32 %v209, %v1760
        %v4306 = vadd.f32 %v210, %v1764
        %v4307 = vadd.f32 %v211, %v1768
        %v4308 = vadd.f32 %v212, %v1772
        %v4309 = vadd.f32 %v213, %v1776
        %v4310 = vadd.f32 %v214, %v1780
        %v4311 = vadd.f32 %v215, %v1784
        %v4312 = vadd.f32 %v216, %v1788
        %v4313 = vadd.f32 %v217, %v1792
        %v4314 = vadd.f32 %v218, %v1796
        %v4315 = vadd.f32 %v219, %v1800
        %v4316 = vadd.f32 %v220, %v1804
        %v4317 = vadd.f32 %v221, %v1808
        %v4318 = vadd.f32 %v222, %v1812
        %v4319 = vadd.f32 %v223, %v1816
        %v4320 = vadd.f32 %v224, %v1820
        %v4321 = vadd.f32 %v225, %v1824
        %v4322 = vadd.f32 %v226, %v1828
        %v4323 = vadd.f32 %v227, %v1832
        %v4324 = vadd.f32 %v228, %v1836
        %v4325 = vadd.f32 %v229, %v1840
        %v4326 = vadd.f32 %v230, %v1844
        %v4327 = vadd.f32 %v231, %v1848
        %v4328 = vadd.f32 %v232, %v1852
        %v4329 = vadd.f32 %v233, %v1856
        %v4330 = vadd.f32 %v234, %v1860
        %v4331 = vadd.f32 %v235, %v1864
        %v4332 = vadd.f32 %v236, %v1868
        %v4333 = vadd.f32 %v237, %v1872
        %v4334 = vadd.f32 %v238, %v1876
        %v4335 = vadd.f32 %v239, %v1880
        %v4336 = vadd.f32 %v240, %v1884
        %v4337 = vadd.f32 %v241, %v1888
        %v4338 = vadd.f32 %v242, %v1892
        %v4339 = vadd.f32 %v243, %v1896
        %v4340 = vadd.f32 %v244, %v1900
        %v4341 = vadd.f32 %v245, %v1904
        %v4342 = vadd.f32 %v246, %v1908
        %v4343 = vadd.f32 %v247, %v1912
        %v4344 = vadd.f32 %v248, %v1916
        %v4345 = vadd.f32 %v249, %v1920
        %v4346 = vadd.f32 %v250, %v1924
        %v4347 = vadd.f32 %v251, %v1928
        %v4348 = vadd.f32 %v252, %v1932
        %v4349 = vadd.f32 %v253, %v1936
        %v4350 = vadd.f32 %v254, %v1940
        %v4351 = vadd.f32 %v255, %v1944
        %v4352 = vadd.f32 %v256, %v1948
        %v4353 = vadd.f32 %v257, %v1952
        %v4354 = vadd.f32 %v258, %v1956
        %v4355 = vadd.f32 %v259, %v1960
        %v4356 = vadd.f32 %v260, %v1964
        %v4357 = vadd.f32 %v261, %v1968
        %v4358 = vadd.f32 %v262, %v1972
        %v4359 = vadd.f32 %v263, %v1976
        %v4360 = vadd.f32 %v264, %v1980
        %v4361 = vadd.f32 %v265, %v1984
        %v4362 = vadd.f32 %v266, %v1988
        %v4363 = vadd.f32 %v267, %v1992
        %v4364 = vadd.f32 %v268, %v1996
        %v4365 = vadd.f32 %v269, %v2000
        %v4366 = vadd.f32 %v270, %v2004
        %v4367 = vadd.f32 %v271, %v2008
        %v4368 = vadd.f32 %v272, %v2012
        %v4369 = vadd.f32 %v273, %v2016
        %v4370 = vadd.f32 %v274, %v2020
        %v4371 = vadd.f32 %v275, %v2024
        %v4372 = vadd.f32 %v276, %v2028
        %v4373 = vadd.f32 %v277, %v2032
        %v4374 = vadd.f32 %v278, %v2036
        %v4375 = vadd.f32 %v279, %v2040
        %v4376 = vadd.f32 %v280, %v2044
        %v4377 = vadd.f32 %v281, %v2048
        %v4378 = vadd.f32 %v282, %v2052
        %v4379 = vadd.f32 %v283, %v2056
        %v4380 = vadd.f32 %v284, %v2060
        %v4381 = vadd.f32 %v285, %v2064
        %v4382 = vadd.f32 %v286, %v2068
        %v4383 = vadd.f32 %v287, %v2072
        %v4384 = vadd.f32 %v288, %v2076
        %v4385 = vadd.f32 %v289, %v2080
        %v4386 = vadd.f32 %v290, %v2084
        %v4387 = vadd.f32 %v291, %v2088
        %v4388 = vadd.f32 %v292, %v2092
        %v4389 = vadd.f32 %v293, %v2096
        %v4390 = vadd.f32 %v294, %v2100
        %v4391 = vadd.f32 %v295, %v2104
        %v4392 = vadd.f32 %v296, %v2108
        %v4393 = vadd.f32 %v297, %v2112
        %v4394 = vadd.f32 %v298, %v2116
        %v4395 = vadd.f32 %v299, %v2120
        %v4396 = vadd.f32 %v300, %v2124
        %v4397 = vadd.f32 %v301, %v2128
        %v4398 = vadd.f32 %v302, %v2132
        %v4399 = vadd.f32 %v303, %v2136
        %v4400 = vadd.f32 %v304, %v2140
        %v4401 = vadd.f32 %v305, %v2144
        %v4402 = vadd.f32 %v306, %v2148
        %v4403 = vadd.f32 %v307, %v2152
        %v4404 = vadd.f32 %v308, %v2156
        %v4405 = vadd.f32 %v309, %v2160
        %v4406 = vadd.f32 %v310, %v2164
        %v4407 = vadd.f32 %v311, %v2168
        %v4408 = vadd.f32 %v312, %v2172
        %v4409 = vadd.f32 %v313, %v2176
        %v4410 = vadd.f32 %v314, %v2180
        %v4411 = vadd.f32 %v315, %v2184
        %v4412 = vadd.f32 %v316, %v2188
        %v4413 = vadd.f32 %v317, %v2192
        %v4414 = vadd.f32 %v318, %v2196
        %v4415 = vadd.f32 %v319, %v2200
        %v4416 = vadd.f32 %v320, %v2204
        %v4417 = vadd.f32 %v321, %v2208
        %v4418 = vadd.f32 %v322, %v2212
        %v4419 = vadd.f32 %v323, %v2216
        %v4420 = vadd.f32 %v324, %v2220
        %v4421 = vadd.f32 %v325, %v2224
        %v4422 = vadd.f32 %v326, %v2228
        %v4423 = vadd.f32 %v327, %v2232
        %v4424 = vadd.f32 %v328, %v2236
        %v4425 = vadd.f32 %v329, %v2240
        %v4426 = vadd.f32 %v330, %v2244
        %v4427 = vadd.f32 %v331, %v2248
        %v4428 = vadd.f32 %v332, %v2252
        %v4429 = vadd.f32 %v333, %v2256
        %v4430 = vadd.f32 %v334, %v2260
        %v4431 = vadd.f32 %v335, %v2264
        %v4432 = vadd.f32 %v336, %v2268
        %v4433 = vadd.f32 %v337, %v2272
        %v4434 = vadd.f32 %v338, %v2276
        %v4435 = vadd.f32 %v339, %v2280
        %v4436 = vadd.f32 %v340, %v2284
        %v4437 = vadd.f32 %v341, %v2288
        %v4438 = vadd.f32 %v342, %v2292
        %v4439 = vadd.f32 %v343, %v2296
        %v4440 = vadd.f32 %v344, %v2300
        %v4441 = vadd.f32 %v345, %v2304
        %v4442 = vadd.f32 %v346, %v2308
        %v4443 = vadd.f32 %v347, %v2312
        %v4444 = vadd.f32 %v348, %v2316
        %v4445 = vadd.f32 %v349, %v2320
        %v4446 = vadd.f32 %v350, %v2324
        %v4447 = vadd.f32 %v351, %v2328
        %v4448 = vadd.f32 %v352, %v2332
        %v4449 = vadd.f32 %v353, %v2336
        %v4450 = vadd.f32 %v354, %v2340
        %v4451 = vadd.f32 %v355, %v2344
        %v4452 = vadd.f32 %v356, %v2348
        %v4453 = vadd.f32 %v357, %v2352
        %v4454 = vadd.f32 %v358, %v2356
        %v4455 = vadd.f32 %v359, %v2360
        %v4456 = vadd.f32 %v360, %v2364
        %v4457 = vadd.f32 %v361, %v2368
        %v4458 = vadd.f32 %v362, %v2372
        %v4459 = vadd.f32 %v363, %v2376
        %v4460 = vadd.f32 %v364, %v2380
        %v4461 = vadd.f32 %v365, %v2384
        %v4462 = vadd.f32 %v366, %v2388
        %v4463 = vadd.f32 %v367, %v2392
        %v4464 = vadd.f32 %v368, %v2396
        %v4465 = vadd.f32 %v369, %v2400
        %v4466 = vadd.f32 %v370, %v2404
        %v4467 = vadd.f32 %v371, %v2408
        %v4468 = vadd.f32 %v372, %v2412
        %v4469 = vadd.f32 %v373, %v2416
        %v4470 = vadd.f32 %v374, %v2420
        %v4471 = vadd.f32 %v375, %v2424
        %v4472 = vadd.f32 %v376, %v2428
        %v4473 = vadd.f32 %v377, %v2432
        %v4474 = vadd.f32 %v378, %v2436
        %v4475 = vadd.f32 %v379, %v2440
        %v4476 = vadd.f32 %v380, %v2444
        %v4477 = vadd.f32 %v381, %v2448
        %v4478 = vadd.f32 %v382, %v2452
        %v4479 = vadd.f32 %v383, %v2456
        %v4480 = vadd.f32 %v384, %v2460
        %v4481 = vadd.f32 %v385, %v2464
        %v4482 = vadd.f32 %v386, %v2468
        %v4483 = vadd.f32 %v387, %v2472
        %v4484 = vadd.f32 %v388, %v2476
        %v4485 = vadd.f32 %v389, %v2480
        %v4486 = vadd.f32 %v390, %v2484
        %v4487 = vadd.f32 %v391, %v2488
        %v4488 = vadd.f32 %v392, %v2492
        %v4489 = vadd.f32 %v393, %v2496
        %v4490 = vadd.f32 %v394, %v2500
        %v4491 = vadd.f32 %v395, %v2504
        %v4492 = vadd.f32 %v396, %v2508
        %v4493 = vadd.f32 %v397, %v2512
        %v4494 = vadd.f32 %v398, %v2516
        %v4495 = vadd.f32 %v399, %v2520
        %v4496 = vadd.f32 %v400, %v2524
        %v4497 = vadd.f32 %v401, %v2528
        %v4498 = vadd.f32 %v402, %v2532
        %v4499 = vadd.f32 %v403, %v2536
        %v4500 = vadd.f32 %v404, %v2540
        %v4501 = vadd.f32 %v405, %v2544
        %v4502 = vadd.f32 %v406, %v2548
        %v4503 = vadd.f32 %v407, %v2552
        %v4504 = vadd.f32 %v408, %v2556
        %v4505 = vadd.f32 %v409, %v2560
        %v4506 = vadd.f32 %v410, %v2564
        %v4507 = vadd.f32 %v411, %v2568
        %v4508 = vadd.f32 %v412, %v2572
        %v4509 = vadd.f32 %v413, %v2576
        %v4510 = vadd.f32 %v414, %v2580
        %v4511 = vadd.f32 %v415, %v2584
        %v4512 = vadd.f32 %v416, %v2588
        %v4513 = vadd.f32 %v417, %v2592
        %v4514 = vadd.f32 %v418, %v2596
        %v4515 = vadd.f32 %v419, %v2600
        %v4516 = vadd.f32 %v420, %v2604
        %v4517 = vadd.f32 %v421, %v2608
        %v4518 = vadd.f32 %v422, %v2612
        %v4519 = vadd.f32 %v423, %v2616
        %v4520 = vadd.f32 %v424, %v2620
        %v4521 = vadd.f32 %v425, %v2624
        %v4522 = vadd.f32 %v426, %v2628
        %v4523 = vadd.f32 %v427, %v2632
        %v4524 = vadd.f32 %v428, %v2636
        %v4525 = vadd.f32 %v429, %v2640
        %v4526 = vadd.f32 %v430, %v2644
        %v4527 = vadd.f32 %v431, %v2648
        %v4528 = vadd.f32 %v432, %v2652
        %v4529 = vadd.f32 %v433, %v2656
        %v4530 = vadd.f32 %v434, %v2660
        %v4531 = vadd.f32 %v435, %v2664
        %v4532 = vadd.f32 %v436, %v2668
        %v4533 = vadd.f32 %v437, %v2672
        %v4534 = vadd.f32 %v438, %v2676
        %v4535 = vadd.f32 %v439, %v2680
        %v4536 = vadd.f32 %v440, %v2684
        %v4537 = vadd.f32 %v441, %v2688
        %v4538 = vadd.f32 %v442, %v2692
        %v4539 = vadd.f32 %v443, %v2696
        %v4540 = vadd.f32 %v444, %v2700
        %v4541 = vadd.f32 %v445, %v2704
        %v4542 = vadd.f32 %v446, %v2708
        %v4543 = vadd.f32 %v447, %v2712
        %v4544 = vadd.f32 %v448, %v2716
        %v4545 = vadd.f32 %v449, %v2720
        %v4546 = vadd.f32 %v450, %v2724
        %v4547 = vadd.f32 %v451, %v2728
        %v4548 = vadd.f32 %v452, %v2732
        %v4549 = vadd.f32 %v453, %v2736
        %v4550 = vadd.f32 %v454, %v2740
        %v4551 = vadd.f32 %v455, %v2744
        %v4552 = vadd.f32 %v456, %v2748
        %v4553 = vadd.f32 %v457, %v2752
        %v4554 = vadd.f32 %v458, %v2756
        %v4555 = vadd.f32 %v459, %v2760
        %v4556 = vadd.f32 %v460, %v2764
        %v4557 = vadd.f32 %v461, %v2768
        %v4558 = vadd.f32 %v462, %v2772
        %v4559 = vadd.f32 %v463, %v2776
        %v4560 = vadd.f32 %v464, %v2780
        %v4561 = vadd.f32 %v465, %v2784
        %v4562 = vadd.f32 %v466, %v2788
        %v4563 = vadd.f32 %v467, %v2792
        %v4564 = vadd.f32 %v468, %v2796
        %v4565 = vadd.f32 %v469, %v2800
        %v4566 = vadd.f32 %v470, %v2804
        %v4567 = vadd.f32 %v471, %v2808
        %v4568 = vadd.f32 %v472, %v2812
        %v4569 = vadd.f32 %v473, %v2816
        %v4570 = vadd.f32 %v474, %v2820
        %v4571 = vadd.f32 %v475, %v2824
        %v4572 = vadd.f32 %v476, %v2828
        %v4573 = vadd.f32 %v477, %v2832
        %v4574 = vadd.f32 %v478, %v2836
        %v4575 = vadd.f32 %v479, %v2840
        %v4576 = vadd.f32 %v480, %v2844
        %v4577 = vadd.f32 %v481, %v2848
        %v4578 = vadd.f32 %v482, %v2852
        %v4579 = vadd.f32 %v483, %v2856
        %v4580 = vadd.f32 %v484, %v2860
        %v4581 = vadd.f32 %v485, %v2864
        %v4582 = vadd.f32 %v486, %v2868
        %v4583 = vadd.f32 %v487, %v2872
        %v4584 = vadd.f32 %v488, %v2876
        %v4585 = vadd.f32 %v489, %v2880
        %v4586 = vadd.f32 %v490, %v2884
        %v4587 = vadd.f32 %v491, %v2888
        %v4588 = vadd.f32 %v492, %v2892
        %v4589 = vadd.f32 %v493, %v2896
        %v4590 = vadd.f32 %v494, %v2900
        %v4591 = vadd.f32 %v495, %v2904
        %v4592 = vadd.f32 %v496, %v2908
        %v4593 = vadd.f32 %v497, %v2912
        %v4594 = vadd.f32 %v498, %v2916
        %v4595 = vadd.f32 %v499, %v2920
        %v4596 = vadd.f32 %v500, %v2924
        %v4597 = vadd.f32 %v501, %v2928
        %v4598 = vadd.f32 %v502, %v2932
        %v4599 = vadd.f32 %v503, %v2936
        %v4600 = vadd.f32 %v504, %v2940
        %v4601 = vadd.f32 %v505, %v2944
        %v4602 = vadd.f32 %v506, %v2948
        %v4603 = vadd.f32 %v507, %v2952
        %v4604 = vadd.f32 %v508, %v2956
        %v4605 = vadd.f32 %v509, %v2960
        %v4606 = vadd.f32 %v510, %v2964
        %v4607 = vadd.f32 %v511, %v2968
        %v4608 = vadd.f32 %v512, %v2972
        %v4609 = vadd.f32 %v513, %v2976
        %v4610 = vadd.f32 %v514, %v2980
        %v4611 = vadd.f32 %v515, %v2984
        %v4612 = vadd.f32 %v516, %v2988
        %v4613 = vadd.f32 %v517, %v2992
        %v4614 = vadd.f32 %v518, %v2996
        %v4615 = vadd.f32 %v519, %v3000
        %v4616 = vadd.f32 %v520, %v3004
        %v4617 = vadd.f32 %v521, %v3008
        %v4618 = vadd.f32 %v522, %v3012
        %v4619 = vadd.f32 %v523, %v3016
        %v4620 = vadd.f32 %v524, %v3020
        %v4621 = vadd.f32 %v525, %v3024
        %v4622 = vadd.f32 %v526, %v3028
        %v4623 = vadd.f32 %v527, %v3032
        %v4624 = vadd.f32 %v528, %v3036
        %v4625 = vadd.f32 %v529, %v3040
        %v4626 = vadd.f32 %v530, %v3044
        %v4627 = vadd.f32 %v531, %v3048
        %v4628 = vadd.f32 %v532, %v3052
        %v4629 = vadd.f32 %v533, %v3056
        %v4630 = vadd.f32 %v534, %v3060
        %v4631 = vadd.f32 %v535, %v3064
        %v4632 = vadd.f32 %v536, %v3068
        %v4633 = vadd.f32 %v537, %v3072
        %v4634 = vadd.f32 %v538, %v3076
        %v4635 = vadd.f32 %v539, %v3080
        %v4636 = vadd.f32 %v540, %v3084
        %v4637 = vadd.f32 %v541, %v3088
        %v4638 = vadd.f32 %v542, %v3092
        %v4639 = vadd.f32 %v543, %v3096
        %v4640 = vadd.f32 %v544, %v3100
        %v4641 = vadd.f32 %v545, %v3104
        %v4642 = vadd.f32 %v546, %v3108
        %v4643 = vadd.f32 %v547, %v3112
        %v4644 = vadd.f32 %v548, %v3116
        %v4645 = vadd.f32 %v549, %v3120
        %v4646 = vadd.f32 %v550, %v3124
        %v4647 = vadd.f32 %v551, %v3128
        %v4648 = vadd.f32 %v552, %v3132
        %v4649 = vadd.f32 %v553, %v3136
        %v4650 = vadd.f32 %v554, %v3140
        %v4651 = vadd.f32 %v555, %v3144
        %v4652 = vadd.f32 %v556, %v3148
        %v4653 = vadd.f32 %v557, %v3152
        %v4654 = vadd.f32 %v558, %v3156
        %v4655 = vadd.f32 %v559, %v3160
        %v4656 = vadd.f32 %v560, %v3164
        %v4657 = vadd.f32 %v561, %v3168
        %v4658 = vadd.f32 %v562, %v3172
        %v4659 = vadd.f32 %v563, %v3176
        %v4660 = vadd.f32 %v564, %v3180
        %v4661 = vadd.f32 %v565, %v3184
        %v4662 = vadd.f32 %v566, %v3188
        %v4663 = vadd.f32 %v567, %v3192
        %v4664 = vadd.f32 %v568, %v3196
        %v4665 = vadd.f32 %v569, %v3200
        %v4666 = vadd.f32 %v570, %v3204
        %v4667 = vadd.f32 %v571, %v3208
        %v4668 = vadd.f32 %v572, %v3212
        %v4669 = vadd.f32 %v573, %v3216
        %v4670 = vadd.f32 %v574, %v3220
        %v4671 = vadd.f32 %v575, %v3224
        %v4672 = vadd.f32 %v576, %v3228
        %v4673 = vadd.f32 %v577, %v3232
        %v4674 = vadd.f32 %v578, %v3236
        %v4675 = vadd.f32 %v579, %v3240
        %v4676 = vadd.f32 %v580, %v3244
        %v4677 = vadd.f32 %v581, %v3248
        %v4678 = vadd.f32 %v582, %v3252
        %v4679 = vadd.f32 %v583, %v3256
        %v4680 = vadd.f32 %v584, %v3260
        %v4681 = vadd.f32 %v585, %v3264
        %v4682 = vadd.f32 %v586, %v3268
        %v4683 = vadd.f32 %v587, %v3272
        %v4684 = vadd.f32 %v588, %v3276
        %v4685 = vadd.f32 %v589, %v3280
        %v4686 = vadd.f32 %v590, %v3284
        %v4687 = vadd.f32 %v591, %v3288
        %v4688 = vadd.f32 %v592, %v3292
        %v4689 = vadd.f32 %v593, %v3296
        %v4690 = vadd.f32 %v594, %v3300
        %v4691 = vadd.f32 %v595, %v3304
        %v4692 = vadd.f32 %v596, %v3308
        %v4693 = vadd.f32 %v597, %v3312
        %v4694 = vadd.f32 %v598, %v3316
        %v4695 = vadd.f32 %v599, %v3320
        %v4696 = vadd.f32 %v600, %v3324
        %v4697 = vadd.f32 %v601, %v3328
        %v4698 = vadd.f32 %v602, %v3332
        %v4699 = vadd.f32 %v603, %v3336
        %v4700 = vadd.f32 %v604, %v3340
        %v4701 = vadd.f32 %v605, %v3344
        %v4702 = vadd.f32 %v606, %v3348
        %v4703 = vadd.f32 %v607, %v3352
        %v4704 = vadd.f32 %v608, %v3356
        %v4705 = vadd.f32 %v609, %v3360
        %v4706 = vadd.f32 %v610, %v3364
        %v4707 = vadd.f32 %v611, %v3368
        %v4708 = vadd.f32 %v612, %v3372
        %v4709 = vadd.f32 %v613, %v3376
        %v4710 = vadd.f32 %v614, %v3380
        %v4711 = vadd.f32 %v615, %v3384
        %v4712 = vadd.f32 %v616, %v3388
        %v4713 = vadd.f32 %v617, %v3392
        %v4714 = vadd.f32 %v618, %v3396
        %v4715 = vadd.f32 %v619, %v3400
        %v4716 = vadd.f32 %v620, %v3404
        %v4717 = vadd.f32 %v621, %v3408
        %v4718 = vadd.f32 %v622, %v3412
        %v4719 = vadd.f32 %v623, %v3416
        %v4720 = vadd.f32 %v624, %v3420
        %v4721 = vadd.f32 %v625, %v3424
        %v4722 = vadd.f32 %v626, %v3428
        %v4723 = vadd.f32 %v627, %v3432
        %v4724 = vadd.f32 %v628, %v3436
        %v4725 = vadd.f32 %v629, %v3440
        %v4726 = vadd.f32 %v630, %v3444
        %v4727 = vadd.f32 %v631, %v3448
        %v4728 = vadd.f32 %v632, %v3452
        %v4729 = vadd.f32 %v633, %v3456
        %v4730 = vadd.f32 %v634, %v3460
        %v4731 = vadd.f32 %v635, %v3464
        %v4732 = vadd.f32 %v636, %v3468
        %v4733 = vadd.f32 %v637, %v3472
        %v4734 = vadd.f32 %v638, %v3476
        %v4735 = vadd.f32 %v639, %v3480
        %v4736 = vadd.f32 %v640, %v3484
        %v4737 = vadd.f32 %v641, %v3488
        %v4738 = vadd.f32 %v642, %v3492
        %v4739 = vadd.f32 %v643, %v3496
        %v4740 = vadd.f32 %v644, %v3500
        %v4741 = vadd.f32 %v645, %v3504
        %v4742 = vadd.f32 %v646, %v3508
        %v4743 = vadd.f32 %v647, %v3512
        %v4744 = vadd.f32 %v648, %v3516
        %v4745 = vadd.f32 %v649, %v3520
        %v4746 = vadd.f32 %v650, %v3524
        %v4747 = vadd.f32 %v651, %v3528
        %v4748 = vadd.f32 %v652, %v3532
        %v4749 = vadd.f32 %v653, %v3536
        %v4750 = vadd.f32 %v654, %v3540
        %v4751 = vadd.f32 %v655, %v3544
        %v4752 = vadd.f32 %v656, %v3548
        %v4753 = vadd.f32 %v657, %v3552
        %v4754 = vadd.f32 %v658, %v3556
        %v4755 = vadd.f32 %v659, %v3560
        %v4756 = vadd.f32 %v660, %v3564
        %v4757 = vadd.f32 %v661, %v3568
        %v4758 = vadd.f32 %v662, %v3572
        %v4759 = vadd.f32 %v663, %v3576
        %v4760 = vadd.f32 %v664, %v3580
        %v4761 = vadd.f32 %v665, %v3584
        %v4762 = vadd.f32 %v666, %v3588
        %v4763 = vadd.f32 %v667, %v3592
        %v4764 = vadd.f32 %v668, %v3596
        %v4765 = vadd.f32 %v669, %v3600
        %v4766 = vadd.f32 %v670, %v3604
        %v4767 = vadd.f32 %v671, %v3608
        %v4768 = vadd.f32 %v672, %v3612
        %v4769 = vadd.f32 %v673, %v3616
        %v4770 = vadd.f32 %v674, %v3620
        %v4771 = vadd.f32 %v675, %v3624
        %v4772 = vadd.f32 %v676, %v3628
        %v4773 = vadd.f32 %v677, %v3632
        %v4774 = vadd.f32 %v678, %v3636
        %v4775 = vadd.f32 %v679, %v3640
        %v4776 = vadd.f32 %v680, %v3644
        %v4777 = vadd.f32 %v681, %v3648
        %v4778 = vadd.f32 %v682, %v3652
        %v4779 = vadd.f32 %v683, %v3656
        %v4780 = vadd.f32 %v684, %v3660
        %v4781 = vadd.f32 %v685, %v3664
        %v4782 = vadd.f32 %v686, %v3668
        %v4783 = vadd.f32 %v687, %v3672
        %v4784 = vadd.f32 %v688, %v3676
        %v4785 = vadd.f32 %v689, %v3680
        %v4786 = vadd.f32 %v690, %v3684
        %v4787 = vadd.f32 %v691, %v3688
        %v4788 = vadd.f32 %v692, %v3692
        %v4789 = vadd.f32 %v693, %v3696
        %v4790 = vadd.f32 %v694, %v3700
        %v4791 = vadd.f32 %v695, %v3704
        %v4792 = vadd.f32 %v696, %v3708
        %v4793 = vadd.f32 %v697, %v3712
        %v4794 = vadd.f32 %v698, %v3716
        %v4795 = vadd.f32 %v699, %v3720
        %v4796 = vadd.f32 %v700, %v3724
        %v4797 = vadd.f32 %v701, %v3728
        %v4798 = vadd.f32 %v702, %v3732
        %v4799 = vadd.f32 %v703, %v3736
        %v4800 = vadd.f32 %v704, %v3740
        %v4801 = vadd.f32 %v705, %v3744
        %v4802 = vadd.f32 %v706, %v3748
        %v4803 = vadd.f32 %v707, %v3752
        %v4804 = vadd.f32 %v708, %v3756
        %v4805 = vadd.f32 %v709, %v3760
        %v4806 = vadd.f32 %v710, %v3764
        %v4807 = vadd.f32 %v711, %v3768
        %v4808 = vadd.f32 %v712, %v3772
        %v4809 = vadd.f32 %v713, %v3776
        %v4810 = vadd.f32 %v714, %v3780
        %v4811 = vadd.f32 %v715, %v3784
        %v4812 = vadd.f32 %v716, %v3788
        %4813 = vst [vmem:[%s201] sm:$0xff] %v4301
        %4814 = vst [vmem:[%s201 + $0x8] sm:$0xff] %v4302
        %4815 = vst [vmem:[%s201 + $0x10] sm:$0xff] %v4303
        %4816 = vst [vmem:[%s201 + $0x18] sm:$0xff] %v4304
        %4817 = vst [vmem:[%s201 + $0x20] sm:$0xff] %v4305
        %4818 = vst [vmem:[%s201 + $0x28] sm:$0xff] %v4306
        %4819 = vst [vmem:[%s201 + $0x30] sm:$0xff] %v4307
        %4820 = vst [vmem:[%s201 + $0x38] sm:$0xff] %v4308
        %4821 = vst [vmem:[%s201 + $0x40] sm:$0xff] %v4309
        %4822 = vst [vmem:[%s201 + $0x48] sm:$0xff] %v4310
        %4823 = vst [vmem:[%s201 + $0x50] sm:$0xff] %v4311
        %4824 = vst [vmem:[%s201 + $0x58] sm:$0xff] %v4312
        %4825 = vst [vmem:[%s201 + $0x60] sm:$0xff] %v4313
        %4826 = vst [vmem:[%s201 + $0x68] sm:$0xff] %v4314
        %4827 = vst [vmem:[%s201 + $0x70] sm:$0xff] %v4315
        %4828 = vst [vmem:[%s201 + $0x78] sm:$0xff] %v4316
        %4829 = vst [vmem:[%s201 + $0x80] sm:$0xff] %v4317
        %4830 = vst [vmem:[%s201 + $0x88] sm:$0xff] %v4318
        %4831 = vst [vmem:[%s201 + $0x90] sm:$0xff] %v4319
        %4832 = vst [vmem:[%s201 + $0x98] sm:$0xff] %v4320
        %4833 = vst [vmem:[%s201 + $0xa0] sm:$0xff] %v4321
        %4834 = vst [vmem:[%s201 + $0xa8] sm:$0xff] %v4322
        %4835 = vst [vmem:[%s201 + $0xb0] sm:$0xff] %v4323
        %4836 = vst [vmem:[%s201 + $0xb8] sm:$0xff] %v4324
        %4837 = vst [vmem:[%s201 + $0xc0] sm:$0xff] %v4325
        %4838 = vst [vmem:[%s201 + $0xc8] sm:$0xff] %v4326
        %4839 = vst [vmem:[%s201 + $0xd0] sm:$0xff] %v4327
        %4840 = vst [vmem:[%s201 + $0xd8] sm:$0xff] %v4328
        %4841 = vst [vmem:[%s201 + $0xe0] sm:$0xff] %v4329
        %4842 = vst [vmem:[%s201 + $0xe8] sm:$0xff] %v4330
        %4843 = vst [vmem:[%s201 + $0xf0] sm:$0xff] %v4331
        %4844 = vst [vmem:[%s201 + $0xf8] sm:$0xff] %v4332
        %4845 = vst [vmem:[%s201 + $0x100] sm:$0xff] %v4333
        %4846 = vst [vmem:[%s201 + $0x108] sm:$0xff] %v4334
        %4847 = vst [vmem:[%s201 + $0x110] sm:$0xff] %v4335
        %4848 = vst [vmem:[%s201 + $0x118] sm:$0xff] %v4336
        %4849 = vst [vmem:[%s201 + $0x120] sm:$0xff] %v4337
        %4850 = vst [vmem:[%s201 + $0x128] sm:$0xff] %v4338
        %4851 = vst [vmem:[%s201 + $0x130] sm:$0xff] %v4339
        %4852 = vst [vmem:[%s201 + $0x138] sm:$0xff] %v4340
        %4853 = vst [vmem:[%s201 + $0x140] sm:$0xff] %v4341
        %4854 = vst [vmem:[%s201 + $0x148] sm:$0xff] %v4342
        %4855 = vst [vmem:[%s201 + $0x150] sm:$0xff] %v4343
        %4856 = vst [vmem:[%s201 + $0x158] sm:$0xff] %v4344
        %4857 = vst [vmem:[%s201 + $0x160] sm:$0xff] %v4345
        %4858 = vst [vmem:[%s201 + $0x168] sm:$0xff] %v4346
        %4859 = vst [vmem:[%s201 + $0x170] sm:$0xff] %v4347
        %4860 = vst [vmem:[%s201 + $0x178] sm:$0xff] %v4348
        %4861 = vst [vmem:[%s201 + $0x180] sm:$0xff] %v4349
        %4862 = vst [vmem:[%s201 + $0x188] sm:$0xff] %v4350
        %4863 = vst [vmem:[%s201 + $0x190] sm:$0xff] %v4351
        %4864 = vst [vmem:[%s201 + $0x198] sm:$0xff] %v4352
        %4865 = vst [vmem:[%s201 + $0x1a0] sm:$0xff] %v4353
        %4866 = vst [vmem:[%s201 + $0x1a8] sm:$0xff] %v4354
        %4867 = vst [vmem:[%s201 + $0x1b0] sm:$0xff] %v4355
        %4868 = vst [vmem:[%s201 + $0x1b8] sm:$0xff] %v4356
        %4869 = vst [vmem:[%s201 + $0x1c0] sm:$0xff] %v4357
        %4870 = vst [vmem:[%s201 + $0x1c8] sm:$0xff] %v4358
        %4871 = vst [vmem:[%s201 + $0x1d0] sm:$0xff] %v4359
        %4872 = vst [vmem:[%s201 + $0x1d8] sm:$0xff] %v4360
        %4873 = vst [vmem:[%s201 + $0x1e0] sm:$0xff] %v4361
        %4874 = vst [vmem:[%s201 + $0x1e8] sm:$0xff] %v4362
        %4875 = vst [vmem:[%s201 + $0x1f0] sm:$0xff] %v4363
        %4876 = vst [vmem:[%s201 + $0x1f8] sm:$0xff] %v4364
        %4877 = vst [vmem:[%s201 + $0x200] sm:$0xff] %v4365
        %4878 = vst [vmem:[%s201 + $0x208] sm:$0xff] %v4366
        %4879 = vst [vmem:[%s201 + $0x210] sm:$0xff] %v4367
        %4880 = vst [vmem:[%s201 + $0x218] sm:$0xff] %v4368
        %4881 = vst [vmem:[%s201 + $0x220] sm:$0xff] %v4369
        %4882 = vst [vmem:[%s201 + $0x228] sm:$0xff] %v4370
        %4883 = vst [vmem:[%s201 + $0x230] sm:$0xff] %v4371
        %4884 = vst [vmem:[%s201 + $0x238] sm:$0xff] %v4372
        %4885 = vst [vmem:[%s201 + $0x240] sm:$0xff] %v4373
        %4886 = vst [vmem:[%s201 + $0x248] sm:$0xff] %v4374
        %4887 = vst [vmem:[%s201 + $0x250] sm:$0xff] %v4375
        %4888 = vst [vmem:[%s201 + $0x258] sm:$0xff] %v4376
        %4889 = vst [vmem:[%s201 + $0x260] sm:$0xff] %v4377
        %4890 = vst [vmem:[%s201 + $0x268] sm:$0xff] %v4378
        %4891 = vst [vmem:[%s201 + $0x270] sm:$0xff] %v4379
        %4892 = vst [vmem:[%s201 + $0x278] sm:$0xff] %v4380
        %4893 = vst [vmem:[%s201 + $0x280] sm:$0xff] %v4381
        %4894 = vst [vmem:[%s201 + $0x288] sm:$0xff] %v4382
        %4895 = vst [vmem:[%s201 + $0x290] sm:$0xff] %v4383
        %4896 = vst [vmem:[%s201 + $0x298] sm:$0xff] %v4384
        %4897 = vst [vmem:[%s201 + $0x2a0] sm:$0xff] %v4385
        %4898 = vst [vmem:[%s201 + $0x2a8] sm:$0xff] %v4386
        %4899 = vst [vmem:[%s201 + $0x2b0] sm:$0xff] %v4387
        %4900 = vst [vmem:[%s201 + $0x2b8] sm:$0xff] %v4388
        %4901 = vst [vmem:[%s201 + $0x2c0] sm:$0xff] %v4389
        %4902 = vst [vmem:[%s201 + $0x2c8] sm:$0xff] %v4390
        %4903 = vst [vmem:[%s201 + $0x2d0] sm:$0xff] %v4391
        %4904 = vst [vmem:[%s201 + $0x2d8] sm:$0xff] %v4392
        %4905 = vst [vmem:[%s201 + $0x2e0] sm:$0xff] %v4393
        %4906 = vst [vmem:[%s201 + $0x2e8] sm:$0xff] %v4394
        %4907 = vst [vmem:[%s201 + $0x2f0] sm:$0xff] %v4395
        %4908 = vst [vmem:[%s201 + $0x2f8] sm:$0xff] %v4396
        %4909 = vst [vmem:[%s201 + $0x300] sm:$0xff] %v4397
        %4910 = vst [vmem:[%s201 + $0x308] sm:$0xff] %v4398
        %4911 = vst [vmem:[%s201 + $0x310] sm:$0xff] %v4399
        %4912 = vst [vmem:[%s201 + $0x318] sm:$0xff] %v4400
        %4913 = vst [vmem:[%s201 + $0x320] sm:$0xff] %v4401
        %4914 = vst [vmem:[%s201 + $0x328] sm:$0xff] %v4402
        %4915 = vst [vmem:[%s201 + $0x330] sm:$0xff] %v4403
        %4916 = vst [vmem:[%s201 + $0x338] sm:$0xff] %v4404
        %4917 = vst [vmem:[%s201 + $0x340] sm:$0xff] %v4405
        %4918 = vst [vmem:[%s201 + $0x348] sm:$0xff] %v4406
        %4919 = vst [vmem:[%s201 + $0x350] sm:$0xff] %v4407
        %4920 = vst [vmem:[%s201 + $0x358] sm:$0xff] %v4408
        %4921 = vst [vmem:[%s201 + $0x360] sm:$0xff] %v4409
        %4922 = vst [vmem:[%s201 + $0x368] sm:$0xff] %v4410
        %4923 = vst [vmem:[%s201 + $0x370] sm:$0xff] %v4411
        %4924 = vst [vmem:[%s201 + $0x378] sm:$0xff] %v4412
        %4925 = vst [vmem:[%s201 + $0x380] sm:$0xff] %v4413
        %4926 = vst [vmem:[%s201 + $0x388] sm:$0xff] %v4414
        %4927 = vst [vmem:[%s201 + $0x390] sm:$0xff] %v4415
        %4928 = vst [vmem:[%s201 + $0x398] sm:$0xff] %v4416
        %4929 = vst [vmem:[%s201 + $0x3a0] sm:$0xff] %v4417
        %4930 = vst [vmem:[%s201 + $0x3a8] sm:$0xff] %v4418
        %4931 = vst [vmem:[%s201 + $0x3b0] sm:$0xff] %v4419
        %4932 = vst [vmem:[%s201 + $0x3b8] sm:$0xff] %v4420
        %4933 = vst [vmem:[%s201 + $0x3c0] sm:$0xff] %v4421
        %4934 = vst [vmem:[%s201 + $0x3c8] sm:$0xff] %v4422
        %4935 = vst [vmem:[%s201 + $0x3d0] sm:$0xff] %v4423
        %4936 = vst [vmem:[%s201 + $0x3d8] sm:$0xff] %v4424
        %4937 = vst [vmem:[%s201 + $0x3e0] sm:$0xff] %v4425
        %4938 = vst [vmem:[%s201 + $0x3e8] sm:$0xff] %v4426
        %4939 = vst [vmem:[%s201 + $0x3f0] sm:$0xff] %v4427
        %4940 = vst [vmem:[%s201 + $0x3f8] sm:$0xff] %v4428
        %4941 = vst [vmem:[%s201 + $0x400] sm:$0xff] %v4429
        %4942 = vst [vmem:[%s201 + $0x408] sm:$0xff] %v4430
        %4943 = vst [vmem:[%s201 + $0x410] sm:$0xff] %v4431
        %4944 = vst [vmem:[%s201 + $0x418] sm:$0xff] %v4432
        %4945 = vst [vmem:[%s201 + $0x420] sm:$0xff] %v4433
        %4946 = vst [vmem:[%s201 + $0x428] sm:$0xff] %v4434
        %4947 = vst [vmem:[%s201 + $0x430] sm:$0xff] %v4435
        %4948 = vst [vmem:[%s201 + $0x438] sm:$0xff] %v4436
        %4949 = vst [vmem:[%s201 + $0x440] sm:$0xff] %v4437
        %4950 = vst [vmem:[%s201 + $0x448] sm:$0xff] %v4438
        %4951 = vst [vmem:[%s201 + $0x450] sm:$0xff] %v4439
        %4952 = vst [vmem:[%s201 + $0x458] sm:$0xff] %v4440
        %4953 = vst [vmem:[%s201 + $0x460] sm:$0xff] %v4441
        %4954 = vst [vmem:[%s201 + $0x468] sm:$0xff] %v4442
        %4955 = vst [vmem:[%s201 + $0x470] sm:$0xff] %v4443
        %4956 = vst [vmem:[%s201 + $0x478] sm:$0xff] %v4444
        %4957 = vst [vmem:[%s201 + $0x480] sm:$0xff] %v4445
        %4958 = vst [vmem:[%s201 + $0x488] sm:$0xff] %v4446
        %4959 = vst [vmem:[%s201 + $0x490] sm:$0xff] %v4447
        %4960 = vst [vmem:[%s201 + $0x498] sm:$0xff] %v4448
        %4961 = vst [vmem:[%s201 + $0x4a0] sm:$0xff] %v4449
        %4962 = vst [vmem:[%s201 + $0x4a8] sm:$0xff] %v4450
        %4963 = vst [vmem:[%s201 + $0x4b0] sm:$0xff] %v4451
        %4964 = vst [vmem:[%s201 + $0x4b8] sm:$0xff] %v4452
        %4965 = vst [vmem:[%s201 + $0x4c0] sm:$0xff] %v4453
        %4966 = vst [vmem:[%s201 + $0x4c8] sm:$0xff] %v4454
        %4967 = vst [vmem:[%s201 + $0x4d0] sm:$0xff] %v4455
        %4968 = vst [vmem:[%s201 + $0x4d8] sm:$0xff] %v4456
        %4969 = vst [vmem:[%s201 + $0x4e0] sm:$0xff] %v4457
        %4970 = vst [vmem:[%s201 + $0x4e8] sm:$0xff] %v4458
        %4971 = vst [vmem:[%s201 + $0x4f0] sm:$0xff] %v4459
        %4972 = vst [vmem:[%s201 + $0x4f8] sm:$0xff] %v4460
        %4973 = vst [vmem:[%s201 + $0x500] sm:$0xff] %v4461
        %4974 = vst [vmem:[%s201 + $0x508] sm:$0xff] %v4462
        %4975 = vst [vmem:[%s201 + $0x510] sm:$0xff] %v4463
        %4976 = vst [vmem:[%s201 + $0x518] sm:$0xff] %v4464
        %4977 = vst [vmem:[%s201 + $0x520] sm:$0xff] %v4465
        %4978 = vst [vmem:[%s201 + $0x528] sm:$0xff] %v4466
        %4979 = vst [vmem:[%s201 + $0x530] sm:$0xff] %v4467
        %4980 = vst [vmem:[%s201 + $0x538] sm:$0xff] %v4468
        %4981 = vst [vmem:[%s201 + $0x540] sm:$0xff] %v4469
        %4982 = vst [vmem:[%s201 + $0x548] sm:$0xff] %v4470
        %4983 = vst [vmem:[%s201 + $0x550] sm:$0xff] %v4471
        %4984 = vst [vmem:[%s201 + $0x558] sm:$0xff] %v4472
        %4985 = vst [vmem:[%s201 + $0x560] sm:$0xff] %v4473
        %4986 = vst [vmem:[%s201 + $0x568] sm:$0xff] %v4474
        %4987 = vst [vmem:[%s201 + $0x570] sm:$0xff] %v4475
        %4988 = vst [vmem:[%s201 + $0x578] sm:$0xff] %v4476
        %4989 = vst [vmem:[%s201 + $0x580] sm:$0xff] %v4477
        %4990 = vst [vmem:[%s201 + $0x588] sm:$0xff] %v4478
        %4991 = vst [vmem:[%s201 + $0x590] sm:$0xff] %v4479
        %4992 = vst [vmem:[%s201 + $0x598] sm:$0xff] %v4480
        %4993 = vst [vmem:[%s201 + $0x5a0] sm:$0xff] %v4481
        %4994 = vst [vmem:[%s201 + $0x5a8] sm:$0xff] %v4482
        %4995 = vst [vmem:[%s201 + $0x5b0] sm:$0xff] %v4483
        %4996 = vst [vmem:[%s201 + $0x5b8] sm:$0xff] %v4484
        %4997 = vst [vmem:[%s201 + $0x5c0] sm:$0xff] %v4485
        %4998 = vst [vmem:[%s201 + $0x5c8] sm:$0xff] %v4486
        %4999 = vst [vmem:[%s201 + $0x5d0] sm:$0xff] %v4487
        %5000 = vst [vmem:[%s201 + $0x5d8] sm:$0xff] %v4488
        %5001 = vst [vmem:[%s201 + $0x5e0] sm:$0xff] %v4489
        %5002 = vst [vmem:[%s201 + $0x5e8] sm:$0xff] %v4490
        %5003 = vst [vmem:[%s201 + $0x5f0] sm:$0xff] %v4491
        %5004 = vst [vmem:[%s201 + $0x5f8] sm:$0xff] %v4492
        %5005 = vst [vmem:[%s201 + $0x600] sm:$0xff] %v4493
        %5006 = vst [vmem:[%s201 + $0x608] sm:$0xff] %v4494
        %5007 = vst [vmem:[%s201 + $0x610] sm:$0xff] %v4495
        %5008 = vst [vmem:[%s201 + $0x618] sm:$0xff] %v4496
        %5009 = vst [vmem:[%s201 + $0x620] sm:$0xff] %v4497
        %5010 = vst [vmem:[%s201 + $0x628] sm:$0xff] %v4498
        %5011 = vst [vmem:[%s201 + $0x630] sm:$0xff] %v4499
        %5012 = vst [vmem:[%s201 + $0x638] sm:$0xff] %v4500
        %5013 = vst [vmem:[%s201 + $0x640] sm:$0xff] %v4501
        %5014 = vst [vmem:[%s201 + $0x648] sm:$0xff] %v4502
        %5015 = vst [vmem:[%s201 + $0x650] sm:$0xff] %v4503
        %5016 = vst [vmem:[%s201 + $0x658] sm:$0xff] %v4504
        %5017 = vst [vmem:[%s201 + $0x660] sm:$0xff] %v4505
        %5018 = vst [vmem:[%s201 + $0x668] sm:$0xff] %v4506
        %5019 = vst [vmem:[%s201 + $0x670] sm:$0xff] %v4507
        %5020 = vst [vmem:[%s201 + $0x678] sm:$0xff] %v4508
        %5021 = vst [vmem:[%s201 + $0x680] sm:$0xff] %v4509
        %5022 = vst [vmem:[%s201 + $0x688] sm:$0xff] %v4510
        %5023 = vst [vmem:[%s201 + $0x690] sm:$0xff] %v4511
        %5024 = vst [vmem:[%s201 + $0x698] sm:$0xff] %v4512
        %5025 = vst [vmem:[%s201 + $0x6a0] sm:$0xff] %v4513
        %5026 = vst [vmem:[%s201 + $0x6a8] sm:$0xff] %v4514
        %5027 = vst [vmem:[%s201 + $0x6b0] sm:$0xff] %v4515
        %5028 = vst [vmem:[%s201 + $0x6b8] sm:$0xff] %v4516
        %5029 = vst [vmem:[%s201 + $0x6c0] sm:$0xff] %v4517
        %5030 = vst [vmem:[%s201 + $0x6c8] sm:$0xff] %v4518
        %5031 = vst [vmem:[%s201 + $0x6d0] sm:$0xff] %v4519
        %5032 = vst [vmem:[%s201 + $0x6d8] sm:$0xff] %v4520
        %5033 = vst [vmem:[%s201 + $0x6e0] sm:$0xff] %v4521
        %5034 = vst [vmem:[%s201 + $0x6e8] sm:$0xff] %v4522
        %5035 = vst [vmem:[%s201 + $0x6f0] sm:$0xff] %v4523
        %5036 = vst [vmem:[%s201 + $0x6f8] sm:$0xff] %v4524
        %5037 = vst [vmem:[%s201 + $0x700] sm:$0xff] %v4525
        %5038 = vst [vmem:[%s201 + $0x708] sm:$0xff] %v4526
        %5039 = vst [vmem:[%s201 + $0x710] sm:$0xff] %v4527
        %5040 = vst [vmem:[%s201 + $0x718] sm:$0xff] %v4528
        %5041 = vst [vmem:[%s201 + $0x720] sm:$0xff] %v4529
        %5042 = vst [vmem:[%s201 + $0x728] sm:$0xff] %v4530
        %5043 = vst [vmem:[%s201 + $0x730] sm:$0xff] %v4531
        %5044 = vst [vmem:[%s201 + $0x738] sm:$0xff] %v4532
        %5045 = vst [vmem:[%s201 + $0x740] sm:$0xff] %v4533
        %5046 = vst [vmem:[%s201 + $0x748] sm:$0xff] %v4534
        %5047 = vst [vmem:[%s201 + $0x750] sm:$0xff] %v4535
        %5048 = vst [vmem:[%s201 + $0x758] sm:$0xff] %v4536
        %5049 = vst [vmem:[%s201 + $0x760] sm:$0xff] %v4537
        %5050 = vst [vmem:[%s201 + $0x768] sm:$0xff] %v4538
        %5051 = vst [vmem:[%s201 + $0x770] sm:$0xff] %v4539
        %5052 = vst [vmem:[%s201 + $0x778] sm:$0xff] %v4540
        %5053 = vst [vmem:[%s201 + $0x780] sm:$0xff] %v4541
        %5054 = vst [vmem:[%s201 + $0x788] sm:$0xff] %v4542
        %5055 = vst [vmem:[%s201 + $0x790] sm:$0xff] %v4543
        %5056 = vst [vmem:[%s201 + $0x798] sm:$0xff] %v4544
        %5057 = vst [vmem:[%s201 + $0x7a0] sm:$0xff] %v4545
        %5058 = vst [vmem:[%s201 + $0x7a8] sm:$0xff] %v4546
        %5059 = vst [vmem:[%s201 + $0x7b0] sm:$0xff] %v4547
        %5060 = vst [vmem:[%s201 + $0x7b8] sm:$0xff] %v4548
        %5061 = vst [vmem:[%s201 + $0x7c0] sm:$0xff] %v4549
        %5062 = vst [vmem:[%s201 + $0x7c8] sm:$0xff] %v4550
        %5063 = vst [vmem:[%s201 + $0x7d0] sm:$0xff] %v4551
        %5064 = vst [vmem:[%s201 + $0x7d8] sm:$0xff] %v4552
        %5065 = vst [vmem:[%s201 + $0x7e0] sm:$0xff] %v4553
        %5066 = vst [vmem:[%s201 + $0x7e8] sm:$0xff] %v4554
        %5067 = vst [vmem:[%s201 + $0x7f0] sm:$0xff] %v4555
        %5068 = vst [vmem:[%s201 + $0x7f8] sm:$0xff] %v4556
        %5069 = vst [vmem:[%s201 + $0x800] sm:$0xff] %v4557
        %5070 = vst [vmem:[%s201 + $0x808] sm:$0xff] %v4558
        %5071 = vst [vmem:[%s201 + $0x810] sm:$0xff] %v4559
        %5072 = vst [vmem:[%s201 + $0x818] sm:$0xff] %v4560
        %5073 = vst [vmem:[%s201 + $0x820] sm:$0xff] %v4561
        %5074 = vst [vmem:[%s201 + $0x828] sm:$0xff] %v4562
        %5075 = vst [vmem:[%s201 + $0x830] sm:$0xff] %v4563
        %5076 = vst [vmem:[%s201 + $0x838] sm:$0xff] %v4564
        %5077 = vst [vmem:[%s201 + $0x840] sm:$0xff] %v4565
        %5078 = vst [vmem:[%s201 + $0x848] sm:$0xff] %v4566
        %5079 = vst [vmem:[%s201 + $0x850] sm:$0xff] %v4567
        %5080 = vst [vmem:[%s201 + $0x858] sm:$0xff] %v4568
        %5081 = vst [vmem:[%s201 + $0x860] sm:$0xff] %v4569
        %5082 = vst [vmem:[%s201 + $0x868] sm:$0xff] %v4570
        %5083 = vst [vmem:[%s201 + $0x870] sm:$0xff] %v4571
        %5084 = vst [vmem:[%s201 + $0x878] sm:$0xff] %v4572
        %5085 = vst [vmem:[%s201 + $0x880] sm:$0xff] %v4573
        %5086 = vst [vmem:[%s201 + $0x888] sm:$0xff] %v4574
        %5087 = vst [vmem:[%s201 + $0x890] sm:$0xff] %v4575
        %5088 = vst [vmem:[%s201 + $0x898] sm:$0xff] %v4576
        %5089 = vst [vmem:[%s201 + $0x8a0] sm:$0xff] %v4577
        %5090 = vst [vmem:[%s201 + $0x8a8] sm:$0xff] %v4578
        %5091 = vst [vmem:[%s201 + $0x8b0] sm:$0xff] %v4579
        %5092 = vst [vmem:[%s201 + $0x8b8] sm:$0xff] %v4580
        %5093 = vst [vmem:[%s201 + $0x8c0] sm:$0xff] %v4581
        %5094 = vst [vmem:[%s201 + $0x8c8] sm:$0xff] %v4582
        %5095 = vst [vmem:[%s201 + $0x8d0] sm:$0xff] %v4583
        %5096 = vst [vmem:[%s201 + $0x8d8] sm:$0xff] %v4584
        %5097 = vst [vmem:[%s201 + $0x8e0] sm:$0xff] %v4585
        %5098 = vst [vmem:[%s201 + $0x8e8] sm:$0xff] %v4586
        %5099 = vst [vmem:[%s201 + $0x8f0] sm:$0xff] %v4587
        %5100 = vst [vmem:[%s201 + $0x8f8] sm:$0xff] %v4588
        %5101 = vst [vmem:[%s201 + $0x900] sm:$0xff] %v4589
        %5102 = vst [vmem:[%s201 + $0x908] sm:$0xff] %v4590
        %5103 = vst [vmem:[%s201 + $0x910] sm:$0xff] %v4591
        %5104 = vst [vmem:[%s201 + $0x918] sm:$0xff] %v4592
        %5105 = vst [vmem:[%s201 + $0x920] sm:$0xff] %v4593
        %5106 = vst [vmem:[%s201 + $0x928] sm:$0xff] %v4594
        %5107 = vst [vmem:[%s201 + $0x930] sm:$0xff] %v4595
        %5108 = vst [vmem:[%s201 + $0x938] sm:$0xff] %v4596
        %5109 = vst [vmem:[%s201 + $0x940] sm:$0xff] %v4597
        %5110 = vst [vmem:[%s201 + $0x948] sm:$0xff] %v4598
        %5111 = vst [vmem:[%s201 + $0x950] sm:$0xff] %v4599
        %5112 = vst [vmem:[%s201 + $0x958] sm:$0xff] %v4600
        %5113 = vst [vmem:[%s201 + $0x960] sm:$0xff] %v4601
        %5114 = vst [vmem:[%s201 + $0x968] sm:$0xff] %v4602
        %5115 = vst [vmem:[%s201 + $0x970] sm:$0xff] %v4603
        %5116 = vst [vmem:[%s201 + $0x978] sm:$0xff] %v4604
        %5117 = vst [vmem:[%s201 + $0x980] sm:$0xff] %v4605
        %5118 = vst [vmem:[%s201 + $0x988] sm:$0xff] %v4606
        %5119 = vst [vmem:[%s201 + $0x990] sm:$0xff] %v4607
        %5120 = vst [vmem:[%s201 + $0x998] sm:$0xff] %v4608
        %5121 = vst [vmem:[%s201 + $0x9a0] sm:$0xff] %v4609
        %5122 = vst [vmem:[%s201 + $0x9a8] sm:$0xff] %v4610
        %5123 = vst [vmem:[%s201 + $0x9b0] sm:$0xff] %v4611
        %5124 = vst [vmem:[%s201 + $0x9b8] sm:$0xff] %v4612
        %5125 = vst [vmem:[%s201 + $0x9c0] sm:$0xff] %v4613
        %5126 = vst [vmem:[%s201 + $0x9c8] sm:$0xff] %v4614
        %5127 = vst [vmem:[%s201 + $0x9d0] sm:$0xff] %v4615
        %5128 = vst [vmem:[%s201 + $0x9d8] sm:$0xff] %v4616
        %5129 = vst [vmem:[%s201 + $0x9e0] sm:$0xff] %v4617
        %5130 = vst [vmem:[%s201 + $0x9e8] sm:$0xff] %v4618
        %5131 = vst [vmem:[%s201 + $0x9f0] sm:$0xff] %v4619
        %5132 = vst [vmem:[%s201 + $0x9f8] sm:$0xff] %v4620
        %5133 = vst [vmem:[%s201 + $0xa00] sm:$0xff] %v4621
        %5134 = vst [vmem:[%s201 + $0xa08] sm:$0xff] %v4622
        %5135 = vst [vmem:[%s201 + $0xa10] sm:$0xff] %v4623
        %5136 = vst [vmem:[%s201 + $0xa18] sm:$0xff] %v4624
        %5137 = vst [vmem:[%s201 + $0xa20] sm:$0xff] %v4625
        %5138 = vst [vmem:[%s201 + $0xa28] sm:$0xff] %v4626
        %5139 = vst [vmem:[%s201 + $0xa30] sm:$0xff] %v4627
        %5140 = vst [vmem:[%s201 + $0xa38] sm:$0xff] %v4628
        %5141 = vst [vmem:[%s201 + $0xa40] sm:$0xff] %v4629
        %5142 = vst [vmem:[%s201 + $0xa48] sm:$0xff] %v4630
        %5143 = vst [vmem:[%s201 + $0xa50] sm:$0xff] %v4631
        %5144 = vst [vmem:[%s201 + $0xa58] sm:$0xff] %v4632
        %5145 = vst [vmem:[%s201 + $0xa60] sm:$0xff] %v4633
        %5146 = vst [vmem:[%s201 + $0xa68] sm:$0xff] %v4634
        %5147 = vst [vmem:[%s201 + $0xa70] sm:$0xff] %v4635
        %5148 = vst [vmem:[%s201 + $0xa78] sm:$0xff] %v4636
        %5149 = vst [vmem:[%s201 + $0xa80] sm:$0xff] %v4637
        %5150 = vst [vmem:[%s201 + $0xa88] sm:$0xff] %v4638
        %5151 = vst [vmem:[%s201 + $0xa90] sm:$0xff] %v4639
        %5152 = vst [vmem:[%s201 + $0xa98] sm:$0xff] %v4640
        %5153 = vst [vmem:[%s201 + $0xaa0] sm:$0xff] %v4641
        %5154 = vst [vmem:[%s201 + $0xaa8] sm:$0xff] %v4642
        %5155 = vst [vmem:[%s201 + $0xab0] sm:$0xff] %v4643
        %5156 = vst [vmem:[%s201 + $0xab8] sm:$0xff] %v4644
        %5157 = vst [vmem:[%s201 + $0xac0] sm:$0xff] %v4645
        %5158 = vst [vmem:[%s201 + $0xac8] sm:$0xff] %v4646
        %5159 = vst [vmem:[%s201 + $0xad0] sm:$0xff] %v4647
        %5160 = vst [vmem:[%s201 + $0xad8] sm:$0xff] %v4648
        %5161 = vst [vmem:[%s201 + $0xae0] sm:$0xff] %v4649
        %5162 = vst [vmem:[%s201 + $0xae8] sm:$0xff] %v4650
        %5163 = vst [vmem:[%s201 + $0xaf0] sm:$0xff] %v4651
        %5164 = vst [vmem:[%s201 + $0xaf8] sm:$0xff] %v4652
        %5165 = vst [vmem:[%s201 + $0xb00] sm:$0xff] %v4653
        %5166 = vst [vmem:[%s201 + $0xb08] sm:$0xff] %v4654
        %5167 = vst [vmem:[%s201 + $0xb10] sm:$0xff] %v4655
        %5168 = vst [vmem:[%s201 + $0xb18] sm:$0xff] %v4656
        %5169 = vst [vmem:[%s201 + $0xb20] sm:$0xff] %v4657
        %5170 = vst [vmem:[%s201 + $0xb28] sm:$0xff] %v4658
        %5171 = vst [vmem:[%s201 + $0xb30] sm:$0xff] %v4659
        %5172 = vst [vmem:[%s201 + $0xb38] sm:$0xff] %v4660
        %5173 = vst [vmem:[%s201 + $0xb40] sm:$0xff] %v4661
        %5174 = vst [vmem:[%s201 + $0xb48] sm:$0xff] %v4662
        %5175 = vst [vmem:[%s201 + $0xb50] sm:$0xff] %v4663
        %5176 = vst [vmem:[%s201 + $0xb58] sm:$0xff] %v4664
        %5177 = vst [vmem:[%s201 + $0xb60] sm:$0xff] %v4665
        %5178 = vst [vmem:[%s201 + $0xb68] sm:$0xff] %v4666
        %5179 = vst [vmem:[%s201 + $0xb70] sm:$0xff] %v4667
        %5180 = vst [vmem:[%s201 + $0xb78] sm:$0xff] %v4668
        %5181 = vst [vmem:[%s201 + $0xb80] sm:$0xff] %v4669
        %5182 = vst [vmem:[%s201 + $0xb88] sm:$0xff] %v4670
        %5183 = vst [vmem:[%s201 + $0xb90] sm:$0xff] %v4671
        %5184 = vst [vmem:[%s201 + $0xb98] sm:$0xff] %v4672
        %5185 = vst [vmem:[%s201 + $0xba0] sm:$0xff] %v4673
        %5186 = vst [vmem:[%s201 + $0xba8] sm:$0xff] %v4674
        %5187 = vst [vmem:[%s201 + $0xbb0] sm:$0xff] %v4675
        %5188 = vst [vmem:[%s201 + $0xbb8] sm:$0xff] %v4676
        %5189 = vst [vmem:[%s201 + $0xbc0] sm:$0xff] %v4677
        %5190 = vst [vmem:[%s201 + $0xbc8] sm:$0xff] %v4678
        %5191 = vst [vmem:[%s201 + $0xbd0] sm:$0xff] %v4679
        %5192 = vst [vmem:[%s201 + $0xbd8] sm:$0xff] %v4680
        %5193 = vst [vmem:[%s201 + $0xbe0] sm:$0xff] %v4681
        %5194 = vst [vmem:[%s201 + $0xbe8] sm:$0xff] %v4682
        %5195 = vst [vmem:[%s201 + $0xbf0] sm:$0xff] %v4683
        %5196 = vst [vmem:[%s201 + $0xbf8] sm:$0xff] %v4684
        %5197 = vst [vmem:[%s201 + $0xc00] sm:$0xff] %v4685
        %5198 = vst [vmem:[%s201 + $0xc08] sm:$0xff] %v4686
        %5199 = vst [vmem:[%s201 + $0xc10] sm:$0xff] %v4687
        %5200 = vst [vmem:[%s201 + $0xc18] sm:$0xff] %v4688
        %5201 = vst [vmem:[%s201 + $0xc20] sm:$0xff] %v4689
        %5202 = vst [vmem:[%s201 + $0xc28] sm:$0xff] %v4690
        %5203 = vst [vmem:[%s201 + $0xc30] sm:$0xff] %v4691
        %5204 = vst [vmem:[%s201 + $0xc38] sm:$0xff] %v4692
        %5205 = vst [vmem:[%s201 + $0xc40] sm:$0xff] %v4693
        %5206 = vst [vmem:[%s201 + $0xc48] sm:$0xff] %v4694
        %5207 = vst [vmem:[%s201 + $0xc50] sm:$0xff] %v4695
        %5208 = vst [vmem:[%s201 + $0xc58] sm:$0xff] %v4696
        %5209 = vst [vmem:[%s201 + $0xc60] sm:$0xff] %v4697
        %5210 = vst [vmem:[%s201 + $0xc68] sm:$0xff] %v4698
        %5211 = vst [vmem:[%s201 + $0xc70] sm:$0xff] %v4699
        %5212 = vst [vmem:[%s201 + $0xc78] sm:$0xff] %v4700
        %5213 = vst [vmem:[%s201 + $0xc80] sm:$0xff] %v4701
        %5214 = vst [vmem:[%s201 + $0xc88] sm:$0xff] %v4702
        %5215 = vst [vmem:[%s201 + $0xc90] sm:$0xff] %v4703
        %5216 = vst [vmem:[%s201 + $0xc98] sm:$0xff] %v4704
        %5217 = vst [vmem:[%s201 + $0xca0] sm:$0xff] %v4705
        %5218 = vst [vmem:[%s201 + $0xca8] sm:$0xff] %v4706
        %5219 = vst [vmem:[%s201 + $0xcb0] sm:$0xff] %v4707
        %5220 = vst [vmem:[%s201 + $0xcb8] sm:$0xff] %v4708
        %5221 = vst [vmem:[%s201 + $0xcc0] sm:$0xff] %v4709
        %5222 = vst [vmem:[%s201 + $0xcc8] sm:$0xff] %v4710
        %5223 = vst [vmem:[%s201 + $0xcd0] sm:$0xff] %v4711
        %5224 = vst [vmem:[%s201 + $0xcd8] sm:$0xff] %v4712
        %5225 = vst [vmem:[%s201 + $0xce0] sm:$0xff] %v4713
        %5226 = vst [vmem:[%s201 + $0xce8] sm:$0xff] %v4714
        %5227 = vst [vmem:[%s201 + $0xcf0] sm:$0xff] %v4715
        %5228 = vst [vmem:[%s201 + $0xcf8] sm:$0xff] %v4716
        %5229 = vst [vmem:[%s201 + $0xd00] sm:$0xff] %v4717
        %5230 = vst [vmem:[%s201 + $0xd08] sm:$0xff] %v4718
        %5231 = vst [vmem:[%s201 + $0xd10] sm:$0xff] %v4719
        %5232 = vst [vmem:[%s201 + $0xd18] sm:$0xff] %v4720
        %5233 = vst [vmem:[%s201 + $0xd20] sm:$0xff] %v4721
        %5234 = vst [vmem:[%s201 + $0xd28] sm:$0xff] %v4722
        %5235 = vst [vmem:[%s201 + $0xd30] sm:$0xff] %v4723
        %5236 = vst [vmem:[%s201 + $0xd38] sm:$0xff] %v4724
        %5237 = vst [vmem:[%s201 + $0xd40] sm:$0xff] %v4725
        %5238 = vst [vmem:[%s201 + $0xd48] sm:$0xff] %v4726
        %5239 = vst [vmem:[%s201 + $0xd50] sm:$0xff] %v4727
        %5240 = vst [vmem:[%s201 + $0xd58] sm:$0xff] %v4728
        %5241 = vst [vmem:[%s201 + $0xd60] sm:$0xff] %v4729
        %5242 = vst [vmem:[%s201 + $0xd68] sm:$0xff] %v4730
        %5243 = vst [vmem:[%s201 + $0xd70] sm:$0xff] %v4731
        %5244 = vst [vmem:[%s201 + $0xd78] sm:$0xff] %v4732
        %5245 = vst [vmem:[%s201 + $0xd80] sm:$0xff] %v4733
        %5246 = vst [vmem:[%s201 + $0xd88] sm:$0xff] %v4734
        %5247 = vst [vmem:[%s201 + $0xd90] sm:$0xff] %v4735
        %5248 = vst [vmem:[%s201 + $0xd98] sm:$0xff] %v4736
        %5249 = vst [vmem:[%s201 + $0xda0] sm:$0xff] %v4737
        %5250 = vst [vmem:[%s201 + $0xda8] sm:$0xff] %v4738
        %5251 = vst [vmem:[%s201 + $0xdb0] sm:$0xff] %v4739
        %5252 = vst [vmem:[%s201 + $0xdb8] sm:$0xff] %v4740
        %5253 = vst [vmem:[%s201 + $0xdc0] sm:$0xff] %v4741
        %5254 = vst [vmem:[%s201 + $0xdc8] sm:$0xff] %v4742
        %5255 = vst [vmem:[%s201 + $0xdd0] sm:$0xff] %v4743
        %5256 = vst [vmem:[%s201 + $0xdd8] sm:$0xff] %v4744
        %5257 = vst [vmem:[%s201 + $0xde0] sm:$0xff] %v4745
        %5258 = vst [vmem:[%s201 + $0xde8] sm:$0xff] %v4746
        %5259 = vst [vmem:[%s201 + $0xdf0] sm:$0xff] %v4747
        %5260 = vst [vmem:[%s201 + $0xdf8] sm:$0xff] %v4748
        %5261 = vst [vmem:[%s201 + $0xe00] sm:$0xff] %v4749
        %5262 = vst [vmem:[%s201 + $0xe08] sm:$0xff] %v4750
        %5263 = vst [vmem:[%s201 + $0xe10] sm:$0xff] %v4751
        %5264 = vst [vmem:[%s201 + $0xe18] sm:$0xff] %v4752
        %5265 = vst [vmem:[%s201 + $0xe20] sm:$0xff] %v4753
        %5266 = vst [vmem:[%s201 + $0xe28] sm:$0xff] %v4754
        %5267 = vst [vmem:[%s201 + $0xe30] sm:$0xff] %v4755
        %5268 = vst [vmem:[%s201 + $0xe38] sm:$0xff] %v4756
        %5269 = vst [vmem:[%s201 + $0xe40] sm:$0xff] %v4757
        %5270 = vst [vmem:[%s201 + $0xe48] sm:$0xff] %v4758
        %5271 = vst [vmem:[%s201 + $0xe50] sm:$0xff] %v4759
        %5272 = vst [vmem:[%s201 + $0xe58] sm:$0xff] %v4760
        %5273 = vst [vmem:[%s201 + $0xe60] sm:$0xff] %v4761
        %5274 = vst [vmem:[%s201 + $0xe68] sm:$0xff] %v4762
        %5275 = vst [vmem:[%s201 + $0xe70] sm:$0xff] %v4763
        %5276 = vst [vmem:[%s201 + $0xe78] sm:$0xff] %v4764
        %5277 = vst [vmem:[%s201 + $0xe80] sm:$0xff] %v4765
        %5278 = vst [vmem:[%s201 + $0xe88] sm:$0xff] %v4766
        %5279 = vst [vmem:[%s201 + $0xe90] sm:$0xff] %v4767
        %5280 = vst [vmem:[%s201 + $0xe98] sm:$0xff] %v4768
        %5281 = vst [vmem:[%s201 + $0xea0] sm:$0xff] %v4769
        %5282 = vst [vmem:[%s201 + $0xea8] sm:$0xff] %v4770
        %5283 = vst [vmem:[%s201 + $0xeb0] sm:$0xff] %v4771
        %5284 = vst [vmem:[%s201 + $0xeb8] sm:$0xff] %v4772
        %5285 = vst [vmem:[%s201 + $0xec0] sm:$0xff] %v4773
        %5286 = vst [vmem:[%s201 + $0xec8] sm:$0xff] %v4774
        %5287 = vst [vmem:[%s201 + $0xed0] sm:$0xff] %v4775
        %5288 = vst [vmem:[%s201 + $0xed8] sm:$0xff] %v4776
        %5289 = vst [vmem:[%s201 + $0xee0] sm:$0xff] %v4777
        %5290 = vst [vmem:[%s201 + $0xee8] sm:$0xff] %v4778
        %5291 = vst [vmem:[%s201 + $0xef0] sm:$0xff] %v4779
        %5292 = vst [vmem:[%s201 + $0xef8] sm:$0xff] %v4780
        %5293 = vst [vmem:[%s201 + $0xf00] sm:$0xff] %v4781
        %5294 = vst [vmem:[%s201 + $0xf08] sm:$0xff] %v4782
        %5295 = vst [vmem:[%s201 + $0xf10] sm:$0xff] %v4783
        %5296 = vst [vmem:[%s201 + $0xf18] sm:$0xff] %v4784
        %5297 = vst [vmem:[%s201 + $0xf20] sm:$0xff] %v4785
        %5298 = vst [vmem:[%s201 + $0xf28] sm:$0xff] %v4786
        %5299 = vst [vmem:[%s201 + $0xf30] sm:$0xff] %v4787
        %5300 = vst [vmem:[%s201 + $0xf38] sm:$0xff] %v4788
        %5301 = vst [vmem:[%s201 + $0xf40] sm:$0xff] %v4789
        %5302 = vst [vmem:[%s201 + $0xf48] sm:$0xff] %v4790
        %5303 = vst [vmem:[%s201 + $0xf50] sm:$0xff] %v4791
        %5304 = vst [vmem:[%s201 + $0xf58] sm:$0xff] %v4792
        %5305 = vst [vmem:[%s201 + $0xf60] sm:$0xff] %v4793
        %5306 = vst [vmem:[%s201 + $0xf68] sm:$0xff] %v4794
        %5307 = vst [vmem:[%s201 + $0xf70] sm:$0xff] %v4795
        %5308 = vst [vmem:[%s201 + $0xf78] sm:$0xff] %v4796
        %5309 = vst [vmem:[%s201 + $0xf80] sm:$0xff] %v4797
        %5310 = vst [vmem:[%s201 + $0xf88] sm:$0xff] %v4798
        %5311 = vst [vmem:[%s201 + $0xf90] sm:$0xff] %v4799
        %5312 = vst [vmem:[%s201 + $0xf98] sm:$0xff] %v4800
        %5313 = vst [vmem:[%s201 + $0xfa0] sm:$0xff] %v4801
        %5314 = vst [vmem:[%s201 + $0xfa8] sm:$0xff] %v4802
        %5315 = vst [vmem:[%s201 + $0xfb0] sm:$0xff] %v4803
        %5316 = vst [vmem:[%s201 + $0xfb8] sm:$0xff] %v4804
        %5317 = vst [vmem:[%s201 + $0xfc0] sm:$0xff] %v4805
        %5318 = vst [vmem:[%s201 + $0xfc8] sm:$0xff] %v4806
        %5319 = vst [vmem:[%s201 + $0xfd0] sm:$0xff] %v4807
        %5320 = vst [vmem:[%s201 + $0xfd8] sm:$0xff] %v4808
        %5321 = vst [vmem:[%s201 + $0xfe0] sm:$0xff] %v4809
        %5322 = vst [vmem:[%s201 + $0xfe8] sm:$0xff] %v4810
        %5323 = vst [vmem:[%s201 + $0xff0] sm:$0xff] %v4811
        %5324 = vst [vmem:[%s201 + $0xff8] sm:$0xff] %v4812
        %s5325 = sand.u32 %s82, 1
        %s5326 = scalar_lea.sflag [#allocation4], %s5325
        %s5327 = sand.u32 %s82, 1
        %s5328 = smul.addr %s5327, 4096
        %s5329 = scalar_lea.vmem [#allocation7], %s5328
        // Predicated region
        $region37: #{tpu_custom_call.1} parent=27 // pred_check
          %p5330 = pneg %p92
        $region38: #{tpu_custom_call.1} parent=27 // pred_check_branch
          %5332 = sbr.rel (%p5330) target = $region40
        $region39: #{tpu_custom_call.1} parent=27 // pred_region
          %s5333 = smul.u32 512, %s22
          %s5335 = ssub.s32 65536, 65536
          %5336 = vsyncadd %s5326, %s5335
          %s5337 = smul.addr %s5333, 128
          %s5338 = scalar_lea.hbm %s2, %s5337
          %s5339 = sshll.u32 %s5329, 4
          %s5340 = int_to_ptr.vmem [resolvable:$true] %s5339
          %5345 = dma.vmem_to_hbm [thread:$0]  %s5340, 65536, %s5338, %s5326, 128, 128, 8
        $region40: #{tpu_custom_call.1} parent=27 // pred_fallthru
          _
      $region28: #{tpu_custom_call.1} parent=5 // pred_fallthru
        _
      %p5346 = scmp.le.s32.totalorder 2, %s17
      // Predicated region
      $region41: #{tpu_custom_call.1} parent=5 // pred_check
        %p5347 = pneg %p5346
      $region42: #{tpu_custom_call.1} parent=5 // pred_check_branch
        %5349 = sbr.rel (%p5347) target = $region44
      $region43: #{tpu_custom_call.1} parent=5 // pred_region
        %s5350 = ssub.s32 %s17, 2
        // Predicated region
        $region45: #{tpu_custom_call.1} parent=43 // pred_check
          %p5351 = pneg %p98
        $region46: #{tpu_custom_call.1} parent=43 // pred_check_branch
          %5353 = sbr.rel (%p5351) target = $region48
        $region47: #{tpu_custom_call.1} parent=43 // pred_region
          %s5354 = sand.u32 %s83, 1
          %s5355 = scalar_lea.sflag [#allocation4], %s5354
          %s5356 = sand.u32 %s83, 1
          %s5357 = smul.addr %s5356, 4096
          %s5358 = scalar_lea.vmem [#allocation7], %s5357
          %5359 = dma.done %s5355, 65536
        $region48: #{tpu_custom_call.1} parent=43 // pred_fallthru
          _
      $region44: #{tpu_custom_call.1} parent=5 // pred_fallthru
        _
    $region6: #{tpu_custom_call.1} parent=1 // loop_footer
      %s21 = sadd.s32 1, %s17
    $region7: #{tpu_custom_call.1} parent=1 // loop_footer_branch
      %16 = sbr.rel target = $region3
    $region8: #{tpu_custom_call.1} parent=1 // loop_exit
      _
    %5360 = vsyncpa [#allocation3], 1
    %s5361 = scalar_lea.sflag [#allocation3], 1
    %5362 = vsyncpa %s5361, 1
    %5363 = vsyncpa [#allocation6], 1
    %s5364 = scalar_lea.sflag [#allocation6], 1
    %5365 = vsyncpa %s5364, 1
    %5366 = vsyncpa [#allocation4], 1
    %s5367 = scalar_lea.sflag [#allocation4], 1
    %5368 = vsyncpa %s5367, 1

</llo_original>
